<compile_context>
chip_gen: v7x
topology: tpu7x:2x2x1
jax: 0.10.0
libtpu: 0.0.40
codegen_flags: <defaults>
</compile_context>

<pallas_src>
import functools

import jax
import jax.numpy as jnp
import numpy as np
from jax.experimental import pallas as pl
from jax.experimental.pallas import tpu as pltpu


# --------------------------------------------------------------------------
# Tile-size helpers
# --------------------------------------------------------------------------
def _divisor_tile(n, cap, multiple=1):
    """Largest divisor of n that is <= cap and a multiple of `multiple`;
    falls back to n (full extent) if none exists."""
    best = None
    for d in range(1, min(n, cap) + 1):
        if n % d == 0 and d % multiple == 0:
            best = d
    return best if best is not None else n


def _pick_batch_tile(B, cap=256):
    """Batch tile: as large as possible (feeds the 128/256-row MXU), multiple
    of 16 preferred (bf16 sublane packing), multiple of 8 required, and with
    >= 2 batch tiles when possible (v7x second TensorCore)."""
    cands = [d for d in range(8, min(B, cap) + 1, 8) if B % d == 0]
    if not cands:
        return B                      # full extent (valid BlockSpec) for tiny B
    split = [d for d in cands if B // d >= 2]
    pool = split if split else cands
    m16 = [d for d in pool if d % 16 == 0]
    return max(m16) if m16 else max(pool)


def _pick_time_tile(T, b_tile, G, H, cap=16, budget_bytes=6 << 20):
    """Time steps per grid iteration: enough to amortize the ~0.35us per-step
    overhead, but bounded so the double-buffered (t_tile, b_tile, 4H) gx slab
    plus output slab stay within a VMEM budget.  t_tile=1 always divides T, so
    awkward (e.g. prime) T degrades gracefully instead of blowing up blocks."""
    def blk_bytes(t):
        gx = t * b_tile * G * 2       # bf16 gates_x block
        o = t * b_tile * H * 4        # f32 output block
        return 2 * (gx + o)           # double-buffered
    best = 1
    for d in range(1, min(T, cap) + 1):
        if T % d == 0 and blk_bytes(d) <= budget_bytes:
            best = d
    return best


# --------------------------------------------------------------------------
# Kernel 1: hoisted input projection  (T*B, E) @ (E, 4H) + bias  -> bf16
# --------------------------------------------------------------------------
def _input_proj_kernel(e_ref, wih_ref, b_ref, gx_ref):
    acc = jnp.dot(e_ref[...], wih_ref[...], preferred_element_type=jnp.float32)
    gx_ref[...] = (acc + b_ref[...]).astype(gx_ref.dtype)


# --------------------------------------------------------------------------
# Kernel 2: LSTM recurrence over a (t_tile, b_tile) block of time steps.
#   gates = gates_x[t] + h_prev @ W_hh^T   (only the recurrent matmul per step)
# --------------------------------------------------------------------------
def _lstm_recurrence_kernel(gx_ref, whh_ref, o_ref, hN_ref, cN_ref,
                            h_sc, c_sc, *, hidden, t_tile, unroll):
    t_blk = pl.program_id(1)          # time-tile index (axis 1 = "arbitrary")

    @pl.when(t_blk == 0)
    def _():
        h_sc[...] = jnp.zeros_like(h_sc)
        c_sc[...] = jnp.zeros_like(c_sc)

    H = hidden

    def step(s, carry):
        h_prev, c_prev = carry        # f32 state carried across steps
        # Load W_hh^T from its VMEM ref per step (do NOT pin ~32+ vregs of
        # weight across the unrolled body); the vld rides spare load slots.
        # TODO(synk): weight-stationary MXU driving (matmul_push_rhs /
        # matmul_acc_lhs / matmul_pop) would keep W_hh in MXU staging across
        # all t_tile steps on v5e/v6e.
        gates = gx_ref[s].astype(jnp.float32) + jnp.dot(
            h_prev.astype(jnp.bfloat16), whh_ref[...],
            preferred_element_type=jnp.float32)
        # PyTorch LSTMCell gate order [i, f, g, o]; H is a multiple of 128 in
        # the demo so these are whole-vreg lane slices (unmasked stores).
        i_g = jax.nn.sigmoid(gates[:, 0 * H:1 * H])
        f_g = jax.nn.sigmoid(gates[:, 1 * H:2 * H])
        g_g = jnp.tanh(gates[:, 2 * H:3 * H])
        o_g = jax.nn.sigmoid(gates[:, 3 * H:4 * H])
        c_new = f_g * c_prev + i_g * g_g
        h_new = o_g * jnp.tanh(c_new)
        o_ref[s] = h_new              # store into the (t_tile, b_tile, H) slab
        return (h_new, c_new)

    h_fin, c_fin = jax.lax.fori_loop(
        0, t_tile, step, (h_sc[...], c_sc[...]), unroll=unroll)

    h_sc[...] = h_fin
    c_sc[...] = c_fin

    # Only the last time tile needs to publish the final-state block.
    @pl.when(t_blk == pl.num_programs(1) - 1)
    def _():
        hN_ref[...] = h_fin
        cN_ref[...] = c_fin


# --------------------------------------------------------------------------
# Wrapper
# --------------------------------------------------------------------------
def encoder_forward(x_seq, embedding, w_ih, w_hh, b_ih, b_hh):
    """x_seq: (T, B) int32. Returns (o: (T,B,H), h: (B,H), c: (B,H)) in f32."""
    T, B = x_seq.shape
    E = embedding.shape[1]
    H = w_hh.shape[1]
    G = 4 * H

    # ---- Embedding lookup (data-dependent gather): plain-JAX glue. ---------
    # Cast the table once so e_seq is born bf16.
    # TODO(synk): fuse the gather into the projection kernel via
    # PrefetchScalarGridSpec + pl.Element row indexing to avoid materializing
    # e_seq in HBM at all.
    e_seq = jnp.take(embedding.astype(jnp.bfloat16), x_seq, axis=0)  # (T,B,E)

    # ---- Hoisted input projection: one tiled bf16 MXU matmul. --------------
    e_rows = e_seq.reshape(T * B, E)
    wih_t = w_ih.T.astype(jnp.bfloat16)                              # (E, 4H)
    bias = (b_ih + b_hh).astype(jnp.float32).reshape(1, G)

    rows = T * B
    tm = _divisor_tile(rows, 256, 8)      # row tile (<=256 keeps v7x VMEM happy)
    tn = _divisor_tile(G, 2048, 128)      # tile the 4H axis too
    gates_x = pl.pallas_call(
        _input_proj_kernel,
        # bf16 intermediate: largest HBM tensor on this path -> half traffic.
        out_shape=jax.ShapeDtypeStruct((rows, G), jnp.bfloat16),
        grid_spec=pltpu.PrefetchScalarGridSpec(
            num_scalar_prefetch=0,
            grid=(rows // tm, G // tn),
            in_specs=[
                pl.BlockSpec((tm, E), lambda i, j: (i, 0)),
                pl.BlockSpec((E, tn), lambda i, j: (0, j)),
                pl.BlockSpec((1, tn), lambda i, j: (0, j)),
            ],
            out_specs=pl.BlockSpec((tm, tn), lambda i, j: (i, j)),
        ),
        compiler_params=pltpu.CompilerParams(
            dimension_semantics=("parallel", "parallel"),
            vmem_limit_bytes=64 * 1024 * 1024),
    )(e_rows, wih_t, bias).reshape(T, B, G)

    # ---- Recurrent kernel: only h @ W_hh^T + elementwise per time step. ----
    whh_t = w_hh.T.astype(jnp.bfloat16)                              # (H, 4H)

    b_tile = _pick_batch_tile(B)          # large batch tile feeds the MXU rows
    t_tile = _pick_time_tile(T, b_tile, G, H)
    unroll = min(8, t_tile)               # partial unroll: LLO visibility
                                          # without blowing up live ranges
    grid = (B // b_tile, T // t_tile)

    kern = functools.partial(_lstm_recurrence_kernel,
                             hidden=H, t_tile=t_tile, unroll=unroll)

    out_shapes = (
        # o kept f32 to match the module's semantics (bf16 possible if the
        # downstream consumer accepts it -> halves writeback bandwidth).
        jax.ShapeDtypeStruct((T, B, H), jnp.float32),
        jax.ShapeDtypeStruct((B, H), jnp.float32),
        jax.ShapeDtypeStruct((B, H), jnp.float32),
    )

    # W_hh^T's block index never changes: at production sizes single-buffer it
    # so a pointless double-buffer copy doesn't eat v7x's 64 MiB VMEM.  At the
    # small demo size the default double buffer is negligible, so we skip the
    # override there.
    whh_kwargs = {}
    if H * G * 2 >= (4 << 20):
        whh_kwargs["pipeline_mode"] = pl.Buffered(1)
    whh_spec = pl.BlockSpec((H, G), lambda b, t: (0, 0), **whh_kwargs)

    return pl.pallas_call(
        kern,
        out_shape=out_shapes,
        grid_spec=pltpu.PrefetchScalarGridSpec(
            num_scalar_prefetch=0,
            grid=grid,
            in_specs=[
                pl.BlockSpec((t_tile, b_tile, G), lambda b, t: (t, b, 0)),
                whh_spec,
            ],
            out_specs=[
                pl.BlockSpec((t_tile, b_tile, H), lambda b, t: (t, b, 0)),
                pl.BlockSpec((b_tile, H), lambda b, t: (b, 0)),
                pl.BlockSpec((b_tile, H), lambda b, t: (b, 0)),
            ],
            scratch_shapes=[
                pltpu.VMEM((b_tile, H), jnp.float32),   # h state
                pltpu.VMEM((b_tile, H), jnp.float32),   # c state
            ],
        ),
        compiler_params=pltpu.CompilerParams(
            dimension_semantics=("parallel", "arbitrary"),
            vmem_limit_bytes=64 * 1024 * 1024),
    )(gates_x, whh_t)


# --------------------------------------------------------------------------
# Pure-JAX reference (torch.nn.LSTMCell semantics, full f32)
# --------------------------------------------------------------------------
def _reference_forward(x_seq, embedding, w_ih, w_hh, b_ih, b_hh):
    e_seq = jnp.take(embedding, x_seq, axis=0).astype(jnp.float32)
    B = x_seq.shape[1]
    H = w_hh.shape[1]

    def step(carry, e):
        h, c = carry
        gates = e @ w_ih.T + b_ih + h @ w_hh.T + b_hh
        i, f, g, o = jnp.split(gates, 4, axis=-1)
        i, f, o = jax.nn.sigmoid(i), jax.nn.sigmoid(f), jax.nn.sigmoid(o)
        g = jnp.tanh(g)
        c_new = f * c + i * g
        h_new = o * jnp.tanh(c_new)
        return (h_new, c_new), h_new

    init = (jnp.zeros((B, H), jnp.float32), jnp.zeros((B, H), jnp.float32))
    (h, c), o = jax.lax.scan(step, init, e_seq)
    return o, h, c


if __name__ == "__main__":
    # Small deterministic config; H and E chosen as 128-multiples so gate
    # slices / stores are lane-dense.
    vocab_size, d_embed, d_hidden = 64, 128, 128
    seq_len, batch = 8, 8

    key = jax.random.PRNGKey(0)
    k_emb, k_wih, k_whh, k_bih, k_bhh, k_x = jax.random.split(key, 6)

    # PyTorch-style inits (Embedding ~ N(0,1); LSTMCell ~ U(-1/sqrt(H), 1/sqrt(H))).
    bound = 1.0 / np.sqrt(d_hidden)
    embedding = jax.random.normal(k_emb, (vocab_size, d_embed), jnp.float32)
    w_ih = jax.random.uniform(k_wih, (4 * d_hidden, d_embed), jnp.float32, -bound, bound)
    w_hh = jax.random.uniform(k_whh, (4 * d_hidden, d_hidden), jnp.float32, -bound, bound)
    b_ih = jax.random.uniform(k_bih, (4 * d_hidden,), jnp.float32, -bound, bound)
    b_hh = jax.random.uniform(k_bhh, (4 * d_hidden,), jnp.float32, -bound, bound)

    x_seq = jax.random.randint(k_x, (seq_len, batch), 0, vocab_size, jnp.int32)

    o, h, c = jax.jit(encoder_forward)(x_seq, embedding, w_ih, w_hh, b_ih, b_hh)
    jax.block_until_ready((o, h, c))

    o_ref, h_ref, c_ref = _reference_forward(x_seq, embedding, w_ih, w_hh, b_ih, b_hh)
    # bf16 embeddings / MXU operands / bf16 gates_x intermediate (f32
    # accumulation and f32 h/c state) -> loosened tolerance vs all-f32 ref.
    # NOTE: validate again at the target T — bf16 h-cast rounding compounds
    # along the time axis for long sequences.
    np.testing.assert_allclose(np.asarray(o), np.asarray(o_ref), rtol=3e-2, atol=3e-2)
    np.testing.assert_allclose(np.asarray(h), np.asarray(h_ref), rtol=3e-2, atol=3e-2)
    np.testing.assert_allclose(np.asarray(c), np.asarray(c_ref), rtol=3e-2, atol=3e-2)

    print("KERNEL_OK")
</pallas_src>

<mosaic_0001>
module attributes {stable_mosaic.version = 11 : i64} {
  func.func @_input_proj_kernel(%arg0: i32, %arg1: i32, %arg2: memref<64x128xbf16, #tpu.memory_space<vmem>>, %arg3: memref<128x512xbf16, #tpu.memory_space<vmem>>, %arg4: memref<1x512xf32, #tpu.memory_space<vmem>>, %arg5: memref<64x512xbf16, #tpu.memory_space<vmem>>) attributes {dimension_semantics = [#tpu.dimension_semantics<parallel>, #tpu.dimension_semantics<parallel>], iteration_bounds = array<i64: 1, 1>, scalar_prefetch = 0 : i64, scratch_operands = 0 : i64, tpu.core_type = #tpu.core_type<tc>, window_params = [{transform_indices = @transform_0, window_bounds = array<i64: 64, 128>}, {transform_indices = @transform_1, window_bounds = array<i64: 128, 512>}, {transform_indices = @transform_2, window_bounds = array<i64: 1, 512>}, {transform_indices = @transform_3, window_bounds = array<i64: 64, 512>}]} {
    %c0 = arith.constant 0 : index
    %c0_0 = arith.constant 0 : index
    %0 = vector.load %arg2[%c0, %c0_0] : memref<64x128xbf16, #tpu.memory_space<vmem>>, vector<64x128xbf16>
    %c0_1 = arith.constant 0 : index
    %c0_2 = arith.constant 0 : index
    %1 = vector.load %arg3[%c0_1, %c0_2] : memref<128x512xbf16, #tpu.memory_space<vmem>>, vector<128x512xbf16>
    %cst = arith.constant dense<0.000000e+00> : vector<64x512xf32>
    %2 = tpu.matmul %0, %1, %cst {dimension_numbers = #tpu.dot_dimension_numbers<[1], [0], [0], [1], [0, 0, 1, 1], [], []>} : vector<64x128xbf16>, vector<128x512xbf16>, vector<64x512xf32> -> vector<64x512xf32>
    %c0_3 = arith.constant 0 : index
    %c0_4 = arith.constant 0 : index
    %3 = vector.load %arg4[%c0_3, %c0_4] : memref<1x512xf32, #tpu.memory_space<vmem>>, vector<1x512xf32>
    %4 = vector.broadcast %3 : vector<1x512xf32> to vector<64x512xf32>
    %5 = arith.addf %2, %4 : vector<64x512xf32>
    %6 = arith.truncf %5 : vector<64x512xf32> to vector<64x512xbf16>
    %c0_5 = arith.constant 0 : index
    %c0_6 = arith.constant 0 : index
    %7 = vector.load %arg5[%c0_5, %c0_6] : memref<64x512xbf16, #tpu.memory_space<vmem>>, vector<64x512xbf16>
    tpu.vector_store %arg5[%c0_5, %c0_6], %6 {strides = array<i32>} : memref<64x512xbf16, #tpu.memory_space<vmem>>, vector<64x512xbf16>,
    return
  }
  func.func @transform_0(%arg0: i32, %arg1: i32) -> (i32, i32) {
    %c0_i32 = arith.constant 0 : i32
    %c0_i32_0 = arith.constant 0 : i32
    return %arg0, %c0_i32 : i32, i32
  }
  func.func @transform_1(%arg0: i32, %arg1: i32) -> (i32, i32) {
    %c0_i32 = arith.constant 0 : i32
    %c0_i32_0 = arith.constant 0 : i32
    return %c0_i32, %arg1 : i32, i32
  }
  func.func @transform_2(%arg0: i32, %arg1: i32) -> (i32, i32) {
    %c0_i32 = arith.constant 0 : i32
    %c0_i32_0 = arith.constant 0 : i32
    return %c0_i32, %arg1 : i32, i32
  }
  func.func @transform_3(%arg0: i32, %arg1: i32) -> (i32, i32) {
    %c0_i32 = arith.constant 0 : i32
    return %arg0, %arg1 : i32, i32
  }
}

module attributes {stable_mosaic.version = 11 : i64} {
  func.func @_lstm_recurrence_kernel(%arg0: i32, %arg1: i32, %arg2: memref<8x8x512xbf16, #tpu.memory_space<vmem>>, %arg3: memref<128x512xbf16, #tpu.memory_space<vmem>>, %arg4: memref<8x8x128xf32, #tpu.memory_space<vmem>>, %arg5: memref<8x128xf32, #tpu.memory_space<vmem>>, %arg6: memref<8x128xf32, #tpu.memory_space<vmem>>, %arg7: memref<8x128xf32, #tpu.memory_space<vmem>>, %arg8: memref<8x128xf32, #tpu.memory_space<vmem>>) attributes {dimension_semantics = [#tpu.dimension_semantics<parallel>, #tpu.dimension_semantics<arbitrary>], iteration_bounds = array<i64: 1, 1>, scalar_prefetch = 0 : i64, scratch_operands = 2 : i64, tpu.core_type = #tpu.core_type<tc>, window_params = [{transform_indices = @transform_0, window_bounds = array<i64: 8, 8, 512>}, {pipeline_mode = #tpu.pipeline_mode<synchronous>, transform_indices = @transform_1, window_bounds = array<i64: 128, 512>}, {transform_indices = @transform_2, window_bounds = array<i64: 8, 8, 128>}, {transform_indices = @transform_3, window_bounds = array<i64: 8, 128>}, {transform_indices = @transform_4, window_bounds = array<i64: 8, 128>}]} {
    %c0_i32 = arith.constant 0 : i32
    %0 = arith.cmpi eq, %arg1, %c0_i32 : i32
    %1 = arith.extui %0 : i1 to i32
    %c0_i32_0 = arith.constant 0 : i32
    %2 = arith.cmpi ne, %1, %c0_i32_0 : i32
    scf.if %2 {
      %cst_90 = arith.constant 0.000000e+00 : f32
      %306 = vector.broadcast %cst_90 : f32 to vector<8x128xf32>
      %c0_91 = arith.constant 0 : index
      %c0_92 = arith.constant 0 : index
      %307 = vector.load %arg7[%c0_91, %c0_92] : memref<8x128xf32, #tpu.memory_space<vmem>>, vector<8x128xf32>
      tpu.vector_store %arg7[%c0_91, %c0_92], %306 {strides = array<i32>} : memref<8x128xf32, #tpu.memory_space<vmem>>, vector<8x128xf32>,
      %cst_93 = arith.constant 0.000000e+00 : f32
      %308 = vector.broadcast %cst_93 : f32 to vector<8x128xf32>
      %c0_94 = arith.constant 0 : index
      %c0_95 = arith.constant 0 : index
      %309 = vector.load %arg8[%c0_94, %c0_95] : memref<8x128xf32, #tpu.memory_space<vmem>>, vector<8x128xf32>
      tpu.vector_store %arg8[%c0_94, %c0_95], %308 {strides = array<i32>} : memref<8x128xf32, #tpu.memory_space<vmem>>, vector<8x128xf32>,
    } else {
    }
    %c0 = arith.constant 0 : index
    %c0_1 = arith.constant 0 : index
    %3 = vector.load %arg7[%c0, %c0_1] : memref<8x128xf32, #tpu.memory_space<vmem>>, vector<8x128xf32>
    %c0_2 = arith.constant 0 : index
    %c0_3 = arith.constant 0 : index
    %4 = vector.load %arg8[%c0_2, %c0_3] : memref<8x128xf32, #tpu.memory_space<vmem>>, vector<8x128xf32>
    %c0_i32_4 = arith.constant 0 : i32
    %5 = arith.index_cast %c0_i32_4 : i32 to index
    %c0_5 = arith.constant 0 : index
    %c0_6 = arith.constant 0 : index
    %6 = vector.load %arg2[%5, %c0_5, %c0_6] : memref<8x8x512xbf16, #tpu.memory_space<vmem>>, vector<1x8x512xbf16>
    %7 = vector.shape_cast %6 : vector<1x8x512xbf16> to vector<8x512xbf16>
    %8 = arith.extf %7 : vector<8x512xbf16> to vector<8x512xf32>
    %9 = arith.truncf %3 : vector<8x128xf32> to vector<8x128xbf16>
    %c0_7 = arith.constant 0 : index
    %c0_8 = arith.constant 0 : index
    %10 = vector.load %arg3[%c0_7, %c0_8] : memref<128x512xbf16, #tpu.memory_space<vmem>>, vector<128x512xbf16>
    %cst = arith.constant dense<0.000000e+00> : vector<8x512xf32>
    %11 = tpu.matmul %9, %10, %cst {dimension_numbers = #tpu.dot_dimension_numbers<[1], [0], [0], [1], [0, 0, 1, 1], [], []>} : vector<8x128xbf16>, vector<128x512xbf16>, vector<8x512xf32> -> vector<8x512xf32>
    %12 = arith.addf %8, %11 : vector<8x512xf32>
    %13 = vector.extract_strided_slice %12 {offsets = [0, 0], sizes = [8, 128], strides = [1, 1]} : vector<8x512xf32> to vector<8x128xf32>
    %14 = arith.negf %13 : vector<8x128xf32>
    %15 = math.exp %14 : vector<8x128xf32>
    %cst_9 = arith.constant 1.000000e+00 : f32
    %16 = vector.broadcast %cst_9 : f32 to vector<8x128xf32>
    %17 = arith.addf %16, %15 : vector<8x128xf32>
    %18 = arith.divf %16, %17 : vector<8x128xf32>
    %19 = vector.extract_strided_slice %12 {offsets = [0, 128], sizes = [8, 128], strides = [1, 1]} : vector<8x512xf32> to vector<8x128xf32>
    %20 = arith.negf %19 : vector<8x128xf32>
    %21 = math.exp %20 : vector<8x128xf32>
    %cst_10 = arith.constant 1.000000e+00 : f32
    %22 = vector.broadcast %cst_10 : f32 to vector<8x128xf32>
    %23 = arith.addf %22, %21 : vector<8x128xf32>
    %24 = arith.divf %22, %23 : vector<8x128xf32>
    %25 = vector.extract_strided_slice %12 {offsets = [0, 256], sizes = [8, 128], strides = [1, 1]} : vector<8x512xf32> to vector<8x128xf32>
    %26 = math.tanh %25 : vector<8x128xf32>
    %27 = vector.extract_strided_slice %12 {offsets = [0, 384], sizes = [8, 128], strides = [1, 1]} : vector<8x512xf32> to vector<8x128xf32>
    %28 = arith.negf %27 : vector<8x128xf32>
    %29 = math.exp %28 : vector<8x128xf32>
    %cst_11 = arith.constant 1.000000e+00 : f32
    %30 = vector.broadcast %cst_11 : f32 to vector<8x128xf32>
    %31 = arith.addf %30, %29 : vector<8x128xf32>
    %32 = arith.divf %30, %31 : vector<8x128xf32>
    %33 = arith.mulf %24, %4 : vector<8x128xf32>
    %34 = arith.mulf %18, %26 : vector<8x128xf32>
    %35 = arith.addf %33, %34 : vector<8x128xf32>
    %36 = math.tanh %35 : vector<8x128xf32>
    %37 = arith.mulf %32, %36 : vector<8x128xf32>
    %38 = arith.index_cast %c0_i32_4 : i32 to index
    %c0_12 = arith.constant 0 : index
    %c0_13 = arith.constant 0 : index
    %39 = vector.load %arg4[%38, %c0_12, %c0_13] : memref<8x8x128xf32, #tpu.memory_space<vmem>>, vector<1x8x128xf32>
    %40 = vector.shape_cast %39 : vector<1x8x128xf32> to vector<8x128xf32>
    %41 = vector.shape_cast %37 : vector<8x128xf32> to vector<1x8x128xf32>
    tpu.vector_store %arg4[%38, %c0_12, %c0_13], %41 {strides = array<i32>} : memref<8x8x128xf32, #tpu.memory_space<vmem>>, vector<1x8x128xf32>,
    %c1_i32 = arith.constant 1 : i32
    %42 = arith.index_cast %c1_i32 : i32 to index
    %c0_14 = arith.constant 0 : index
    %c0_15 = arith.constant 0 : index
    %43 = vector.load %arg2[%42, %c0_14, %c0_15] : memref<8x8x512xbf16, #tpu.memory_space<vmem>>, vector<1x8x512xbf16>
    %44 = vector.shape_cast %43 : vector<1x8x512xbf16> to vector<8x512xbf16>
    %45 = arith.extf %44 : vector<8x512xbf16> to vector<8x512xf32>
    %46 = arith.truncf %37 : vector<8x128xf32> to vector<8x128xbf16>
    %c0_16 = arith.constant 0 : index
    %c0_17 = arith.constant 0 : index
    %47 = vector.load %arg3[%c0_16, %c0_17] : memref<128x512xbf16, #tpu.memory_space<vmem>>, vector<128x512xbf16>
    %cst_18 = arith.constant dense<0.000000e+00> : vector<8x512xf32>
    %48 = tpu.matmul %46, %47, %cst_18 {dimension_numbers = #tpu.dot_dimension_numbers<[1], [0], [0], [1], [0, 0, 1, 1], [], []>} : vector<8x128xbf16>, vector<128x512xbf16>, vector<8x512xf32> -> vector<8x512xf32>
    %49 = arith.addf %45, %48 : vector<8x512xf32>
    %50 = vector.extract_strided_slice %49 {offsets = [0, 0], sizes = [8, 128], strides = [1, 1]} : vector<8x512xf32> to vector<8x128xf32>
    %51 = arith.negf %50 : vector<8x128xf32>
    %52 = math.exp %51 : vector<8x128xf32>
    %cst_19 = arith.constant 1.000000e+00 : f32
    %53 = vector.broadcast %cst_19 : f32 to vector<8x128xf32>
    %54 = arith.addf %53, %52 : vector<8x128xf32>
    %55 = arith.divf %53, %54 : vector<8x128xf32>
    %56 = vector.extract_strided_slice %49 {offsets = [0, 128], sizes = [8, 128], strides = [1, 1]} : vector<8x512xf32> to vector<8x128xf32>
    %57 = arith.negf %56 : vector<8x128xf32>
    %58 = math.exp %57 : vector<8x128xf32>
    %cst_20 = arith.constant 1.000000e+00 : f32
    %59 = vector.broadcast %cst_20 : f32 to vector<8x128xf32>
    %60 = arith.addf %59, %58 : vector<8x128xf32>
    %61 = arith.divf %59, %60 : vector<8x128xf32>
    %62 = vector.extract_strided_slice %49 {offsets = [0, 256], sizes = [8, 128], strides = [1, 1]} : vector<8x512xf32> to vector<8x128xf32>
    %63 = math.tanh %62 : vector<8x128xf32>
    %64 = vector.extract_strided_slice %49 {offsets = [0, 384], sizes = [8, 128], strides = [1, 1]} : vector<8x512xf32> to vector<8x128xf32>
    %65 = arith.negf %64 : vector<8x128xf32>
    %66 = math.exp %65 : vector<8x128xf32>
    %cst_21 = arith.constant 1.000000e+00 : f32
    %67 = vector.broadcast %cst_21 : f32 to vector<8x128xf32>
    %68 = arith.addf %67, %66 : vector<8x128xf32>
    %69 = arith.divf %67, %68 : vector<8x128xf32>
    %70 = arith.mulf %61, %35 : vector<8x128xf32>
    %71 = arith.mulf %55, %63 : vector<8x128xf32>
    %72 = arith.addf %70, %71 : vector<8x128xf32>
    %73 = math.tanh %72 : vector<8x128xf32>
    %74 = arith.mulf %69, %73 : vector<8x128xf32>
    %75 = arith.index_cast %c1_i32 : i32 to index
    %c0_22 = arith.constant 0 : index
    %c0_23 = arith.constant 0 : index
    %76 = vector.load %arg4[%75, %c0_22, %c0_23] : memref<8x8x128xf32, #tpu.memory_space<vmem>>, vector<1x8x128xf32>
    %77 = vector.shape_cast %76 : vector<1x8x128xf32> to vector<8x128xf32>
    %78 = vector.shape_cast %74 : vector<8x128xf32> to vector<1x8x128xf32>
    tpu.vector_store %arg4[%75, %c0_22, %c0_23], %78 {strides = array<i32>} : memref<8x8x128xf32, #tpu.memory_space<vmem>>, vector<1x8x128xf32>,
    %c2_i32 = arith.constant 2 : i32
    %79 = arith.index_cast %c2_i32 : i32 to index
    %c0_24 = arith.constant 0 : index
    %c0_25 = arith.constant 0 : index
    %80 = vector.load %arg2[%79, %c0_24, %c0_25] : memref<8x8x512xbf16, #tpu.memory_space<vmem>>, vector<1x8x512xbf16>
    %81 = vector.shape_cast %80 : vector<1x8x512xbf16> to vector<8x512xbf16>
    %82 = arith.extf %81 : vector<8x512xbf16> to vector<8x512xf32>
    %83 = arith.truncf %74 : vector<8x128xf32> to vector<8x128xbf16>
    %c0_26 = arith.constant 0 : index
    %c0_27 = arith.constant 0 : index
    %84 = vector.load %arg3[%c0_26, %c0_27] : memref<128x512xbf16, #tpu.memory_space<vmem>>, vector<128x512xbf16>
    %cst_28 = arith.constant dense<0.000000e+00> : vector<8x512xf32>
    %85 = tpu.matmul %83, %84, %cst_28 {dimension_numbers = #tpu.dot_dimension_numbers<[1], [0], [0], [1], [0, 0, 1, 1], [], []>} : vector<8x128xbf16>, vector<128x512xbf16>, vector<8x512xf32> -> vector<8x512xf32>
    %86 = arith.addf %82, %85 : vector<8x512xf32>
    %87 = vector.extract_strided_slice %86 {offsets = [0, 0], sizes = [8, 128], strides = [1, 1]} : vector<8x512xf32> to vector<8x128xf32>
    %88 = arith.negf %87 : vector<8x128xf32>
    %89 = math.exp %88 : vector<8x128xf32>
    %cst_29 = arith.constant 1.000000e+00 : f32
    %90 = vector.broadcast %cst_29 : f32 to vector<8x128xf32>
    %91 = arith.addf %90, %89 : vector<8x128xf32>
    %92 = arith.divf %90, %91 : vector<8x128xf32>
    %93 = vector.extract_strided_slice %86 {offsets = [0, 128], sizes = [8, 128], strides = [1, 1]} : vector<8x512xf32> to vector<8x128xf32>
    %94 = arith.negf %93 : vector<8x128xf32>
    %95 = math.exp %94 : vector<8x128xf32>
    %cst_30 = arith.constant 1.000000e+00 : f32
    %96 = vector.broadcast %cst_30 : f32 to vector<8x128xf32>
    %97 = arith.addf %96, %95 : vector<8x128xf32>
    %98 = arith.divf %96, %97 : vector<8x128xf32>
    %99 = vector.extract_strided_slice %86 {offsets = [0, 256], sizes = [8, 128], strides = [1, 1]} : vector<8x512xf32> to vector<8x128xf32>
    %100 = math.tanh %99 : vector<8x128xf32>
    %101 = vector.extract_strided_slice %86 {offsets = [0, 384], sizes = [8, 128], strides = [1, 1]} : vector<8x512xf32> to vector<8x128xf32>
    %102 = arith.negf %101 : vector<8x128xf32>
    %103 = math.exp %102 : vector<8x128xf32>
    %cst_31 = arith.constant 1.000000e+00 : f32
    %104 = vector.broadcast %cst_31 : f32 to vector<8x128xf32>
    %105 = arith.addf %104, %103 : vector<8x128xf32>
    %106 = arith.divf %104, %105 : vector<8x128xf32>
    %107 = arith.mulf %98, %72 : vector<8x128xf32>
    %108 = arith.mulf %92, %100 : vector<8x128xf32>
    %109 = arith.addf %107, %108 : vector<8x128xf32>
    %110 = math.tanh %109 : vector<8x128xf32>
    %111 = arith.mulf %106, %110 : vector<8x128xf32>
    %112 = arith.index_cast %c2_i32 : i32 to index
    %c0_32 = arith.constant 0 : index
    %c0_33 = arith.constant 0 : index
    %113 = vector.load %arg4[%112, %c0_32, %c0_33] : memref<8x8x128xf32, #tpu.memory_space<vmem>>, vector<1x8x128xf32>
    %114 = vector.shape_cast %113 : vector<1x8x128xf32> to vector<8x128xf32>
    %115 = vector.shape_cast %111 : vector<8x128xf32> to vector<1x8x128xf32>
    tpu.vector_store %arg4[%112, %c0_32, %c0_33], %115 {strides = array<i32>} : memref<8x8x128xf32, #tpu.memory_space<vmem>>, vector<1x8x128xf32>,
    %c3_i32 = arith.constant 3 : i32
    %116 = arith.index_cast %c3_i32 : i32 to index
    %c0_34 = arith.constant 0 : index
    %c0_35 = arith.constant 0 : index
    %117 = vector.load %arg2[%116, %c0_34, %c0_35] : memref<8x8x512xbf16, #tpu.memory_space<vmem>>, vector<1x8x512xbf16>
    %118 = vector.shape_cast %117 : vector<1x8x512xbf16> to vector<8x512xbf16>
    %119 = arith.extf %118 : vector<8x512xbf16> to vector<8x512xf32>
    %120 = arith.truncf %111 : vector<8x128xf32> to vector<8x128xbf16>
    %c0_36 = arith.constant 0 : index
    %c0_37 = arith.constant 0 : index
    %121 = vector.load %arg3[%c0_36, %c0_37] : memref<128x512xbf16, #tpu.memory_space<vmem>>, vector<128x512xbf16>
    %cst_38 = arith.constant dense<0.000000e+00> : vector<8x512xf32>
    %122 = tpu.matmul %120, %121, %cst_38 {dimension_numbers = #tpu.dot_dimension_numbers<[1], [0], [0], [1], [0, 0, 1, 1], [], []>} : vector<8x128xbf16>, vector<128x512xbf16>, vector<8x512xf32> -> vector<8x512xf32>
    %123 = arith.addf %119, %122 : vector<8x512xf32>
    %124 = vector.extract_strided_slice %123 {offsets = [0, 0], sizes = [8, 128], strides = [1, 1]} : vector<8x512xf32> to vector<8x128xf32>
    %125 = arith.negf %124 : vector<8x128xf32>
    %126 = math.exp %125 : vector<8x128xf32>
    %cst_39 = arith.constant 1.000000e+00 : f32
    %127 = vector.broadcast %cst_39 : f32 to vector<8x128xf32>
    %128 = arith.addf %127, %126 : vector<8x128xf32>
    %129 = arith.divf %127, %128 : vector<8x128xf32>
    %130 = vector.extract_strided_slice %123 {offsets = [0, 128], sizes = [8, 128], strides = [1, 1]} : vector<8x512xf32> to vector<8x128xf32>
    %131 = arith.negf %130 : vector<8x128xf32>
    %132 = math.exp %131 : vector<8x128xf32>
    %cst_40 = arith.constant 1.000000e+00 : f32
    %133 = vector.broadcast %cst_40 : f32 to vector<8x128xf32>
    %134 = arith.addf %133, %132 : vector<8x128xf32>
    %135 = arith.divf %133, %134 : vector<8x128xf32>
    %136 = vector.extract_strided_slice %123 {offsets = [0, 256], sizes = [8, 128], strides = [1, 1]} : vector<8x512xf32> to vector<8x128xf32>
    %137 = math.tanh %136 : vector<8x128xf32>
    %138 = vector.extract_strided_slice %123 {offsets = [0, 384], sizes = [8, 128], strides = [1, 1]} : vector<8x512xf32> to vector<8x128xf32>
    %139 = arith.negf %138 : vector<8x128xf32>
    %140 = math.exp %139 : vector<8x128xf32>
    %cst_41 = arith.constant 1.000000e+00 : f32
    %141 = vector.broadcast %cst_41 : f32 to vector<8x128xf32>
    %142 = arith.addf %141, %140 : vector<8x128xf32>
    %143 = arith.divf %141, %142 : vector<8x128xf32>
    %144 = arith.mulf %135, %109 : vector<8x128xf32>
    %145 = arith.mulf %129, %137 : vector<8x128xf32>
    %146 = arith.addf %144, %145 : vector<8x128xf32>
    %147 = math.tanh %146 : vector<8x128xf32>
    %148 = arith.mulf %143, %147 : vector<8x128xf32>
    %149 = arith.index_cast %c3_i32 : i32 to index
    %c0_42 = arith.constant 0 : index
    %c0_43 = arith.constant 0 : index
    %150 = vector.load %arg4[%149, %c0_42, %c0_43] : memref<8x8x128xf32, #tpu.memory_space<vmem>>, vector<1x8x128xf32>
    %151 = vector.shape_cast %150 : vector<1x8x128xf32> to vector<8x128xf32>
    %152 = vector.shape_cast %148 : vector<8x128xf32> to vector<1x8x128xf32>
    tpu.vector_store %arg4[%149, %c0_42, %c0_43], %152 {strides = array<i32>} : memref<8x8x128xf32, #tpu.memory_space<vmem>>, vector<1x8x128xf32>,
    %c4_i32 = arith.constant 4 : i32
    %153 = arith.index_cast %c4_i32 : i32 to index
    %c0_44 = arith.constant 0 : index
    %c0_45 = arith.constant 0 : index
    %154 = vector.load %arg2[%153, %c0_44, %c0_45] : memref<8x8x512xbf16, #tpu.memory_space<vmem>>, vector<1x8x512xbf16>
    %155 = vector.shape_cast %154 : vector<1x8x512xbf16> to vector<8x512xbf16>
    %156 = arith.extf %155 : vector<8x512xbf16> to vector<8x512xf32>
    %157 = arith.truncf %148 : vector<8x128xf32> to vector<8x128xbf16>
    %c0_46 = arith.constant 0 : index
    %c0_47 = arith.constant 0 : index
    %158 = vector.load %arg3[%c0_46, %c0_47] : memref<128x512xbf16, #tpu.memory_space<vmem>>, vector<128x512xbf16>
    %cst_48 = arith.constant dense<0.000000e+00> : vector<8x512xf32>
    %159 = tpu.matmul %157, %158, %cst_48 {dimension_numbers = #tpu.dot_dimension_numbers<[1], [0], [0], [1], [0, 0, 1, 1], [], []>} : vector<8x128xbf16>, vector<128x512xbf16>, vector<8x512xf32> -> vector<8x512xf32>
    %160 = arith.addf %156, %159 : vector<8x512xf32>
    %161 = vector.extract_strided_slice %160 {offsets = [0, 0], sizes = [8, 128], strides = [1, 1]} : vector<8x512xf32> to vector<8x128xf32>
    %162 = arith.negf %161 : vector<8x128xf32>
    %163 = math.exp %162 : vector<8x128xf32>
    %cst_49 = arith.constant 1.000000e+00 : f32
    %164 = vector.broadcast %cst_49 : f32 to vector<8x128xf32>
    %165 = arith.addf %164, %163 : vector<8x128xf32>
    %166 = arith.divf %164, %165 : vector<8x128xf32>
    %167 = vector.extract_strided_slice %160 {offsets = [0, 128], sizes = [8, 128], strides = [1, 1]} : vector<8x512xf32> to vector<8x128xf32>
    %168 = arith.negf %167 : vector<8x128xf32>
    %169 = math.exp %168 : vector<8x128xf32>
    %cst_50 = arith.constant 1.000000e+00 : f32
    %170 = vector.broadcast %cst_50 : f32 to vector<8x128xf32>
    %171 = arith.addf %170, %169 : vector<8x128xf32>
    %172 = arith.divf %170, %171 : vector<8x128xf32>
    %173 = vector.extract_strided_slice %160 {offsets = [0, 256], sizes = [8, 128], strides = [1, 1]} : vector<8x512xf32> to vector<8x128xf32>
    %174 = math.tanh %173 : vector<8x128xf32>
    %175 = vector.extract_strided_slice %160 {offsets = [0, 384], sizes = [8, 128], strides = [1, 1]} : vector<8x512xf32> to vector<8x128xf32>
    %176 = arith.negf %175 : vector<8x128xf32>
    %177 = math.exp %176 : vector<8x128xf32>
    %cst_51 = arith.constant 1.000000e+00 : f32
    %178 = vector.broadcast %cst_51 : f32 to vector<8x128xf32>
    %179 = arith.addf %178, %177 : vector<8x128xf32>
    %180 = arith.divf %178, %179 : vector<8x128xf32>
    %181 = arith.mulf %172, %146 : vector<8x128xf32>
    %182 = arith.mulf %166, %174 : vector<8x128xf32>
    %183 = arith.addf %181, %182 : vector<8x128xf32>
    %184 = math.tanh %183 : vector<8x128xf32>
    %185 = arith.mulf %180, %184 : vector<8x128xf32>
    %186 = arith.index_cast %c4_i32 : i32 to index
    %c0_52 = arith.constant 0 : index
    %c0_53 = arith.constant 0 : index
    %187 = vector.load %arg4[%186, %c0_52, %c0_53] : memref<8x8x128xf32, #tpu.memory_space<vmem>>, vector<1x8x128xf32>
    %188 = vector.shape_cast %187 : vector<1x8x128xf32> to vector<8x128xf32>
    %189 = vector.shape_cast %185 : vector<8x128xf32> to vector<1x8x128xf32>
    tpu.vector_store %arg4[%186, %c0_52, %c0_53], %189 {strides = array<i32>} : memref<8x8x128xf32, #tpu.memory_space<vmem>>, vector<1x8x128xf32>,
    %c5_i32 = arith.constant 5 : i32
    %190 = arith.index_cast %c5_i32 : i32 to index
    %c0_54 = arith.constant 0 : index
    %c0_55 = arith.constant 0 : index
    %191 = vector.load %arg2[%190, %c0_54, %c0_55] : memref<8x8x512xbf16, #tpu.memory_space<vmem>>, vector<1x8x512xbf16>
    %192 = vector.shape_cast %191 : vector<1x8x512xbf16> to vector<8x512xbf16>
    %193 = arith.extf %192 : vector<8x512xbf16> to vector<8x512xf32>
    %194 = arith.truncf %185 : vector<8x128xf32> to vector<8x128xbf16>
    %c0_56 = arith.constant 0 : index
    %c0_57 = arith.constant 0 : index
    %195 = vector.load %arg3[%c0_56, %c0_57] : memref<128x512xbf16, #tpu.memory_space<vmem>>, vector<128x512xbf16>
    %cst_58 = arith.constant dense<0.000000e+00> : vector<8x512xf32>
    %196 = tpu.matmul %194, %195, %cst_58 {dimension_numbers = #tpu.dot_dimension_numbers<[1], [0], [0], [1], [0, 0, 1, 1], [], []>} : vector<8x128xbf16>, vector<128x512xbf16>, vector<8x512xf32> -> vector<8x512xf32>
    %197 = arith.addf %193, %196 : vector<8x512xf32>
    %198 = vector.extract_strided_slice %197 {offsets = [0, 0], sizes = [8, 128], strides = [1, 1]} : vector<8x512xf32> to vector<8x128xf32>
    %199 = arith.negf %198 : vector<8x128xf32>
    %200 = math.exp %199 : vector<8x128xf32>
    %cst_59 = arith.constant 1.000000e+00 : f32
    %201 = vector.broadcast %cst_59 : f32 to vector<8x128xf32>
    %202 = arith.addf %201, %200 : vector<8x128xf32>
    %203 = arith.divf %201, %202 : vector<8x128xf32>
    %204 = vector.extract_strided_slice %197 {offsets = [0, 128], sizes = [8, 128], strides = [1, 1]} : vector<8x512xf32> to vector<8x128xf32>
    %205 = arith.negf %204 : vector<8x128xf32>
    %206 = math.exp %205 : vector<8x128xf32>
    %cst_60 = arith.constant 1.000000e+00 : f32
    %207 = vector.broadcast %cst_60 : f32 to vector<8x128xf32>
    %208 = arith.addf %207, %206 : vector<8x128xf32>
    %209 = arith.divf %207, %208 : vector<8x128xf32>
    %210 = vector.extract_strided_slice %197 {offsets = [0, 256], sizes = [8, 128], strides = [1, 1]} : vector<8x512xf32> to vector<8x128xf32>
    %211 = math.tanh %210 : vector<8x128xf32>
    %212 = vector.extract_strided_slice %197 {offsets = [0, 384], sizes = [8, 128], strides = [1, 1]} : vector<8x512xf32> to vector<8x128xf32>
    %213 = arith.negf %212 : vector<8x128xf32>
    %214 = math.exp %213 : vector<8x128xf32>
    %cst_61 = arith.constant 1.000000e+00 : f32
    %215 = vector.broadcast %cst_61 : f32 to vector<8x128xf32>
    %216 = arith.addf %215, %214 : vector<8x128xf32>
    %217 = arith.divf %215, %216 : vector<8x128xf32>
    %218 = arith.mulf %209, %183 : vector<8x128xf32>
    %219 = arith.mulf %203, %211 : vector<8x128xf32>
    %220 = arith.addf %218, %219 : vector<8x128xf32>
    %221 = math.tanh %220 : vector<8x128xf32>
    %222 = arith.mulf %217, %221 : vector<8x128xf32>
    %223 = arith.index_cast %c5_i32 : i32 to index
    %c0_62 = arith.constant 0 : index
    %c0_63 = arith.constant 0 : index
    %224 = vector.load %arg4[%223, %c0_62, %c0_63] : memref<8x8x128xf32, #tpu.memory_space<vmem>>, vector<1x8x128xf32>
    %225 = vector.shape_cast %224 : vector<1x8x128xf32> to vector<8x128xf32>
    %226 = vector.shape_cast %222 : vector<8x128xf32> to vector<1x8x128xf32>
    tpu.vector_store %arg4[%223, %c0_62, %c0_63], %226 {strides = array<i32>} : memref<8x8x128xf32, #tpu.memory_space<vmem>>, vector<1x8x128xf32>,
    %c6_i32 = arith.constant 6 : i32
    %227 = arith.index_cast %c6_i32 : i32 to index
    %c0_64 = arith.constant 0 : index
    %c0_65 = arith.constant 0 : index
    %228 = vector.load %arg2[%227, %c0_64, %c0_65] : memref<8x8x512xbf16, #tpu.memory_space<vmem>>, vector<1x8x512xbf16>
    %229 = vector.shape_cast %228 : vector<1x8x512xbf16> to vector<8x512xbf16>
    %230 = arith.extf %229 : vector<8x512xbf16> to vector<8x512xf32>
    %231 = arith.truncf %222 : vector<8x128xf32> to vector<8x128xbf16>
    %c0_66 = arith.constant 0 : index
    %c0_67 = arith.constant 0 : index
    %232 = vector.load %arg3[%c0_66, %c0_67] : memref<128x512xbf16, #tpu.memory_space<vmem>>, vector<128x512xbf16>
    %cst_68 = arith.constant dense<0.000000e+00> : vector<8x512xf32>
    %233 = tpu.matmul %231, %232, %cst_68 {dimension_numbers = #tpu.dot_dimension_numbers<[1], [0], [0], [1], [0, 0, 1, 1], [], []>} : vector<8x128xbf16>, vector<128x512xbf16>, vector<8x512xf32> -> vector<8x512xf32>
    %234 = arith.addf %230, %233 : vector<8x512xf32>
    %235 = vector.extract_strided_slice %234 {offsets = [0, 0], sizes = [8, 128], strides = [1, 1]} : vector<8x512xf32> to vector<8x128xf32>
    %236 = arith.negf %235 : vector<8x128xf32>
    %237 = math.exp %236 : vector<8x128xf32>
    %cst_69 = arith.constant 1.000000e+00 : f32
    %238 = vector.broadcast %cst_69 : f32 to vector<8x128xf32>
    %239 = arith.addf %238, %237 : vector<8x128xf32>
    %240 = arith.divf %238, %239 : vector<8x128xf32>
    %241 = vector.extract_strided_slice %234 {offsets = [0, 128], sizes = [8, 128], strides = [1, 1]} : vector<8x512xf32> to vector<8x128xf32>
    %242 = arith.negf %241 : vector<8x128xf32>
    %243 = math.exp %242 : vector<8x128xf32>
    %cst_70 = arith.constant 1.000000e+00 : f32
    %244 = vector.broadcast %cst_70 : f32 to vector<8x128xf32>
    %245 = arith.addf %244, %243 : vector<8x128xf32>
    %246 = arith.divf %244, %245 : vector<8x128xf32>
    %247 = vector.extract_strided_slice %234 {offsets = [0, 256], sizes = [8, 128], strides = [1, 1]} : vector<8x512xf32> to vector<8x128xf32>
    %248 = math.tanh %247 : vector<8x128xf32>
    %249 = vector.extract_strided_slice %234 {offsets = [0, 384], sizes = [8, 128], strides = [1, 1]} : vector<8x512xf32> to vector<8x128xf32>
    %250 = arith.negf %249 : vector<8x128xf32>
    %251 = math.exp %250 : vector<8x128xf32>
    %cst_71 = arith.constant 1.000000e+00 : f32
    %252 = vector.broadcast %cst_71 : f32 to vector<8x128xf32>
    %253 = arith.addf %252, %251 : vector<8x128xf32>
    %254 = arith.divf %252, %253 : vector<8x128xf32>
    %255 = arith.mulf %246, %220 : vector<8x128xf32>
    %256 = arith.mulf %240, %248 : vector<8x128xf32>
    %257 = arith.addf %255, %256 : vector<8x128xf32>
    %258 = math.tanh %257 : vector<8x128xf32>
    %259 = arith.mulf %254, %258 : vector<8x128xf32>
    %260 = arith.index_cast %c6_i32 : i32 to index
    %c0_72 = arith.constant 0 : index
    %c0_73 = arith.constant 0 : index
    %261 = vector.load %arg4[%260, %c0_72, %c0_73] : memref<8x8x128xf32, #tpu.memory_space<vmem>>, vector<1x8x128xf32>
    %262 = vector.shape_cast %261 : vector<1x8x128xf32> to vector<8x128xf32>
    %263 = vector.shape_cast %259 : vector<8x128xf32> to vector<1x8x128xf32>
    tpu.vector_store %arg4[%260, %c0_72, %c0_73], %263 {strides = array<i32>} : memref<8x8x128xf32, #tpu.memory_space<vmem>>, vector<1x8x128xf32>,
    %c7_i32 = arith.constant 7 : i32
    %264 = arith.index_cast %c7_i32 : i32 to index
    %c0_74 = arith.constant 0 : index
    %c0_75 = arith.constant 0 : index
    %265 = vector.load %arg2[%264, %c0_74, %c0_75] : memref<8x8x512xbf16, #tpu.memory_space<vmem>>, vector<1x8x512xbf16>
    %266 = vector.shape_cast %265 : vector<1x8x512xbf16> to vector<8x512xbf16>
    %267 = arith.extf %266 : vector<8x512xbf16> to vector<8x512xf32>
    %268 = arith.truncf %259 : vector<8x128xf32> to vector<8x128xbf16>
    %c0_76 = arith.constant 0 : index
    %c0_77 = arith.constant 0 : index
    %269 = vector.load %arg3[%c0_76, %c0_77] : memref<128x512xbf16, #tpu.memory_space<vmem>>, vector<128x512xbf16>
    %cst_78 = arith.constant dense<0.000000e+00> : vector<8x512xf32>
    %270 = tpu.matmul %268, %269, %cst_78 {dimension_numbers = #tpu.dot_dimension_numbers<[1], [0], [0], [1], [0, 0, 1, 1], [], []>} : vector<8x128xbf16>, vector<128x512xbf16>, vector<8x512xf32> -> vector<8x512xf32>
    %271 = arith.addf %267, %270 : vector<8x512xf32>
    %272 = vector.extract_strided_slice %271 {offsets = [0, 0], sizes = [8, 128], strides = [1, 1]} : vector<8x512xf32> to vector<8x128xf32>
    %273 = arith.negf %272 : vector<8x128xf32>
    %274 = math.exp %273 : vector<8x128xf32>
    %cst_79 = arith.constant 1.000000e+00 : f32
    %275 = vector.broadcast %cst_79 : f32 to vector<8x128xf32>
    %276 = arith.addf %275, %274 : vector<8x128xf32>
    %277 = arith.divf %275, %276 : vector<8x128xf32>
    %278 = vector.extract_strided_slice %271 {offsets = [0, 128], sizes = [8, 128], strides = [1, 1]} : vector<8x512xf32> to vector<8x128xf32>
    %279 = arith.negf %278 : vector<8x128xf32>
    %280 = math.exp %279 : vector<8x128xf32>
    %cst_80 = arith.constant 1.000000e+00 : f32
    %281 = vector.broadcast %cst_80 : f32 to vector<8x128xf32>
    %282 = arith.addf %281, %280 : vector<8x128xf32>
    %283 = arith.divf %281, %282 : vector<8x128xf32>
    %284 = vector.extract_strided_slice %271 {offsets = [0, 256], sizes = [8, 128], strides = [1, 1]} : vector<8x512xf32> to vector<8x128xf32>
    %285 = math.tanh %284 : vector<8x128xf32>
    %286 = vector.extract_strided_slice %271 {offsets = [0, 384], sizes = [8, 128], strides = [1, 1]} : vector<8x512xf32> to vector<8x128xf32>
    %287 = arith.negf %286 : vector<8x128xf32>
    %288 = math.exp %287 : vector<8x128xf32>
    %cst_81 = arith.constant 1.000000e+00 : f32
    %289 = vector.broadcast %cst_81 : f32 to vector<8x128xf32>
    %290 = arith.addf %289, %288 : vector<8x128xf32>
    %291 = arith.divf %289, %290 : vector<8x128xf32>
    %292 = arith.mulf %283, %257 : vector<8x128xf32>
    %293 = arith.mulf %277, %285 : vector<8x128xf32>
    %294 = arith.addf %292, %293 : vector<8x128xf32>
    %295 = math.tanh %294 : vector<8x128xf32>
    %296 = arith.mulf %291, %295 : vector<8x128xf32>
    %297 = arith.index_cast %c7_i32 : i32 to index
    %c0_82 = arith.constant 0 : index
    %c0_83 = arith.constant 0 : index
    %298 = vector.load %arg4[%297, %c0_82, %c0_83] : memref<8x8x128xf32, #tpu.memory_space<vmem>>, vector<1x8x128xf32>
    %299 = vector.shape_cast %298 : vector<1x8x128xf32> to vector<8x128xf32>
    %300 = vector.shape_cast %296 : vector<8x128xf32> to vector<1x8x128xf32>
    tpu.vector_store %arg4[%297, %c0_82, %c0_83], %300 {strides = array<i32>} : memref<8x8x128xf32, #tpu.memory_space<vmem>>, vector<1x8x128xf32>,
    %c8_i32 = arith.constant 8 : i32
    %c0_84 = arith.constant 0 : index
    %c0_85 = arith.constant 0 : index
    %301 = vector.load %arg7[%c0_84, %c0_85] : memref<8x128xf32, #tpu.memory_space<vmem>>, vector<8x128xf32>
    tpu.vector_store %arg7[%c0_84, %c0_85], %296 {strides = array<i32>} : memref<8x128xf32, #tpu.memory_space<vmem>>, vector<8x128xf32>,
    %c0_86 = arith.constant 0 : index
    %c0_87 = arith.constant 0 : index
    %302 = vector.load %arg8[%c0_86, %c0_87] : memref<8x128xf32, #tpu.memory_space<vmem>>, vector<8x128xf32>
    tpu.vector_store %arg8[%c0_86, %c0_87], %294 {strides = array<i32>} : memref<8x128xf32, #tpu.memory_space<vmem>>, vector<8x128xf32>,
    %c0_i32_88 = arith.constant 0 : i32
    %303 = arith.cmpi eq, %arg1, %c0_i32_88 : i32
    %304 = arith.extui %303 : i1 to i32
    %c0_i32_89 = arith.constant 0 : i32
    %305 = arith.cmpi ne, %304, %c0_i32_89 : i32
    scf.if %305 {
      %c0_90 = arith.constant 0 : index
      %c0_91 = arith.constant 0 : index
      %306 = vector.load %arg5[%c0_90, %c0_91] : memref<8x128xf32, #tpu.memory_space<vmem>>, vector<8x128xf32>
      tpu.vector_store %arg5[%c0_90, %c0_91], %296 {strides = array<i32>} : memref<8x128xf32, #tpu.memory_space<vmem>>, vector<8x128xf32>,
      %c0_92 = arith.constant 0 : index
      %c0_93 = arith.constant 0 : index
      %307 = vector.load %arg6[%c0_92, %c0_93] : memref<8x128xf32, #tpu.memory_space<vmem>>, vector<8x128xf32>
      tpu.vector_store %arg6[%c0_92, %c0_93], %294 {strides = array<i32>} : memref<8x128xf32, #tpu.memory_space<vmem>>, vector<8x128xf32>,
    } else {
    }
    return
  }
  func.func @transform_0(%arg0: i32, %arg1: i32) -> (i32, i32, i32) {
    %c0_i32 = arith.constant 0 : i32
    %c0_i32_0 = arith.constant 0 : i32
    return %arg1, %arg0, %c0_i32 : i32, i32, i32
  }
  func.func @transform_1(%arg0: i32, %arg1: i32) -> (i32, i32) {
    %c0_i32 = arith.constant 0 : i32
    %c0_i32_0 = arith.constant 0 : i32
    %c0_i32_1 = arith.constant 0 : i32
    return %c0_i32, %c0_i32_0 : i32, i32
  }
  func.func @transform_2(%arg0: i32, %arg1: i32) -> (i32, i32, i32) {
    %c0_i32 = arith.constant 0 : i32
    %c0_i32_0 = arith.constant 0 : i32
    return %arg1, %arg0, %c0_i32 : i32, i32, i32
  }
  func.func @transform_3(%arg0: i32, %arg1: i32) -> (i32, i32) {
    %c0_i32 = arith.constant 0 : i32
    %c0_i32_0 = arith.constant 0 : i32
    return %arg0, %c0_i32 : i32, i32
  }
  func.func @transform_4(%arg0: i32, %arg1: i32) -> (i32, i32) {
    %c0_i32 = arith.constant 0 : i32
    %c0_i32_0 = arith.constant 0 : i32
    return %arg0, %c0_i32 : i32, i32
  }
}

</mosaic_0001>

<llo_original>
// kernel: encoder_forward.2
$region0: #{encoder_forward.2}
  #allocation0 [shape = 'u32[]', space=smem, size = 0x4, offset = 0x4, fixed_abs, tag = 'smem constant byte address 0x4 - core index']
  #allocation1 [shape = 'u32[144,128]{1,0:T(1,128)}', space=vmem, size = 0x12000, scoped, tag = 'internal scratch']
  %s0 = inlined_call_operand.hbm [shape: bf16[64,128], index: 0, kind: input, shape index: {}]
  %s1 = inlined_call_operand.hbm [shape: bf16[128,512], index: 1, kind: input, shape index: {}]
  %s2 = inlined_call_operand.hbm [shape: f32[1,512], index: 2, kind: input, shape index: {}]
  %s3 = inlined_call_operand.hbm [shape: bf16[64,512], index: 3, kind: output, shape index: {}]
  %s4 = sld [smem:[#allocation0]]
  $region34: #{encoder_forward.2} parent=0
    _
  %s6 = ssub.s32 1, %s4
  %s7 = scalar_select 0, %s6, %s4
  $region1: #{encoder_forward.2} parent=0
    #allocation2 [shape = 'u8[16384]{0}', space=vmem, size = 0x4000, scoped, tag = 'input window, operand 0, single buffered']
    #allocation3 [shape = 's32[1]{0}', space=sflag, size = 0x4, scoped, tag = 'scoped memory for encoder_forward.2']
    #allocation4 [shape = 's32[1]{0}', space=sflag, size = 0x4, scoped, tag = 'scoped memory for encoder_forward.2']
    #allocation5 [shape = 'u8[131072]{0}', space=vmem, size = 0x20000, scoped, tag = 'input window, operand 1, single buffered']
    #allocation6 [shape = 's32[1]{0}', space=sflag, size = 0x4, scoped, tag = 'scoped memory for encoder_forward.2']
    #allocation7 [shape = 'u8[2048]{0}', space=vmem, size = 0x800, scoped, tag = 'input window, operand 2, single buffered']
    #allocation8 [shape = 'u8[65536]{0}', space=vmem, size = 0x10000, scoped, tag = 'output window, operand 0, single buffered']
    %8 = vsyncpa [#allocation3], 0
    %9 = vsyncpa [#allocation6], 0
    %10 = vsyncpa [#allocation4], 0
    // Predicated region
    $region2: #{encoder_forward.2} parent=1 // pred_check
      _
    $region3: #{encoder_forward.2} parent=1 // pred_check_branch
      %12 = sbr.rel (0) target = $region5
    $region4: #{encoder_forward.2} parent=1 // pred_region
      %s14 = ssub.s32 512, 512
      %15 = vsyncadd [#allocation3], %s14
      %s16 = sshll.u32 [#allocation2], 4
      %s17 = int_to_ptr.vmem [resolvable:$true] %s16
      %22 = dma.hbm_to_vmem [thread:$0]  %s0, 512, %s17, [#allocation3], 64, 64, 4
    $region5: #{encoder_forward.2} parent=1 // pred_fallthru
      _
    // Predicated region
    $region6: #{encoder_forward.2} parent=1 // pred_check
      _
    $region7: #{encoder_forward.2} parent=1 // pred_check_branch
      %24 = sbr.rel (0) target = $region9
    $region8: #{encoder_forward.2} parent=1 // pred_region
      %s26 = ssub.s32 4096, 4096
      %27 = vsyncadd [#allocation6], %s26
      %s28 = sshll.u32 [#allocation5], 4
      %s29 = int_to_ptr.vmem [resolvable:$true] %s28
      %34 = dma.hbm_to_vmem [thread:$0]  %s1, 4096, %s29, [#allocation6], 256, 256, 16
    $region9: #{encoder_forward.2} parent=1 // pred_fallthru
      _
    // Predicated region
    $region10: #{encoder_forward.2} parent=1 // pred_check
      _
    $region11: #{encoder_forward.2} parent=1 // pred_check_branch
      %36 = sbr.rel (0) target = $region13
    $region12: #{encoder_forward.2} parent=1 // pred_region
      %s38 = ssub.s32 64, 64
      %39 = vsyncadd [#allocation6], %s38
      %s41 = sshll.u32 [#allocation7], 4
      %s42 = int_to_ptr.vmem [resolvable:$true] %s41
      %44 = dma.hbm_to_vmem [thread:$0]  %s2, 64, %s42, [#allocation6]
    $region13: #{encoder_forward.2} parent=1 // pred_fallthru
      _
    // Predicated region
    $region14: #{encoder_forward.2} parent=1 // pred_check
      _
    $region15: #{encoder_forward.2} parent=1 // pred_check_branch
      %46 = sbr.rel (0) target = $region17
    $region16: #{encoder_forward.2} parent=1 // pred_region
      %47 = dma.done [#allocation3], 512
    $region17: #{encoder_forward.2} parent=1 // pred_fallthru
      _
    // Predicated region
    $region18: #{encoder_forward.2} parent=1 // pred_check
      _
    $region19: #{encoder_forward.2} parent=1 // pred_check_branch
      %49 = sbr.rel (0) target = $region21
    $region20: #{encoder_forward.2} parent=1 // pred_region
      %50 = dma.done [#allocation6], 4096
    $region21: #{encoder_forward.2} parent=1 // pred_fallthru
      _
    // Predicated region
    $region22: #{encoder_forward.2} parent=1 // pred_check
      _
    $region23: #{encoder_forward.2} parent=1 // pred_check_branch
      %52 = sbr.rel (0) target = $region25
    $region24: #{encoder_forward.2} parent=1 // pred_region
      %53 = dma.done [#allocation6], 64
    $region25: #{encoder_forward.2} parent=1 // pred_fallthru
      _
    %v55 = vld [vmem:[#allocation2] sm:$0xf]
    %v56 = vld [vmem:[#allocation2 + $0x4] sm:$0xf]
    %v57 = vld [vmem:[#allocation2 + $0x8] sm:$0xf]
    %v58 = vld [vmem:[#allocation2 + $0xc] sm:$0xf]
    %v59 = vld [vmem:[#allocation2 + $0x10] sm:$0xf]
    %v60 = vld [vmem:[#allocation2 + $0x14] sm:$0xf]
    %v61 = vld [vmem:[#allocation2 + $0x18] sm:$0xf]
    %v62 = vld [vmem:[#allocation2 + $0x1c] sm:$0xf]
    %v63 = vld [vmem:[#allocation5] sm:$0xff]
    %v64 = vld [vmem:[#allocation5 + $0x8] sm:$0xff]
    %v65 = vld [vmem:[#allocation5 + $0x10] sm:$0xff]
    %v66 = vld [vmem:[#allocation5 + $0x18] sm:$0xff]
    %v67 = vld [vmem:[#allocation5 + $0x20] sm:$0xff]
    %v68 = vld [vmem:[#allocation5 + $0x28] sm:$0xff]
    %v69 = vld [vmem:[#allocation5 + $0x30] sm:$0xff]
    %v70 = vld [vmem:[#allocation5 + $0x38] sm:$0xff]
    %v71 = vld [vmem:[#allocation5 + $0x40] sm:$0xff]
    %v72 = vld [vmem:[#allocation5 + $0x48] sm:$0xff]
    %v73 = vld [vmem:[#allocation5 + $0x50] sm:$0xff]
    %v74 = vld [vmem:[#allocation5 + $0x58] sm:$0xff]
    %v75 = vld [vmem:[#allocation5 + $0x60] sm:$0xff]
    %v76 = vld [vmem:[#allocation5 + $0x68] sm:$0xff]
    %v77 = vld [vmem:[#allocation5 + $0x70] sm:$0xff]
    %v78 = vld [vmem:[#allocation5 + $0x78] sm:$0xff]
    %v79 = vld [vmem:[#allocation5 + $0x80] sm:$0xff]
    %v80 = vld [vmem:[#allocation5 + $0x88] sm:$0xff]
    %v81 = vld [vmem:[#allocation5 + $0x90] sm:$0xff]
    %v82 = vld [vmem:[#allocation5 + $0x98] sm:$0xff]
    %v83 = vld [vmem:[#allocation5 + $0xa0] sm:$0xff]
    %v84 = vld [vmem:[#allocation5 + $0xa8] sm:$0xff]
    %v85 = vld [vmem:[#allocation5 + $0xb0] sm:$0xff]
    %v86 = vld [vmem:[#allocation5 + $0xb8] sm:$0xff]
    %v87 = vld [vmem:[#allocation5 + $0xc0] sm:$0xff]
    %v88 = vld [vmem:[#allocation5 + $0xc8] sm:$0xff]
    %v89 = vld [vmem:[#allocation5 + $0xd0] sm:$0xff]
    %v90 = vld [vmem:[#allocation5 + $0xd8] sm:$0xff]
    %v91 = vld [vmem:[#allocation5 + $0xe0] sm:$0xff]
    %v92 = vld [vmem:[#allocation5 + $0xe8] sm:$0xff]
    %v93 = vld [vmem:[#allocation5 + $0xf0] sm:$0xff]
    %v94 = vld [vmem:[#allocation5 + $0xf8] sm:$0xff]
    %v95 = vld [vmem:[#allocation7] sm:$0xf]
    %v97 = vlaneseq
    %v98 = vshrl.u32 %v97, 7
    %v99 = vsub.s32 0, %v98
    %v100 = vrot.slane %v95, %v99
    %v101 = vlaneseq
    %v102 = vshrl.u32 %v101, 7
    %v103 = vsub.s32 1, %v102
    %v104 = vrot.slane %v95, %v103
    %v105 = vlaneseq
    %v106 = vshrl.u32 %v105, 7
    %v107 = vsub.s32 2, %v106
    %v108 = vrot.slane %v95, %v107
    %v109 = vlaneseq
    %v110 = vshrl.u32 %v109, 7
    %v111 = vsub.s32 3, %v110
    %v112 = vrot.slane %v95, %v111
    %v125 = vunpack.c.l.b16 %v55
    %v126 = vunpack.c.l.b16 %v56
    %v127 = vunpack.c.l.b16 %v57
    %v128 = vunpack.c.l.b16 %v58
    %v129 = vunpack.c.l.b16 %v59
    %v130 = vunpack.c.l.b16 %v60
    %v131 = vunpack.c.l.b16 %v61
    %v132 = vunpack.c.l.b16 %v62
    %v133 = vpack.c.b16 %v126, %v125
    %v134 = vpack.c.b16 %v128, %v127
    %v135 = vpack.c.b16 %v130, %v129
    %v136 = vpack.c.b16 %v132, %v131
    %v173 = vunpack.c.l.b16 %v63
    %v174 = vunpack.c.h.b16 %v63
    %v175 = vunpack.c.l.b16 %v64
    %v176 = vunpack.c.h.b16 %v64
    %v177 = vunpack.c.l.b16 %v65
    %v178 = vunpack.c.h.b16 %v65
    %v179 = vunpack.c.l.b16 %v66
    %v180 = vunpack.c.h.b16 %v66
    %v181 = vunpack.c.l.b16 %v67
    %v182 = vunpack.c.h.b16 %v67
    %v183 = vunpack.c.l.b16 %v68
    %v184 = vunpack.c.h.b16 %v68
    %v185 = vunpack.c.l.b16 %v69
    %v186 = vunpack.c.h.b16 %v69
    %v187 = vunpack.c.l.b16 %v70
    %v188 = vunpack.c.h.b16 %v70
    %v189 = vunpack.c.l.b16 %v71
    %v190 = vunpack.c.h.b16 %v71
    %v191 = vunpack.c.l.b16 %v72
    %v192 = vunpack.c.h.b16 %v72
    %v193 = vunpack.c.l.b16 %v73
    %v194 = vunpack.c.h.b16 %v73
    %v195 = vunpack.c.l.b16 %v74
    %v196 = vunpack.c.h.b16 %v74
    %v197 = vunpack.c.l.b16 %v75
    %v198 = vunpack.c.h.b16 %v75
    %v199 = vunpack.c.l.b16 %v76
    %v200 = vunpack.c.h.b16 %v76
    %v201 = vunpack.c.l.b16 %v77
    %v202 = vunpack.c.h.b16 %v77
    %v203 = vunpack.c.l.b16 %v78
    %v204 = vunpack.c.h.b16 %v78
    %v205 = vunpack.c.l.b16 %v79
    %v206 = vunpack.c.h.b16 %v79
    %v207 = vunpack.c.l.b16 %v80
    %v208 = vunpack.c.h.b16 %v80
    %v209 = vunpack.c.l.b16 %v81
    %v210 = vunpack.c.h.b16 %v81
    %v211 = vunpack.c.l.b16 %v82
    %v212 = vunpack.c.h.b16 %v82
    %v213 = vunpack.c.l.b16 %v83
    %v214 = vunpack.c.h.b16 %v83
    %v215 = vunpack.c.l.b16 %v84
    %v216 = vunpack.c.h.b16 %v84
    %v217 = vunpack.c.l.b16 %v85
    %v218 = vunpack.c.h.b16 %v85
    %v219 = vunpack.c.l.b16 %v86
    %v220 = vunpack.c.h.b16 %v86
    %v221 = vunpack.c.l.b16 %v87
    %v222 = vunpack.c.h.b16 %v87
    %v223 = vunpack.c.l.b16 %v88
    %v224 = vunpack.c.h.b16 %v88
    %v225 = vunpack.c.l.b16 %v89
    %v226 = vunpack.c.h.b16 %v89
    %v227 = vunpack.c.l.b16 %v90
    %v228 = vunpack.c.h.b16 %v90
    %v229 = vunpack.c.l.b16 %v91
    %v230 = vunpack.c.h.b16 %v91
    %v231 = vunpack.c.l.b16 %v92
    %v232 = vunpack.c.h.b16 %v92
    %v233 = vunpack.c.l.b16 %v93
    %v234 = vunpack.c.h.b16 %v93
    %v235 = vunpack.c.l.b16 %v94
    %v236 = vunpack.c.h.b16 %v94
    %v237 = vpack.c.b16 %v177, %v173
    %v238 = vpack.c.b16 %v178, %v174
    %v239 = vpack.c.b16 %v179, %v175
    %v240 = vpack.c.b16 %v180, %v176
    %v241 = vpack.c.b16 %v185, %v181
    %v242 = vpack.c.b16 %v186, %v182
    %v243 = vpack.c.b16 %v187, %v183
    %v244 = vpack.c.b16 %v188, %v184
    %v245 = vpack.c.b16 %v193, %v189
    %v246 = vpack.c.b16 %v194, %v190
    %v247 = vpack.c.b16 %v195, %v191
    %v248 = vpack.c.b16 %v196, %v192
    %v249 = vpack.c.b16 %v201, %v197
    %v250 = vpack.c.b16 %v202, %v198
    %v251 = vpack.c.b16 %v203, %v199
    %v252 = vpack.c.b16 %v204, %v200
    %v253 = vpack.c.b16 %v209, %v205
    %v254 = vpack.c.b16 %v210, %v206
    %v255 = vpack.c.b16 %v211, %v207
    %v256 = vpack.c.b16 %v212, %v208
    %v257 = vpack.c.b16 %v217, %v213
    %v258 = vpack.c.b16 %v218, %v214
    %v259 = vpack.c.b16 %v219, %v215
    %v260 = vpack.c.b16 %v220, %v216
    %v261 = vpack.c.b16 %v225, %v221
    %v262 = vpack.c.b16 %v226, %v222
    %v263 = vpack.c.b16 %v227, %v223
    %v264 = vpack.c.b16 %v228, %v224
    %v265 = vpack.c.b16 %v233, %v229
    %v266 = vpack.c.b16 %v234, %v230
    %v267 = vpack.c.b16 %v235, %v231
    %v268 = vpack.c.b16 %v236, %v232
    %301 = vmatprep.subr.bf16.mxu0 %v238
    %302 = vmatpush1.bf16.msra.mxu0 %v237
    %303 = vmatprep.subr.bf16.mxu0 %v242
    %304 = vmatpush1.bf16.msra.mxu0 %v241
    %305 = vmatprep.subr.bf16.mxu0 %v246
    %306 = vmatpush1.bf16.msra.mxu0 %v245
    %307 = vmatprep.subr.bf16.mxu0 %v250
    %308 = vmatpush1.bf16.msra.mxu0 %v249
    %309 = vmatprep.subr.bf16.mxu0 %v254
    %310 = vmatpush1.bf16.msra.mxu0 %v253
    %311 = vmatprep.subr.bf16.mxu0 %v258
    %312 = vmatpush1.bf16.msra.mxu0 %v257
    %313 = vmatprep.subr.bf16.mxu0 %v262
    %314 = vmatpush1.bf16.msra.mxu0 %v261
    %315 = vmatprep.subr.bf16.mxu0 %v266
    %316 = vmatpush1.bf16.msra.mxu0 %v265
    %317 = vmatprep.subr.bf16.mxu0 0
    %318 = vmatpush1.bf16.msra.mxu0 0
    %319 = vmatprep.subr.bf16.mxu0 0
    %320 = vmatpush1.bf16.msra.mxu0 0
    %321 = vmatprep.subr.bf16.mxu0 0
    %322 = vmatpush1.bf16.msra.mxu0 0
    %323 = vmatprep.subr.bf16.mxu0 0
    %324 = vmatpush1.bf16.msra.mxu0 0
    %325 = vmatprep.subr.bf16.mxu0 0
    %326 = vmatpush1.bf16.msra.mxu0 0
    %327 = vmatprep.subr.bf16.mxu0 0
    %328 = vmatpush1.bf16.msra.mxu0 0
    %329 = vmatprep.subr.bf16.mxu0 0
    %330 = vmatpush1.bf16.msra.mxu0 0
    %331 = vmatprep.subr.bf16.mxu0 0
    %332 = vmatpush1.bf16.msra.mxu0 0
    %333 = vmatprep.mubr.bf16.mxu0 0
    %334 = vmatmul.mubr.bf16.gmra.mrb[0].mxu0 %v133
    %v335 = vpop.f32.mrb[0].mxu0
    %v336 = vadd.f32 %v100, %v335
    %v337 = vpop.f32.mrb[0].mxu0
    %v338 = vadd.f32 %v104, %v337
    %v339 = vpop.f32.mrb[0].mxu0
    %v340 = vadd.f32 %v100, %v339
    %v341 = vpop.f32.mrb[0].mxu0
    %v342 = vadd.f32 %v104, %v341
    %343 = vmatprep.mubr.bf16.mxu0 0
    %344 = vmatmul.mubr.bf16.gmra.mrb[0].mxu0 %v134
    %v345 = vpop.f32.mrb[0].mxu0
    %v346 = vadd.f32 %v100, %v345
    %v347 = vpop.f32.mrb[0].mxu0
    %v348 = vadd.f32 %v104, %v347
    %v349 = vpop.f32.mrb[0].mxu0
    %v350 = vadd.f32 %v100, %v349
    %v351 = vpop.f32.mrb[0].mxu0
    %v352 = vadd.f32 %v104, %v351
    %353 = vmatprep.mubr.bf16.mxu0 0
    %354 = vmatmul.mubr.bf16.gmra.mrb[0].mxu0 %v135
    %v355 = vpop.f32.mrb[0].mxu0
    %v356 = vadd.f32 %v100, %v355
    %v357 = vpop.f32.mrb[0].mxu0
    %v358 = vadd.f32 %v104, %v357
    %v359 = vpop.f32.mrb[0].mxu0
    %v360 = vadd.f32 %v100, %v359
    %v361 = vpop.f32.mrb[0].mxu0
    %v362 = vadd.f32 %v104, %v361
    %363 = vmatprep.mubr.bf16.mxu0 0
    %364 = vmatmul.mubr.bf16.gmra.mrb[0].mxu0 %v136
    %v365 = vpop.f32.mrb[0].mxu0
    %v366 = vadd.f32 %v100, %v365
    %v367 = vpop.f32.mrb[0].mxu0
    %v368 = vadd.f32 %v104, %v367
    %v369 = vpop.f32.mrb[0].mxu0
    %v370 = vadd.f32 %v100, %v369
    %v371 = vpop.f32.mrb[0].mxu0
    %v372 = vadd.f32 %v104, %v371
    %373 = vdwg.mxu0
    %374 = vmatprep.subr.bf16.mxu0 %v240
    %375 = vmatpush1.bf16.msra.mxu0 %v239
    %376 = vmatprep.subr.bf16.mxu0 %v244
    %377 = vmatpush1.bf16.msra.mxu0 %v243
    %378 = vmatprep.subr.bf16.mxu0 %v248
    %379 = vmatpush1.bf16.msra.mxu0 %v247
    %380 = vmatprep.subr.bf16.mxu0 %v252
    %381 = vmatpush1.bf16.msra.mxu0 %v251
    %382 = vmatprep.subr.bf16.mxu0 %v256
    %383 = vmatpush1.bf16.msra.mxu0 %v255
    %384 = vmatprep.subr.bf16.mxu0 %v260
    %385 = vmatpush1.bf16.msra.mxu0 %v259
    %386 = vmatprep.subr.bf16.mxu0 %v264
    %387 = vmatpush1.bf16.msra.mxu0 %v263
    %388 = vmatprep.subr.bf16.mxu0 %v268
    %389 = vmatpush1.bf16.msra.mxu0 %v267
    %390 = vmatprep.subr.bf16.mxu0 0
    %391 = vmatpush1.bf16.msra.mxu0 0
    %392 = vmatprep.subr.bf16.mxu0 0
    %393 = vmatpush1.bf16.msra.mxu0 0
    %394 = vmatprep.subr.bf16.mxu0 0
    %395 = vmatpush1.bf16.msra.mxu0 0
    %396 = vmatprep.subr.bf16.mxu0 0
    %397 = vmatpush1.bf16.msra.mxu0 0
    %398 = vmatprep.subr.bf16.mxu0 0
    %399 = vmatpush1.bf16.msra.mxu0 0
    %400 = vmatprep.subr.bf16.mxu0 0
    %401 = vmatpush1.bf16.msra.mxu0 0
    %402 = vmatprep.subr.bf16.mxu0 0
    %403 = vmatpush1.bf16.msra.mxu0 0
    %404 = vmatprep.subr.bf16.mxu0 0
    %405 = vmatpush1.bf16.msra.mxu0 0
    %406 = vmatprep.mubr.bf16.mxu0 0
    %407 = vmatmul.mubr.bf16.gmra.mrb[0].mxu0 %v133
    %v408 = vpop.f32.mrb[0].mxu0
    %v409 = vadd.f32 %v108, %v408
    %v410 = vpop.f32.mrb[0].mxu0
    %v411 = vadd.f32 %v112, %v410
    %v412 = vpop.f32.mrb[0].mxu0
    %v413 = vadd.f32 %v108, %v412
    %v414 = vpop.f32.mrb[0].mxu0
    %v415 = vadd.f32 %v112, %v414
    %416 = vmatprep.mubr.bf16.mxu0 0
    %417 = vmatmul.mubr.bf16.gmra.mrb[0].mxu0 %v134
    %v418 = vpop.f32.mrb[0].mxu0
    %v419 = vadd.f32 %v108, %v418
    %v420 = vpop.f32.mrb[0].mxu0
    %v421 = vadd.f32 %v112, %v420
    %v422 = vpop.f32.mrb[0].mxu0
    %v423 = vadd.f32 %v108, %v422
    %v424 = vpop.f32.mrb[0].mxu0
    %v425 = vadd.f32 %v112, %v424
    %426 = vmatprep.mubr.bf16.mxu0 0
    %427 = vmatmul.mubr.bf16.gmra.mrb[0].mxu0 %v135
    %v428 = vpop.f32.mrb[0].mxu0
    %v429 = vadd.f32 %v108, %v428
    %v430 = vpop.f32.mrb[0].mxu0
    %v431 = vadd.f32 %v112, %v430
    %v432 = vpop.f32.mrb[0].mxu0
    %v433 = vadd.f32 %v108, %v432
    %v434 = vpop.f32.mrb[0].mxu0
    %v435 = vadd.f32 %v112, %v434
    %436 = vmatprep.mubr.bf16.mxu0 0
    %437 = vmatmul.mubr.bf16.gmra.mrb[0].mxu0 %v136
    %v438 = vpop.f32.mrb[0].mxu0
    %v439 = vadd.f32 %v108, %v438
    %v440 = vpop.f32.mrb[0].mxu0
    %v441 = vadd.f32 %v112, %v440
    %v442 = vpop.f32.mrb[0].mxu0
    %v443 = vadd.f32 %v108, %v442
    %v444 = vpop.f32.mrb[0].mxu0
    %v445 = vadd.f32 %v112, %v444
    %446 = vdwg.mxu0
    %v447 = vpack.c.bf16 %v340, %v336
    %v448 = vpack.c.bf16 %v342, %v338
    %v449 = vpack.c.bf16 %v413, %v409
    %v450 = vpack.c.bf16 %v415, %v411
    %v451 = vpack.c.bf16 %v350, %v346
    %v452 = vpack.c.bf16 %v352, %v348
    %v453 = vpack.c.bf16 %v423, %v419
    %v454 = vpack.c.bf16 %v425, %v421
    %v455 = vpack.c.bf16 %v360, %v356
    %v456 = vpack.c.bf16 %v362, %v358
    %v457 = vpack.c.bf16 %v433, %v429
    %v458 = vpack.c.bf16 %v435, %v431
    %v459 = vpack.c.bf16 %v370, %v366
    %v460 = vpack.c.bf16 %v372, %v368
    %v461 = vpack.c.bf16 %v443, %v439
    %v462 = vpack.c.bf16 %v445, %v441
    %v479 = vunpack.c.l.b16 %v447
    %v480 = vunpack.c.l.b16 %v448
    %v481 = vunpack.c.l.b16 %v449
    %v482 = vunpack.c.l.b16 %v450
    %v483 = vunpack.c.h.b16 %v447
    %v484 = vunpack.c.h.b16 %v448
    %v485 = vunpack.c.h.b16 %v449
    %v486 = vunpack.c.h.b16 %v450
    %v487 = vunpack.c.l.b16 %v451
    %v488 = vunpack.c.l.b16 %v452
    %v489 = vunpack.c.l.b16 %v453
    %v490 = vunpack.c.l.b16 %v454
    %v491 = vunpack.c.h.b16 %v451
    %v492 = vunpack.c.h.b16 %v452
    %v493 = vunpack.c.h.b16 %v453
    %v494 = vunpack.c.h.b16 %v454
    %v495 = vunpack.c.l.b16 %v455
    %v496 = vunpack.c.l.b16 %v456
    %v497 = vunpack.c.l.b16 %v457
    %v498 = vunpack.c.l.b16 %v458
    %v499 = vunpack.c.h.b16 %v455
    %v500 = vunpack.c.h.b16 %v456
    %v501 = vunpack.c.h.b16 %v457
    %v502 = vunpack.c.h.b16 %v458
    %v503 = vunpack.c.l.b16 %v459
    %v504 = vunpack.c.l.b16 %v460
    %v505 = vunpack.c.l.b16 %v461
    %v506 = vunpack.c.l.b16 %v462
    %v507 = vunpack.c.h.b16 %v459
    %v508 = vunpack.c.h.b16 %v460
    %v509 = vunpack.c.h.b16 %v461
    %v510 = vunpack.c.h.b16 %v462
    %v511 = vpack.c.b16 %v480, %v479
    %v512 = vpack.c.b16 %v482, %v481
    %v513 = vpack.c.b16 %v484, %v483
    %v514 = vpack.c.b16 %v486, %v485
    %v515 = vpack.c.b16 %v488, %v487
    %v516 = vpack.c.b16 %v490, %v489
    %v517 = vpack.c.b16 %v492, %v491
    %v518 = vpack.c.b16 %v494, %v493
    %v519 = vpack.c.b16 %v496, %v495
    %v520 = vpack.c.b16 %v498, %v497
    %v521 = vpack.c.b16 %v500, %v499
    %v522 = vpack.c.b16 %v502, %v501
    %v523 = vpack.c.b16 %v504, %v503
    %v524 = vpack.c.b16 %v506, %v505
    %v525 = vpack.c.b16 %v508, %v507
    %v526 = vpack.c.b16 %v510, %v509
    %543 = vst [vmem:[#allocation8] sm:$0xff] %v511
    %544 = vst [vmem:[#allocation8 + $0x8] sm:$0xff] %v512
    %545 = vst [vmem:[#allocation8 + $0x10] sm:$0xff] %v513
    %546 = vst [vmem:[#allocation8 + $0x18] sm:$0xff] %v514
    %547 = vst [vmem:[#allocation8 + $0x20] sm:$0xff] %v515
    %548 = vst [vmem:[#allocation8 + $0x28] sm:$0xff] %v516
    %549 = vst [vmem:[#allocation8 + $0x30] sm:$0xff] %v517
    %550 = vst [vmem:[#allocation8 + $0x38] sm:$0xff] %v518
    %551 = vst [vmem:[#allocation8 + $0x40] sm:$0xff] %v519
    %552 = vst [vmem:[#allocation8 + $0x48] sm:$0xff] %v520
    %553 = vst [vmem:[#allocation8 + $0x50] sm:$0xff] %v521
    %554 = vst [vmem:[#allocation8 + $0x58] sm:$0xff] %v522
    %555 = vst [vmem:[#allocation8 + $0x60] sm:$0xff] %v523
    %556 = vst [vmem:[#allocation8 + $0x68] sm:$0xff] %v524
    %557 = vst [vmem:[#allocation8 + $0x70] sm:$0xff] %v525
    %558 = vst [vmem:[#allocation8 + $0x78] sm:$0xff] %v526
    // Predicated region
    $region26: #{encoder_forward.2} parent=1 // pred_check
      _
    $region27: #{encoder_forward.2} parent=1 // pred_check_branch
      %560 = sbr.rel (0) target = $region29
    $region28: #{encoder_forward.2} parent=1 // pred_region
      %s562 = ssub.s32 2048, 2048
      %563 = vsyncadd [#allocation4], %s562
      %s564 = sshll.u32 [#allocation8], 4
      %s565 = int_to_ptr.vmem [resolvable:$true] %s564
      %570 = dma.vmem_to_hbm [thread:$0]  %s565, 2048, %s3, [#allocation4], 256, 256, 16
    $region29: #{encoder_forward.2} parent=1 // pred_fallthru
      _
    // Predicated region
    $region30: #{encoder_forward.2} parent=1 // pred_check
      _
    $region31: #{encoder_forward.2} parent=1 // pred_check_branch
      %572 = sbr.rel (0) target = $region33
    $region32: #{encoder_forward.2} parent=1 // pred_region
      %573 = dma.done [#allocation4], 2048
    $region33: #{encoder_forward.2} parent=1 // pred_fallthru
      _
    %574 = vsyncpa [#allocation3], 1
    %575 = vsyncpa [#allocation6], 1
    %576 = vsyncpa [#allocation4], 1

// kernel: encoder_forward.3
$region0: #{encoder_forward.3}
  #allocation0 [shape = 'u32[]', space=smem, size = 0x4, offset = 0x4, fixed_abs, tag = 'smem constant byte address 0x4 - core index']
  #allocation1 [shape = 'u32[144,128]{1,0:T(1,128)}', space=vmem, size = 0x12000, scoped, tag = 'internal scratch']
  #allocation2 [shape = 'f32[8,128]{1,0:T(8,128)}', space=vmem, size = 0x1000, scoped, tag = 'scratch operand']
  #allocation3 [shape = 'f32[8,128]{1,0:T(8,128)}', space=vmem, size = 0x1000, scoped, tag = 'scratch operand']
  %s0 = inlined_call_operand.hbm [shape: bf16[8,8,512], index: 0, kind: input, shape index: {}]
  %s1 = inlined_call_operand.hbm [shape: bf16[128,512], index: 1, kind: input, shape index: {}]
  %s2 = inlined_call_operand.hbm [shape: f32[8,8,128], index: 2, kind: output, shape index: {0}]
  %s3 = inlined_call_operand.hbm [shape: f32[8,128], index: 3, kind: output, shape index: {1}]
  %s4 = inlined_call_operand.hbm [shape: f32[8,128], index: 4, kind: output, shape index: {2}]
  %5 = xla_tuple %s2, %s3, %s4
  %s6 = sld [smem:[#allocation0]]
  $region50: #{encoder_forward.3} parent=0
    _
  %s8 = ssub.s32 1, %s6
  %s9 = scalar_select 0, %s8, %s6
  $region1: #{encoder_forward.3} parent=0
    #allocation4 [shape = 'u8[65536]{0}', space=vmem, size = 0x10000, scoped, tag = 'input window, operand 0, single buffered']
    #allocation5 [shape = 's32[1]{0}', space=sflag, size = 0x4, scoped, tag = 'scoped memory for encoder_forward.3']
    #allocation6 [shape = 's32[1]{0}', space=sflag, size = 0x4, scoped, tag = 'scoped memory for encoder_forward.3']
    #allocation7 [shape = 'u8[131072]{0}', space=vmem, size = 0x20000, scoped, tag = 'input window, operand 1, single buffered']
    #allocation8 [shape = 's32[1]{0}', space=sflag, size = 0x4, scoped, tag = 'scoped memory for encoder_forward.3']
    #allocation9 [shape = 'u8[32768]{0}', space=vmem, size = 0x8000, scoped, tag = 'output window, operand 0, single buffered']
    #allocation10 [shape = 'u8[4096]{0}', space=vmem, size = 0x1000, scoped, tag = 'output window, operand 1, single buffered']
    #allocation11 [shape = 's32[1]{0}', space=sflag, size = 0x4, scoped, tag = 'scoped memory for encoder_forward.3']
    #allocation12 [shape = 'u8[4096]{0}', space=vmem, size = 0x1000, scoped, tag = 'output window, operand 2, single buffered']
    %10 = vsyncpa [#allocation5], 0
    %11 = vsyncpa [#allocation8], 0
    %12 = vsyncpa [#allocation6], 0
    %13 = vsyncpa [#allocation11], 0
    // Predicated region
    $region2: #{encoder_forward.3} parent=1 // pred_check
      _
    $region3: #{encoder_forward.3} parent=1 // pred_check_branch
      %15 = sbr.rel (0) target = $region5
    $region4: #{encoder_forward.3} parent=1 // pred_region
      %s17 = ssub.s32 2048, 2048
      %18 = vsyncadd [#allocation5], %s17
      %s19 = sshll.u32 [#allocation4], 4
      %s20 = int_to_ptr.vmem [resolvable:$true] %s19
      %25 = dma.hbm_to_vmem [thread:$0]  %s0, 2048, %s20, [#allocation5], 256, 256, 16
    $region5: #{encoder_forward.3} parent=1 // pred_fallthru
      _
    // Predicated region
    $region6: #{encoder_forward.3} parent=1 // pred_check
      _
    $region7: #{encoder_forward.3} parent=1 // pred_check_branch
      %27 = sbr.rel (0) target = $region9
    $region8: #{encoder_forward.3} parent=1 // pred_region
      %s29 = ssub.s32 4096, 4096
      %30 = vsyncadd [#allocation8], %s29
      %s31 = sshll.u32 [#allocation7], 4
      %s32 = int_to_ptr.vmem [resolvable:$true] %s31
      %37 = dma.hbm_to_vmem [thread:$0]  %s1, 4096, %s32, [#allocation8], 256, 256, 16
    $region9: #{encoder_forward.3} parent=1 // pred_fallthru
      _
    // Predicated region
    $region10: #{encoder_forward.3} parent=1 // pred_check
      _
    $region11: #{encoder_forward.3} parent=1 // pred_check_branch
      %39 = sbr.rel (0) target = $region13
    $region12: #{encoder_forward.3} parent=1 // pred_region
      %40 = dma.done [#allocation5], 2048
    $region13: #{encoder_forward.3} parent=1 // pred_fallthru
      _
    // Predicated region
    $region14: #{encoder_forward.3} parent=1 // pred_check
      _
    $region15: #{encoder_forward.3} parent=1 // pred_check_branch
      %42 = sbr.rel (0) target = $region17
    $region16: #{encoder_forward.3} parent=1 // pred_region
      %43 = dma.done [#allocation8], 4096
    $region17: #{encoder_forward.3} parent=1 // pred_fallthru
      _
    %p45 = scmp.eq.s32.totalorder 0, 0
    // Predicated region
    $region18: #{encoder_forward.3} parent=1 // pred_check
      %p46 = pneg %p45
    $region19: #{encoder_forward.3} parent=1 // pred_check_branch
      %48 = sbr.rel (%p46) target = $region21
    $region20: #{encoder_forward.3} parent=1 // pred_region
      %49 = vst [vmem:[#allocation2] sm:$0xff] 0.0
      %50 = vst [vmem:[#allocation3] sm:$0xff] 0.0
    $region21: #{encoder_forward.3} parent=1 // pred_fallthru
      _
    %v51 = vld [vmem:[#allocation2] sm:$0xff]
    %v52 = vld [vmem:[#allocation3] sm:$0xff]
    %v53 = vld [vmem:[#allocation4] sm:$0xff]
    %v54 = vld [vmem:[#allocation4 + $0x8] sm:$0xff]
    %v55 = vunpack.c.l.bf16 %v53
    %v56 = vunpack.c.h.bf16 %v53
    %v57 = vunpack.c.l.bf16 %v54
    %v58 = vunpack.c.h.bf16 %v54
    %v59 = vpack.c.bf16 %v51, %v51
    %v60 = vld [vmem:[#allocation7] sm:$0xff]
    %v61 = vld [vmem:[#allocation7 + $0x8] sm:$0xff]
    %v62 = vld [vmem:[#allocation7 + $0x10] sm:$0xff]
    %v63 = vld [vmem:[#allocation7 + $0x18] sm:$0xff]
    %v64 = vld [vmem:[#allocation7 + $0x20] sm:$0xff]
    %v65 = vld [vmem:[#allocation7 + $0x28] sm:$0xff]
    %v66 = vld [vmem:[#allocation7 + $0x30] sm:$0xff]
    %v67 = vld [vmem:[#allocation7 + $0x38] sm:$0xff]
    %v68 = vld [vmem:[#allocation7 + $0x40] sm:$0xff]
    %v69 = vld [vmem:[#allocation7 + $0x48] sm:$0xff]
    %v70 = vld [vmem:[#allocation7 + $0x50] sm:$0xff]
    %v71 = vld [vmem:[#allocation7 + $0x58] sm:$0xff]
    %v72 = vld [vmem:[#allocation7 + $0x60] sm:$0xff]
    %v73 = vld [vmem:[#allocation7 + $0x68] sm:$0xff]
    %v74 = vld [vmem:[#allocation7 + $0x70] sm:$0xff]
    %v75 = vld [vmem:[#allocation7 + $0x78] sm:$0xff]
    %v76 = vld [vmem:[#allocation7 + $0x80] sm:$0xff]
    %v77 = vld [vmem:[#allocation7 + $0x88] sm:$0xff]
    %v78 = vld [vmem:[#allocation7 + $0x90] sm:$0xff]
    %v79 = vld [vmem:[#allocation7 + $0x98] sm:$0xff]
    %v80 = vld [vmem:[#allocation7 + $0xa0] sm:$0xff]
    %v81 = vld [vmem:[#allocation7 + $0xa8] sm:$0xff]
    %v82 = vld [vmem:[#allocation7 + $0xb0] sm:$0xff]
    %v83 = vld [vmem:[#allocation7 + $0xb8] sm:$0xff]
    %v84 = vld [vmem:[#allocation7 + $0xc0] sm:$0xff]
    %v85 = vld [vmem:[#allocation7 + $0xc8] sm:$0xff]
    %v86 = vld [vmem:[#allocation7 + $0xd0] sm:$0xff]
    %v87 = vld [vmem:[#allocation7 + $0xd8] sm:$0xff]
    %v88 = vld [vmem:[#allocation7 + $0xe0] sm:$0xff]
    %v89 = vld [vmem:[#allocation7 + $0xe8] sm:$0xff]
    %v90 = vld [vmem:[#allocation7 + $0xf0] sm:$0xff]
    %v91 = vld [vmem:[#allocation7 + $0xf8] sm:$0xff]
    %v124 = vunpack.c.l.b16 %v60
    %v125 = vunpack.c.h.b16 %v60
    %v126 = vunpack.c.l.b16 %v61
    %v127 = vunpack.c.h.b16 %v61
    %v128 = vunpack.c.l.b16 %v62
    %v129 = vunpack.c.h.b16 %v62
    %v130 = vunpack.c.l.b16 %v63
    %v131 = vunpack.c.h.b16 %v63
    %v132 = vunpack.c.l.b16 %v64
    %v133 = vunpack.c.h.b16 %v64
    %v134 = vunpack.c.l.b16 %v65
    %v135 = vunpack.c.h.b16 %v65
    %v136 = vunpack.c.l.b16 %v66
    %v137 = vunpack.c.h.b16 %v66
    %v138 = vunpack.c.l.b16 %v67
    %v139 = vunpack.c.h.b16 %v67
    %v140 = vunpack.c.l.b16 %v68
    %v141 = vunpack.c.h.b16 %v68
    %v142 = vunpack.c.l.b16 %v69
    %v143 = vunpack.c.h.b16 %v69
    %v144 = vunpack.c.l.b16 %v70
    %v145 = vunpack.c.h.b16 %v70
    %v146 = vunpack.c.l.b16 %v71
    %v147 = vunpack.c.h.b16 %v71
    %v148 = vunpack.c.l.b16 %v72
    %v149 = vunpack.c.h.b16 %v72
    %v150 = vunpack.c.l.b16 %v73
    %v151 = vunpack.c.h.b16 %v73
    %v152 = vunpack.c.l.b16 %v74
    %v153 = vunpack.c.h.b16 %v74
    %v154 = vunpack.c.l.b16 %v75
    %v155 = vunpack.c.h.b16 %v75
    %v156 = vunpack.c.l.b16 %v76
    %v157 = vunpack.c.h.b16 %v76
    %v158 = vunpack.c.l.b16 %v77
    %v159 = vunpack.c.h.b16 %v77
    %v160 = vunpack.c.l.b16 %v78
    %v161 = vunpack.c.h.b16 %v78
    %v162 = vunpack.c.l.b16 %v79
    %v163 = vunpack.c.h.b16 %v79
    %v164 = vunpack.c.l.b16 %v80
    %v165 = vunpack.c.h.b16 %v80
    %v166 = vunpack.c.l.b16 %v81
    %v167 = vunpack.c.h.b16 %v81
    %v168 = vunpack.c.l.b16 %v82
    %v169 = vunpack.c.h.b16 %v82
    %v170 = vunpack.c.l.b16 %v83
    %v171 = vunpack.c.h.b16 %v83
    %v172 = vunpack.c.l.b16 %v84
    %v173 = vunpack.c.h.b16 %v84
    %v174 = vunpack.c.l.b16 %v85
    %v175 = vunpack.c.h.b16 %v85
    %v176 = vunpack.c.l.b16 %v86
    %v177 = vunpack.c.h.b16 %v86
    %v178 = vunpack.c.l.b16 %v87
    %v179 = vunpack.c.h.b16 %v87
    %v180 = vunpack.c.l.b16 %v88
    %v181 = vunpack.c.h.b16 %v88
    %v182 = vunpack.c.l.b16 %v89
    %v183 = vunpack.c.h.b16 %v89
    %v184 = vunpack.c.l.b16 %v90
    %v185 = vunpack.c.h.b16 %v90
    %v186 = vunpack.c.l.b16 %v91
    %v187 = vunpack.c.h.b16 %v91
    %v188 = vpack.c.b16 %v128, %v124
    %v189 = vpack.c.b16 %v129, %v125
    %v190 = vpack.c.b16 %v130, %v126
    %v191 = vpack.c.b16 %v131, %v127
    %v192 = vpack.c.b16 %v136, %v132
    %v193 = vpack.c.b16 %v137, %v133
    %v194 = vpack.c.b16 %v138, %v134
    %v195 = vpack.c.b16 %v139, %v135
    %v196 = vpack.c.b16 %v144, %v140
    %v197 = vpack.c.b16 %v145, %v141
    %v198 = vpack.c.b16 %v146, %v142
    %v199 = vpack.c.b16 %v147, %v143
    %v200 = vpack.c.b16 %v152, %v148
    %v201 = vpack.c.b16 %v153, %v149
    %v202 = vpack.c.b16 %v154, %v150
    %v203 = vpack.c.b16 %v155, %v151
    %v204 = vpack.c.b16 %v160, %v156
    %v205 = vpack.c.b16 %v161, %v157
    %v206 = vpack.c.b16 %v162, %v158
    %v207 = vpack.c.b16 %v163, %v159
    %v208 = vpack.c.b16 %v168, %v164
    %v209 = vpack.c.b16 %v169, %v165
    %v210 = vpack.c.b16 %v170, %v166
    %v211 = vpack.c.b16 %v171, %v167
    %v212 = vpack.c.b16 %v176, %v172
    %v213 = vpack.c.b16 %v177, %v173
    %v214 = vpack.c.b16 %v178, %v174
    %v215 = vpack.c.b16 %v179, %v175
    %v216 = vpack.c.b16 %v184, %v180
    %v217 = vpack.c.b16 %v185, %v181
    %v218 = vpack.c.b16 %v186, %v182
    %v219 = vpack.c.b16 %v187, %v183
    %252 = vmatprep.subr.bf16.mxu0 %v189
    %253 = vmatpush1.bf16.msra.mxu0 %v188
    %254 = vmatprep.subr.bf16.mxu0 %v193
    %255 = vmatpush1.bf16.msra.mxu0 %v192
    %256 = vmatprep.subr.bf16.mxu0 %v197
    %257 = vmatpush1.bf16.msra.mxu0 %v196
    %258 = vmatprep.subr.bf16.mxu0 %v201
    %259 = vmatpush1.bf16.msra.mxu0 %v200
    %260 = vmatprep.subr.bf16.mxu0 %v205
    %261 = vmatpush1.bf16.msra.mxu0 %v204
    %262 = vmatprep.subr.bf16.mxu0 %v209
    %263 = vmatpush1.bf16.msra.mxu0 %v208
    %264 = vmatprep.subr.bf16.mxu0 %v213
    %265 = vmatpush1.bf16.msra.mxu0 %v212
    %266 = vmatprep.subr.bf16.mxu0 %v217
    %267 = vmatpush1.bf16.msra.mxu0 %v216
    %268 = vmatprep.subr.bf16.mxu0 0
    %269 = vmatpush1.bf16.msra.mxu0 0
    %270 = vmatprep.subr.bf16.mxu0 0
    %271 = vmatpush1.bf16.msra.mxu0 0
    %272 = vmatprep.subr.bf16.mxu0 0
    %273 = vmatpush1.bf16.msra.mxu0 0
    %274 = vmatprep.subr.bf16.mxu0 0
    %275 = vmatpush1.bf16.msra.mxu0 0
    %276 = vmatprep.subr.bf16.mxu0 0
    %277 = vmatpush1.bf16.msra.mxu0 0
    %278 = vmatprep.subr.bf16.mxu0 0
    %279 = vmatpush1.bf16.msra.mxu0 0
    %280 = vmatprep.subr.bf16.mxu0 0
    %281 = vmatpush1.bf16.msra.mxu0 0
    %282 = vmatprep.subr.bf16.mxu0 0
    %283 = vmatpush1.bf16.msra.mxu0 0
    %284 = vmatprep.mubr.bf16.mxu0 0
    %285 = vmatmul.mubr.bf16.gmra.mrb[0].mxu0 %v59
    %v286 = vpop.f32.mrb[0].mxu0
    %v287 = vadd.f32 0.0, %v286
    %v288 = vpop.f32.mrb[0].mxu0
    %v289 = vadd.f32 0.0, %v288
    %v290 = vpop.f32.mrb[0].mxu0
    %v291 = vpop.f32.mrb[0].mxu0
    %292 = vdwg.mxu0
    %293 = vmatprep.subr.bf16.mxu0 %v191
    %294 = vmatpush1.bf16.msra.mxu0 %v190
    %295 = vmatprep.subr.bf16.mxu0 %v195
    %296 = vmatpush1.bf16.msra.mxu0 %v194
    %297 = vmatprep.subr.bf16.mxu0 %v199
    %298 = vmatpush1.bf16.msra.mxu0 %v198
    %299 = vmatprep.subr.bf16.mxu0 %v203
    %300 = vmatpush1.bf16.msra.mxu0 %v202
    %301 = vmatprep.subr.bf16.mxu0 %v207
    %302 = vmatpush1.bf16.msra.mxu0 %v206
    %303 = vmatprep.subr.bf16.mxu0 %v211
    %304 = vmatpush1.bf16.msra.mxu0 %v210
    %305 = vmatprep.subr.bf16.mxu0 %v215
    %306 = vmatpush1.bf16.msra.mxu0 %v214
    %307 = vmatprep.subr.bf16.mxu0 %v219
    %308 = vmatpush1.bf16.msra.mxu0 %v218
    %309 = vmatprep.subr.bf16.mxu0 0
    %310 = vmatpush1.bf16.msra.mxu0 0
    %311 = vmatprep.subr.bf16.mxu0 0
    %312 = vmatpush1.bf16.msra.mxu0 0
    %313 = vmatprep.subr.bf16.mxu0 0
    %314 = vmatpush1.bf16.msra.mxu0 0
    %315 = vmatprep.subr.bf16.mxu0 0
    %316 = vmatpush1.bf16.msra.mxu0 0
    %317 = vmatprep.subr.bf16.mxu0 0
    %318 = vmatpush1.bf16.msra.mxu0 0
    %319 = vmatprep.subr.bf16.mxu0 0
    %320 = vmatpush1.bf16.msra.mxu0 0
    %321 = vmatprep.subr.bf16.mxu0 0
    %322 = vmatpush1.bf16.msra.mxu0 0
    %323 = vmatprep.subr.bf16.mxu0 0
    %324 = vmatpush1.bf16.msra.mxu0 0
    %325 = vmatprep.mubr.bf16.mxu0 0
    %326 = vmatmul.mubr.bf16.gmra.mrb[0].mxu0 %v59
    %v327 = vpop.f32.mrb[0].mxu0
    %v328 = vadd.f32 0.0, %v327
    %v329 = vpop.f32.mrb[0].mxu0
    %v330 = vadd.f32 0.0, %v329
    %v331 = vpop.f32.mrb[0].mxu0
    %v332 = vpop.f32.mrb[0].mxu0
    %333 = vdwg.mxu0
    %v334 = vadd.f32 %v55, %v287
    %v335 = vadd.f32 %v56, %v289
    %v336 = vadd.f32 %v57, %v328
    %v337 = vadd.f32 %v58, %v330
    %v338 = vxor.u32 %v334, 2147483648
    %v339 = vmul.f32 %v338, 1.442695
    %v340 = vpow.pop %v339
    %v341 = vadd.f32 %v340, 1.0
    %v342 = vrcp.pop %v341
    %v343 = vmul.f32 1.0, %v342
    %v344 = vxor.u32 %v335, 2147483648
    %v345 = vmul.f32 %v344, 1.442695
    %v346 = vpow.pop %v345
    %v347 = vadd.f32 %v346, 1.0
    %v348 = vrcp.pop %v347
    %v349 = vmul.f32 1.0, %v348
    %v350 = vtanh.pop %v336
    %v351 = vxor.u32 %v337, 2147483648
    %v352 = vmul.f32 %v351, 1.442695
    %v353 = vpow.pop %v352
    %v354 = vadd.f32 %v353, 1.0
    %v355 = vrcp.pop %v354
    %v356 = vmul.f32 1.0, %v355
    %v357 = vmul.f32 %v349, %v52
    %v358 = vmul.f32 %v343, %v350
    %v359 = vadd.f32 %v357, %v358
    %v360 = vtanh.pop %v359
    %v361 = vmul.f32 %v356, %v360
    %362 = vst [vmem:[#allocation9] sm:$0xff] %v361
    %s363 = scalar_lea.vmem [#allocation4], 16
    %v364 = vld [vmem:[%s363] sm:$0xff]
    %v365 = vld [vmem:[%s363 + $0x8] sm:$0xff]
    %v366 = vunpack.c.l.bf16 %v364
    %v367 = vunpack.c.h.bf16 %v364
    %v368 = vunpack.c.l.bf16 %v365
    %v369 = vunpack.c.h.bf16 %v365
    %v370 = vpack.c.bf16 %v361, %v361
    %v371 = vld [vmem:[#allocation7] sm:$0xff]
    %v372 = vld [vmem:[#allocation7 + $0x8] sm:$0xff]
    %v373 = vld [vmem:[#allocation7 + $0x10] sm:$0xff]
    %v374 = vld [vmem:[#allocation7 + $0x18] sm:$0xff]
    %v375 = vld [vmem:[#allocation7 + $0x20] sm:$0xff]
    %v376 = vld [vmem:[#allocation7 + $0x28] sm:$0xff]
    %v377 = vld [vmem:[#allocation7 + $0x30] sm:$0xff]
    %v378 = vld [vmem:[#allocation7 + $0x38] sm:$0xff]
    %v379 = vld [vmem:[#allocation7 + $0x40] sm:$0xff]
    %v380 = vld [vmem:[#allocation7 + $0x48] sm:$0xff]
    %v381 = vld [vmem:[#allocation7 + $0x50] sm:$0xff]
    %v382 = vld [vmem:[#allocation7 + $0x58] sm:$0xff]
    %v383 = vld [vmem:[#allocation7 + $0x60] sm:$0xff]
    %v384 = vld [vmem:[#allocation7 + $0x68] sm:$0xff]
    %v385 = vld [vmem:[#allocation7 + $0x70] sm:$0xff]
    %v386 = vld [vmem:[#allocation7 + $0x78] sm:$0xff]
    %v387 = vld [vmem:[#allocation7 + $0x80] sm:$0xff]
    %v388 = vld [vmem:[#allocation7 + $0x88] sm:$0xff]
    %v389 = vld [vmem:[#allocation7 + $0x90] sm:$0xff]
    %v390 = vld [vmem:[#allocation7 + $0x98] sm:$0xff]
    %v391 = vld [vmem:[#allocation7 + $0xa0] sm:$0xff]
    %v392 = vld [vmem:[#allocation7 + $0xa8] sm:$0xff]
    %v393 = vld [vmem:[#allocation7 + $0xb0] sm:$0xff]
    %v394 = vld [vmem:[#allocation7 + $0xb8] sm:$0xff]
    %v395 = vld [vmem:[#allocation7 + $0xc0] sm:$0xff]
    %v396 = vld [vmem:[#allocation7 + $0xc8] sm:$0xff]
    %v397 = vld [vmem:[#allocation7 + $0xd0] sm:$0xff]
    %v398 = vld [vmem:[#allocation7 + $0xd8] sm:$0xff]
    %v399 = vld [vmem:[#allocation7 + $0xe0] sm:$0xff]
    %v400 = vld [vmem:[#allocation7 + $0xe8] sm:$0xff]
    %v401 = vld [vmem:[#allocation7 + $0xf0] sm:$0xff]
    %v402 = vld [vmem:[#allocation7 + $0xf8] sm:$0xff]
    %v435 = vunpack.c.l.b16 %v371
    %v436 = vunpack.c.h.b16 %v371
    %v437 = vunpack.c.l.b16 %v372
    %v438 = vunpack.c.h.b16 %v372
    %v439 = vunpack.c.l.b16 %v373
    %v440 = vunpack.c.h.b16 %v373
    %v441 = vunpack.c.l.b16 %v374
    %v442 = vunpack.c.h.b16 %v374
    %v443 = vunpack.c.l.b16 %v375
    %v444 = vunpack.c.h.b16 %v375
    %v445 = vunpack.c.l.b16 %v376
    %v446 = vunpack.c.h.b16 %v376
    %v447 = vunpack.c.l.b16 %v377
    %v448 = vunpack.c.h.b16 %v377
    %v449 = vunpack.c.l.b16 %v378
    %v450 = vunpack.c.h.b16 %v378
    %v451 = vunpack.c.l.b16 %v379
    %v452 = vunpack.c.h.b16 %v379
    %v453 = vunpack.c.l.b16 %v380
    %v454 = vunpack.c.h.b16 %v380
    %v455 = vunpack.c.l.b16 %v381
    %v456 = vunpack.c.h.b16 %v381
    %v457 = vunpack.c.l.b16 %v382
    %v458 = vunpack.c.h.b16 %v382
    %v459 = vunpack.c.l.b16 %v383
    %v460 = vunpack.c.h.b16 %v383
    %v461 = vunpack.c.l.b16 %v384
    %v462 = vunpack.c.h.b16 %v384
    %v463 = vunpack.c.l.b16 %v385
    %v464 = vunpack.c.h.b16 %v385
    %v465 = vunpack.c.l.b16 %v386
    %v466 = vunpack.c.h.b16 %v386
    %v467 = vunpack.c.l.b16 %v387
    %v468 = vunpack.c.h.b16 %v387
    %v469 = vunpack.c.l.b16 %v388
    %v470 = vunpack.c.h.b16 %v388
    %v471 = vunpack.c.l.b16 %v389
    %v472 = vunpack.c.h.b16 %v389
    %v473 = vunpack.c.l.b16 %v390
    %v474 = vunpack.c.h.b16 %v390
    %v475 = vunpack.c.l.b16 %v391
    %v476 = vunpack.c.h.b16 %v391
    %v477 = vunpack.c.l.b16 %v392
    %v478 = vunpack.c.h.b16 %v392
    %v479 = vunpack.c.l.b16 %v393
    %v480 = vunpack.c.h.b16 %v393
    %v481 = vunpack.c.l.b16 %v394
    %v482 = vunpack.c.h.b16 %v394
    %v483 = vunpack.c.l.b16 %v395
    %v484 = vunpack.c.h.b16 %v395
    %v485 = vunpack.c.l.b16 %v396
    %v486 = vunpack.c.h.b16 %v396
    %v487 = vunpack.c.l.b16 %v397
    %v488 = vunpack.c.h.b16 %v397
    %v489 = vunpack.c.l.b16 %v398
    %v490 = vunpack.c.h.b16 %v398
    %v491 = vunpack.c.l.b16 %v399
    %v492 = vunpack.c.h.b16 %v399
    %v493 = vunpack.c.l.b16 %v400
    %v494 = vunpack.c.h.b16 %v400
    %v495 = vunpack.c.l.b16 %v401
    %v496 = vunpack.c.h.b16 %v401
    %v497 = vunpack.c.l.b16 %v402
    %v498 = vunpack.c.h.b16 %v402
    %v499 = vpack.c.b16 %v439, %v435
    %v500 = vpack.c.b16 %v440, %v436
    %v501 = vpack.c.b16 %v441, %v437
    %v502 = vpack.c.b16 %v442, %v438
    %v503 = vpack.c.b16 %v447, %v443
    %v504 = vpack.c.b16 %v448, %v444
    %v505 = vpack.c.b16 %v449, %v445
    %v506 = vpack.c.b16 %v450, %v446
    %v507 = vpack.c.b16 %v455, %v451
    %v508 = vpack.c.b16 %v456, %v452
    %v509 = vpack.c.b16 %v457, %v453
    %v510 = vpack.c.b16 %v458, %v454
    %v511 = vpack.c.b16 %v463, %v459
    %v512 = vpack.c.b16 %v464, %v460
    %v513 = vpack.c.b16 %v465, %v461
    %v514 = vpack.c.b16 %v466, %v462
    %v515 = vpack.c.b16 %v471, %v467
    %v516 = vpack.c.b16 %v472, %v468
    %v517 = vpack.c.b16 %v473, %v469
    %v518 = vpack.c.b16 %v474, %v470
    %v519 = vpack.c.b16 %v479, %v475
    %v520 = vpack.c.b16 %v480, %v476
    %v521 = vpack.c.b16 %v481, %v477
    %v522 = vpack.c.b16 %v482, %v478
    %v523 = vpack.c.b16 %v487, %v483
    %v524 = vpack.c.b16 %v488, %v484
    %v525 = vpack.c.b16 %v489, %v485
    %v526 = vpack.c.b16 %v490, %v486
    %v527 = vpack.c.b16 %v495, %v491
    %v528 = vpack.c.b16 %v496, %v492
    %v529 = vpack.c.b16 %v497, %v493
    %v530 = vpack.c.b16 %v498, %v494
    %563 = vmatprep.subr.bf16.mxu0 %v500
    %564 = vmatpush1.bf16.msra.mxu0 %v499
    %565 = vmatprep.subr.bf16.mxu0 %v504
    %566 = vmatpush1.bf16.msra.mxu0 %v503
    %567 = vmatprep.subr.bf16.mxu0 %v508
    %568 = vmatpush1.bf16.msra.mxu0 %v507
    %569 = vmatprep.subr.bf16.mxu0 %v512
    %570 = vmatpush1.bf16.msra.mxu0 %v511
    %571 = vmatprep.subr.bf16.mxu0 %v516
    %572 = vmatpush1.bf16.msra.mxu0 %v515
    %573 = vmatprep.subr.bf16.mxu0 %v520
    %574 = vmatpush1.bf16.msra.mxu0 %v519
    %575 = vmatprep.subr.bf16.mxu0 %v524
    %576 = vmatpush1.bf16.msra.mxu0 %v523
    %577 = vmatprep.subr.bf16.mxu0 %v528
    %578 = vmatpush1.bf16.msra.mxu0 %v527
    %579 = vmatprep.subr.bf16.mxu0 0
    %580 = vmatpush1.bf16.msra.mxu0 0
    %581 = vmatprep.subr.bf16.mxu0 0
    %582 = vmatpush1.bf16.msra.mxu0 0
    %583 = vmatprep.subr.bf16.mxu0 0
    %584 = vmatpush1.bf16.msra.mxu0 0
    %585 = vmatprep.subr.bf16.mxu0 0
    %586 = vmatpush1.bf16.msra.mxu0 0
    %587 = vmatprep.subr.bf16.mxu0 0
    %588 = vmatpush1.bf16.msra.mxu0 0
    %589 = vmatprep.subr.bf16.mxu0 0
    %590 = vmatpush1.bf16.msra.mxu0 0
    %591 = vmatprep.subr.bf16.mxu0 0
    %592 = vmatpush1.bf16.msra.mxu0 0
    %593 = vmatprep.subr.bf16.mxu0 0
    %594 = vmatpush1.bf16.msra.mxu0 0
    %595 = vmatprep.mubr.bf16.mxu0 0
    %596 = vmatmul.mubr.bf16.gmra.mrb[0].mxu0 %v370
    %v597 = vpop.f32.mrb[0].mxu0
    %v598 = vadd.f32 0.0, %v597
    %v599 = vpop.f32.mrb[0].mxu0
    %v600 = vadd.f32 0.0, %v599
    %v601 = vpop.f32.mrb[0].mxu0
    %v602 = vpop.f32.mrb[0].mxu0
    %603 = vdwg.mxu0
    %604 = vmatprep.subr.bf16.mxu0 %v502
    %605 = vmatpush1.bf16.msra.mxu0 %v501
    %606 = vmatprep.subr.bf16.mxu0 %v506
    %607 = vmatpush1.bf16.msra.mxu0 %v505
    %608 = vmatprep.subr.bf16.mxu0 %v510
    %609 = vmatpush1.bf16.msra.mxu0 %v509
    %610 = vmatprep.subr.bf16.mxu0 %v514
    %611 = vmatpush1.bf16.msra.mxu0 %v513
    %612 = vmatprep.subr.bf16.mxu0 %v518
    %613 = vmatpush1.bf16.msra.mxu0 %v517
    %614 = vmatprep.subr.bf16.mxu0 %v522
    %615 = vmatpush1.bf16.msra.mxu0 %v521
    %616 = vmatprep.subr.bf16.mxu0 %v526
    %617 = vmatpush1.bf16.msra.mxu0 %v525
    %618 = vmatprep.subr.bf16.mxu0 %v530
    %619 = vmatpush1.bf16.msra.mxu0 %v529
    %620 = vmatprep.subr.bf16.mxu0 0
    %621 = vmatpush1.bf16.msra.mxu0 0
    %622 = vmatprep.subr.bf16.mxu0 0
    %623 = vmatpush1.bf16.msra.mxu0 0
    %624 = vmatprep.subr.bf16.mxu0 0
    %625 = vmatpush1.bf16.msra.mxu0 0
    %626 = vmatprep.subr.bf16.mxu0 0
    %627 = vmatpush1.bf16.msra.mxu0 0
    %628 = vmatprep.subr.bf16.mxu0 0
    %629 = vmatpush1.bf16.msra.mxu0 0
    %630 = vmatprep.subr.bf16.mxu0 0
    %631 = vmatpush1.bf16.msra.mxu0 0
    %632 = vmatprep.subr.bf16.mxu0 0
    %633 = vmatpush1.bf16.msra.mxu0 0
    %634 = vmatprep.subr.bf16.mxu0 0
    %635 = vmatpush1.bf16.msra.mxu0 0
    %636 = vmatprep.mubr.bf16.mxu0 0
    %637 = vmatmul.mubr.bf16.gmra.mrb[0].mxu0 %v370
    %v638 = vpop.f32.mrb[0].mxu0
    %v639 = vadd.f32 0.0, %v638
    %v640 = vpop.f32.mrb[0].mxu0
    %v641 = vadd.f32 0.0, %v640
    %v642 = vpop.f32.mrb[0].mxu0
    %v643 = vpop.f32.mrb[0].mxu0
    %644 = vdwg.mxu0
    %v645 = vadd.f32 %v366, %v598
    %v646 = vadd.f32 %v367, %v600
    %v647 = vadd.f32 %v368, %v639
    %v648 = vadd.f32 %v369, %v641
    %v649 = vxor.u32 %v645, 2147483648
    %v650 = vmul.f32 %v649, 1.442695
    %v651 = vpow.pop %v650
    %v652 = vadd.f32 %v651, 1.0
    %v653 = vrcp.pop %v652
    %v654 = vmul.f32 1.0, %v653
    %v655 = vxor.u32 %v646, 2147483648
    %v656 = vmul.f32 %v655, 1.442695
    %v657 = vpow.pop %v656
    %v658 = vadd.f32 %v657, 1.0
    %v659 = vrcp.pop %v658
    %v660 = vmul.f32 1.0, %v659
    %v661 = vtanh.pop %v647
    %v662 = vxor.u32 %v648, 2147483648
    %v663 = vmul.f32 %v662, 1.442695
    %v664 = vpow.pop %v663
    %v665 = vadd.f32 %v664, 1.0
    %v666 = vrcp.pop %v665
    %v667 = vmul.f32 1.0, %v666
    %v668 = vmul.f32 %v660, %v359
    %v669 = vmul.f32 %v654, %v661
    %v670 = vadd.f32 %v668, %v669
    %v671 = vtanh.pop %v670
    %v672 = vmul.f32 %v667, %v671
    %s673 = scalar_lea.vmem [#allocation9], 8
    %674 = vst [vmem:[%s673] sm:$0xff] %v672
    %s675 = scalar_lea.vmem [#allocation4], 32
    %v676 = vld [vmem:[%s675] sm:$0xff]
    %v677 = vld [vmem:[%s675 + $0x8] sm:$0xff]
    %v678 = vunpack.c.l.bf16 %v676
    %v679 = vunpack.c.h.bf16 %v676
    %v680 = vunpack.c.l.bf16 %v677
    %v681 = vunpack.c.h.bf16 %v677
    %v682 = vpack.c.bf16 %v672, %v672
    %v683 = vld [vmem:[#allocation7] sm:$0xff]
    %v684 = vld [vmem:[#allocation7 + $0x8] sm:$0xff]
    %v685 = vld [vmem:[#allocation7 + $0x10] sm:$0xff]
    %v686 = vld [vmem:[#allocation7 + $0x18] sm:$0xff]
    %v687 = vld [vmem:[#allocation7 + $0x20] sm:$0xff]
    %v688 = vld [vmem:[#allocation7 + $0x28] sm:$0xff]
    %v689 = vld [vmem:[#allocation7 + $0x30] sm:$0xff]
    %v690 = vld [vmem:[#allocation7 + $0x38] sm:$0xff]
    %v691 = vld [vmem:[#allocation7 + $0x40] sm:$0xff]
    %v692 = vld [vmem:[#allocation7 + $0x48] sm:$0xff]
    %v693 = vld [vmem:[#allocation7 + $0x50] sm:$0xff]
    %v694 = vld [vmem:[#allocation7 + $0x58] sm:$0xff]
    %v695 = vld [vmem:[#allocation7 + $0x60] sm:$0xff]
    %v696 = vld [vmem:[#allocation7 + $0x68] sm:$0xff]
    %v697 = vld [vmem:[#allocation7 + $0x70] sm:$0xff]
    %v698 = vld [vmem:[#allocation7 + $0x78] sm:$0xff]
    %v699 = vld [vmem:[#allocation7 + $0x80] sm:$0xff]
    %v700 = vld [vmem:[#allocation7 + $0x88] sm:$0xff]
    %v701 = vld [vmem:[#allocation7 + $0x90] sm:$0xff]
    %v702 = vld [vmem:[#allocation7 + $0x98] sm:$0xff]
    %v703 = vld [vmem:[#allocation7 + $0xa0] sm:$0xff]
    %v704 = vld [vmem:[#allocation7 + $0xa8] sm:$0xff]
    %v705 = vld [vmem:[#allocation7 + $0xb0] sm:$0xff]
    %v706 = vld [vmem:[#allocation7 + $0xb8] sm:$0xff]
    %v707 = vld [vmem:[#allocation7 + $0xc0] sm:$0xff]
    %v708 = vld [vmem:[#allocation7 + $0xc8] sm:$0xff]
    %v709 = vld [vmem:[#allocation7 + $0xd0] sm:$0xff]
    %v710 = vld [vmem:[#allocation7 + $0xd8] sm:$0xff]
    %v711 = vld [vmem:[#allocation7 + $0xe0] sm:$0xff]
    %v712 = vld [vmem:[#allocation7 + $0xe8] sm:$0xff]
    %v713 = vld [vmem:[#allocation7 + $0xf0] sm:$0xff]
    %v714 = vld [vmem:[#allocation7 + $0xf8] sm:$0xff]
    %v747 = vunpack.c.l.b16 %v683
    %v748 = vunpack.c.h.b16 %v683
    %v749 = vunpack.c.l.b16 %v684
    %v750 = vunpack.c.h.b16 %v684
    %v751 = vunpack.c.l.b16 %v685
    %v752 = vunpack.c.h.b16 %v685
    %v753 = vunpack.c.l.b16 %v686
    %v754 = vunpack.c.h.b16 %v686
    %v755 = vunpack.c.l.b16 %v687
    %v756 = vunpack.c.h.b16 %v687
    %v757 = vunpack.c.l.b16 %v688
    %v758 = vunpack.c.h.b16 %v688
    %v759 = vunpack.c.l.b16 %v689
    %v760 = vunpack.c.h.b16 %v689
    %v761 = vunpack.c.l.b16 %v690
    %v762 = vunpack.c.h.b16 %v690
    %v763 = vunpack.c.l.b16 %v691
    %v764 = vunpack.c.h.b16 %v691
    %v765 = vunpack.c.l.b16 %v692
    %v766 = vunpack.c.h.b16 %v692
    %v767 = vunpack.c.l.b16 %v693
    %v768 = vunpack.c.h.b16 %v693
    %v769 = vunpack.c.l.b16 %v694
    %v770 = vunpack.c.h.b16 %v694
    %v771 = vunpack.c.l.b16 %v695
    %v772 = vunpack.c.h.b16 %v695
    %v773 = vunpack.c.l.b16 %v696
    %v774 = vunpack.c.h.b16 %v696
    %v775 = vunpack.c.l.b16 %v697
    %v776 = vunpack.c.h.b16 %v697
    %v777 = vunpack.c.l.b16 %v698
    %v778 = vunpack.c.h.b16 %v698
    %v779 = vunpack.c.l.b16 %v699
    %v780 = vunpack.c.h.b16 %v699
    %v781 = vunpack.c.l.b16 %v700
    %v782 = vunpack.c.h.b16 %v700
    %v783 = vunpack.c.l.b16 %v701
    %v784 = vunpack.c.h.b16 %v701
    %v785 = vunpack.c.l.b16 %v702
    %v786 = vunpack.c.h.b16 %v702
    %v787 = vunpack.c.l.b16 %v703
    %v788 = vunpack.c.h.b16 %v703
    %v789 = vunpack.c.l.b16 %v704
    %v790 = vunpack.c.h.b16 %v704
    %v791 = vunpack.c.l.b16 %v705
    %v792 = vunpack.c.h.b16 %v705
    %v793 = vunpack.c.l.b16 %v706
    %v794 = vunpack.c.h.b16 %v706
    %v795 = vunpack.c.l.b16 %v707
    %v796 = vunpack.c.h.b16 %v707
    %v797 = vunpack.c.l.b16 %v708
    %v798 = vunpack.c.h.b16 %v708
    %v799 = vunpack.c.l.b16 %v709
    %v800 = vunpack.c.h.b16 %v709
    %v801 = vunpack.c.l.b16 %v710
    %v802 = vunpack.c.h.b16 %v710
    %v803 = vunpack.c.l.b16 %v711
    %v804 = vunpack.c.h.b16 %v711
    %v805 = vunpack.c.l.b16 %v712
    %v806 = vunpack.c.h.b16 %v712
    %v807 = vunpack.c.l.b16 %v713
    %v808 = vunpack.c.h.b16 %v713
    %v809 = vunpack.c.l.b16 %v714
    %v810 = vunpack.c.h.b16 %v714
    %v811 = vpack.c.b16 %v751, %v747
    %v812 = vpack.c.b16 %v752, %v748
    %v813 = vpack.c.b16 %v753, %v749
    %v814 = vpack.c.b16 %v754, %v750
    %v815 = vpack.c.b16 %v759, %v755
    %v816 = vpack.c.b16 %v760, %v756
    %v817 = vpack.c.b16 %v761, %v757
    %v818 = vpack.c.b16 %v762, %v758
    %v819 = vpack.c.b16 %v767, %v763
    %v820 = vpack.c.b16 %v768, %v764
    %v821 = vpack.c.b16 %v769, %v765
    %v822 = vpack.c.b16 %v770, %v766
    %v823 = vpack.c.b16 %v775, %v771
    %v824 = vpack.c.b16 %v776, %v772
    %v825 = vpack.c.b16 %v777, %v773
    %v826 = vpack.c.b16 %v778, %v774
    %v827 = vpack.c.b16 %v783, %v779
    %v828 = vpack.c.b16 %v784, %v780
    %v829 = vpack.c.b16 %v785, %v781
    %v830 = vpack.c.b16 %v786, %v782
    %v831 = vpack.c.b16 %v791, %v787
    %v832 = vpack.c.b16 %v792, %v788
    %v833 = vpack.c.b16 %v793, %v789
    %v834 = vpack.c.b16 %v794, %v790
    %v835 = vpack.c.b16 %v799, %v795
    %v836 = vpack.c.b16 %v800, %v796
    %v837 = vpack.c.b16 %v801, %v797
    %v838 = vpack.c.b16 %v802, %v798
    %v839 = vpack.c.b16 %v807, %v803
    %v840 = vpack.c.b16 %v808, %v804
    %v841 = vpack.c.b16 %v809, %v805
    %v842 = vpack.c.b16 %v810, %v806
    %875 = vmatprep.subr.bf16.mxu0 %v812
    %876 = vmatpush1.bf16.msra.mxu0 %v811
    %877 = vmatprep.subr.bf16.mxu0 %v816
    %878 = vmatpush1.bf16.msra.mxu0 %v815
    %879 = vmatprep.subr.bf16.mxu0 %v820
    %880 = vmatpush1.bf16.msra.mxu0 %v819
    %881 = vmatprep.subr.bf16.mxu0 %v824
    %882 = vmatpush1.bf16.msra.mxu0 %v823
    %883 = vmatprep.subr.bf16.mxu0 %v828
    %884 = vmatpush1.bf16.msra.mxu0 %v827
    %885 = vmatprep.subr.bf16.mxu0 %v832
    %886 = vmatpush1.bf16.msra.mxu0 %v831
    %887 = vmatprep.subr.bf16.mxu0 %v836
    %888 = vmatpush1.bf16.msra.mxu0 %v835
    %889 = vmatprep.subr.bf16.mxu0 %v840
    %890 = vmatpush1.bf16.msra.mxu0 %v839
    %891 = vmatprep.subr.bf16.mxu0 0
    %892 = vmatpush1.bf16.msra.mxu0 0
    %893 = vmatprep.subr.bf16.mxu0 0
    %894 = vmatpush1.bf16.msra.mxu0 0
    %895 = vmatprep.subr.bf16.mxu0 0
    %896 = vmatpush1.bf16.msra.mxu0 0
    %897 = vmatprep.subr.bf16.mxu0 0
    %898 = vmatpush1.bf16.msra.mxu0 0
    %899 = vmatprep.subr.bf16.mxu0 0
    %900 = vmatpush1.bf16.msra.mxu0 0
    %901 = vmatprep.subr.bf16.mxu0 0
    %902 = vmatpush1.bf16.msra.mxu0 0
    %903 = vmatprep.subr.bf16.mxu0 0
    %904 = vmatpush1.bf16.msra.mxu0 0
    %905 = vmatprep.subr.bf16.mxu0 0
    %906 = vmatpush1.bf16.msra.mxu0 0
    %907 = vmatprep.mubr.bf16.mxu0 0
    %908 = vmatmul.mubr.bf16.gmra.mrb[0].mxu0 %v682
    %v909 = vpop.f32.mrb[0].mxu0
    %v910 = vadd.f32 0.0, %v909
    %v911 = vpop.f32.mrb[0].mxu0
    %v912 = vadd.f32 0.0, %v911
    %v913 = vpop.f32.mrb[0].mxu0
    %v914 = vpop.f32.mrb[0].mxu0
    %915 = vdwg.mxu0
    %916 = vmatprep.subr.bf16.mxu0 %v814
    %917 = vmatpush1.bf16.msra.mxu0 %v813
    %918 = vmatprep.subr.bf16.mxu0 %v818
    %919 = vmatpush1.bf16.msra.mxu0 %v817
    %920 = vmatprep.subr.bf16.mxu0 %v822
    %921 = vmatpush1.bf16.msra.mxu0 %v821
    %922 = vmatprep.subr.bf16.mxu0 %v826
    %923 = vmatpush1.bf16.msra.mxu0 %v825
    %924 = vmatprep.subr.bf16.mxu0 %v830
    %925 = vmatpush1.bf16.msra.mxu0 %v829
    %926 = vmatprep.subr.bf16.mxu0 %v834
    %927 = vmatpush1.bf16.msra.mxu0 %v833
    %928 = vmatprep.subr.bf16.mxu0 %v838
    %929 = vmatpush1.bf16.msra.mxu0 %v837
    %930 = vmatprep.subr.bf16.mxu0 %v842
    %931 = vmatpush1.bf16.msra.mxu0 %v841
    %932 = vmatprep.subr.bf16.mxu0 0
    %933 = vmatpush1.bf16.msra.mxu0 0
    %934 = vmatprep.subr.bf16.mxu0 0
    %935 = vmatpush1.bf16.msra.mxu0 0
    %936 = vmatprep.subr.bf16.mxu0 0
    %937 = vmatpush1.bf16.msra.mxu0 0
    %938 = vmatprep.subr.bf16.mxu0 0
    %939 = vmatpush1.bf16.msra.mxu0 0
    %940 = vmatprep.subr.bf16.mxu0 0
    %941 = vmatpush1.bf16.msra.mxu0 0
    %942 = vmatprep.subr.bf16.mxu0 0
    %943 = vmatpush1.bf16.msra.mxu0 0
    %944 = vmatprep.subr.bf16.mxu0 0
    %945 = vmatpush1.bf16.msra.mxu0 0
    %946 = vmatprep.subr.bf16.mxu0 0
    %947 = vmatpush1.bf16.msra.mxu0 0
    %948 = vmatprep.mubr.bf16.mxu0 0
    %949 = vmatmul.mubr.bf16.gmra.mrb[0].mxu0 %v682
    %v950 = vpop.f32.mrb[0].mxu0
    %v951 = vadd.f32 0.0, %v950
    %v952 = vpop.f32.mrb[0].mxu0
    %v953 = vadd.f32 0.0, %v952
    %v954 = vpop.f32.mrb[0].mxu0
    %v955 = vpop.f32.mrb[0].mxu0
    %956 = vdwg.mxu0
    %v957 = vadd.f32 %v678, %v910
    %v958 = vadd.f32 %v679, %v912
    %v959 = vadd.f32 %v680, %v951
    %v960 = vadd.f32 %v681, %v953
    %v961 = vxor.u32 %v957, 2147483648
    %v962 = vmul.f32 %v961, 1.442695
    %v963 = vpow.pop %v962
    %v964 = vadd.f32 %v963, 1.0
    %v965 = vrcp.pop %v964
    %v966 = vmul.f32 1.0, %v965
    %v967 = vxor.u32 %v958, 2147483648
    %v968 = vmul.f32 %v967, 1.442695
    %v969 = vpow.pop %v968
    %v970 = vadd.f32 %v969, 1.0
    %v971 = vrcp.pop %v970
    %v972 = vmul.f32 1.0, %v971
    %v973 = vtanh.pop %v959
    %v974 = vxor.u32 %v960, 2147483648
    %v975 = vmul.f32 %v974, 1.442695
    %v976 = vpow.pop %v975
    %v977 = vadd.f32 %v976, 1.0
    %v978 = vrcp.pop %v977
    %v979 = vmul.f32 1.0, %v978
    %v980 = vmul.f32 %v972, %v670
    %v981 = vmul.f32 %v966, %v973
    %v982 = vadd.f32 %v980, %v981
    %v983 = vtanh.pop %v982
    %v984 = vmul.f32 %v979, %v983
    %s985 = scalar_lea.vmem [#allocation9], 16
    %986 = vst [vmem:[%s985] sm:$0xff] %v984
    %s987 = scalar_lea.vmem [#allocation4], 48
    %v988 = vld [vmem:[%s987] sm:$0xff]
    %v989 = vld [vmem:[%s987 + $0x8] sm:$0xff]
    %v990 = vunpack.c.l.bf16 %v988
    %v991 = vunpack.c.h.bf16 %v988
    %v992 = vunpack.c.l.bf16 %v989
    %v993 = vunpack.c.h.bf16 %v989
    %v994 = vpack.c.bf16 %v984, %v984
    %v995 = vld [vmem:[#allocation7] sm:$0xff]
    %v996 = vld [vmem:[#allocation7 + $0x8] sm:$0xff]
    %v997 = vld [vmem:[#allocation7 + $0x10] sm:$0xff]
    %v998 = vld [vmem:[#allocation7 + $0x18] sm:$0xff]
    %v999 = vld [vmem:[#allocation7 + $0x20] sm:$0xff]
    %v1000 = vld [vmem:[#allocation7 + $0x28] sm:$0xff]
    %v1001 = vld [vmem:[#allocation7 + $0x30] sm:$0xff]
    %v1002 = vld [vmem:[#allocation7 + $0x38] sm:$0xff]
    %v1003 = vld [vmem:[#allocation7 + $0x40] sm:$0xff]
    %v1004 = vld [vmem:[#allocation7 + $0x48] sm:$0xff]
    %v1005 = vld [vmem:[#allocation7 + $0x50] sm:$0xff]
    %v1006 = vld [vmem:[#allocation7 + $0x58] sm:$0xff]
    %v1007 = vld [vmem:[#allocation7 + $0x60] sm:$0xff]
    %v1008 = vld [vmem:[#allocation7 + $0x68] sm:$0xff]
    %v1009 = vld [vmem:[#allocation7 + $0x70] sm:$0xff]
    %v1010 = vld [vmem:[#allocation7 + $0x78] sm:$0xff]
    %v1011 = vld [vmem:[#allocation7 + $0x80] sm:$0xff]
    %v1012 = vld [vmem:[#allocation7 + $0x88] sm:$0xff]
    %v1013 = vld [vmem:[#allocation7 + $0x90] sm:$0xff]
    %v1014 = vld [vmem:[#allocation7 + $0x98] sm:$0xff]
    %v1015 = vld [vmem:[#allocation7 + $0xa0] sm:$0xff]
    %v1016 = vld [vmem:[#allocation7 + $0xa8] sm:$0xff]
    %v1017 = vld [vmem:[#allocation7 + $0xb0] sm:$0xff]
    %v1018 = vld [vmem:[#allocation7 + $0xb8] sm:$0xff]
    %v1019 = vld [vmem:[#allocation7 + $0xc0] sm:$0xff]
    %v1020 = vld [vmem:[#allocation7 + $0xc8] sm:$0xff]
    %v1021 = vld [vmem:[#allocation7 + $0xd0] sm:$0xff]
    %v1022 = vld [vmem:[#allocation7 + $0xd8] sm:$0xff]
    %v1023 = vld [vmem:[#allocation7 + $0xe0] sm:$0xff]
    %v1024 = vld [vmem:[#allocation7 + $0xe8] sm:$0xff]
    %v1025 = vld [vmem:[#allocation7 + $0xf0] sm:$0xff]
    %v1026 = vld [vmem:[#allocation7 + $0xf8] sm:$0xff]
    %v1059 = vunpack.c.l.b16 %v995
    %v1060 = vunpack.c.h.b16 %v995
    %v1061 = vunpack.c.l.b16 %v996
    %v1062 = vunpack.c.h.b16 %v996
    %v1063 = vunpack.c.l.b16 %v997
    %v1064 = vunpack.c.h.b16 %v997
    %v1065 = vunpack.c.l.b16 %v998
    %v1066 = vunpack.c.h.b16 %v998
    %v1067 = vunpack.c.l.b16 %v999
    %v1068 = vunpack.c.h.b16 %v999
    %v1069 = vunpack.c.l.b16 %v1000
    %v1070 = vunpack.c.h.b16 %v1000
    %v1071 = vunpack.c.l.b16 %v1001
    %v1072 = vunpack.c.h.b16 %v1001
    %v1073 = vunpack.c.l.b16 %v1002
    %v1074 = vunpack.c.h.b16 %v1002
    %v1075 = vunpack.c.l.b16 %v1003
    %v1076 = vunpack.c.h.b16 %v1003
    %v1077 = vunpack.c.l.b16 %v1004
    %v1078 = vunpack.c.h.b16 %v1004
    %v1079 = vunpack.c.l.b16 %v1005
    %v1080 = vunpack.c.h.b16 %v1005
    %v1081 = vunpack.c.l.b16 %v1006
    %v1082 = vunpack.c.h.b16 %v1006
    %v1083 = vunpack.c.l.b16 %v1007
    %v1084 = vunpack.c.h.b16 %v1007
    %v1085 = vunpack.c.l.b16 %v1008
    %v1086 = vunpack.c.h.b16 %v1008
    %v1087 = vunpack.c.l.b16 %v1009
    %v1088 = vunpack.c.h.b16 %v1009
    %v1089 = vunpack.c.l.b16 %v1010
    %v1090 = vunpack.c.h.b16 %v1010
    %v1091 = vunpack.c.l.b16 %v1011
    %v1092 = vunpack.c.h.b16 %v1011
    %v1093 = vunpack.c.l.b16 %v1012
    %v1094 = vunpack.c.h.b16 %v1012
    %v1095 = vunpack.c.l.b16 %v1013
    %v1096 = vunpack.c.h.b16 %v1013
    %v1097 = vunpack.c.l.b16 %v1014
    %v1098 = vunpack.c.h.b16 %v1014
    %v1099 = vunpack.c.l.b16 %v1015
    %v1100 = vunpack.c.h.b16 %v1015
    %v1101 = vunpack.c.l.b16 %v1016
    %v1102 = vunpack.c.h.b16 %v1016
    %v1103 = vunpack.c.l.b16 %v1017
    %v1104 = vunpack.c.h.b16 %v1017
    %v1105 = vunpack.c.l.b16 %v1018
    %v1106 = vunpack.c.h.b16 %v1018
    %v1107 = vunpack.c.l.b16 %v1019
    %v1108 = vunpack.c.h.b16 %v1019
    %v1109 = vunpack.c.l.b16 %v1020
    %v1110 = vunpack.c.h.b16 %v1020
    %v1111 = vunpack.c.l.b16 %v1021
    %v1112 = vunpack.c.h.b16 %v1021
    %v1113 = vunpack.c.l.b16 %v1022
    %v1114 = vunpack.c.h.b16 %v1022
    %v1115 = vunpack.c.l.b16 %v1023
    %v1116 = vunpack.c.h.b16 %v1023
    %v1117 = vunpack.c.l.b16 %v1024
    %v1118 = vunpack.c.h.b16 %v1024
    %v1119 = vunpack.c.l.b16 %v1025
    %v1120 = vunpack.c.h.b16 %v1025
    %v1121 = vunpack.c.l.b16 %v1026
    %v1122 = vunpack.c.h.b16 %v1026
    %v1123 = vpack.c.b16 %v1063, %v1059
    %v1124 = vpack.c.b16 %v1064, %v1060
    %v1125 = vpack.c.b16 %v1065, %v1061
    %v1126 = vpack.c.b16 %v1066, %v1062
    %v1127 = vpack.c.b16 %v1071, %v1067
    %v1128 = vpack.c.b16 %v1072, %v1068
    %v1129 = vpack.c.b16 %v1073, %v1069
    %v1130 = vpack.c.b16 %v1074, %v1070
    %v1131 = vpack.c.b16 %v1079, %v1075
    %v1132 = vpack.c.b16 %v1080, %v1076
    %v1133 = vpack.c.b16 %v1081, %v1077
    %v1134 = vpack.c.b16 %v1082, %v1078
    %v1135 = vpack.c.b16 %v1087, %v1083
    %v1136 = vpack.c.b16 %v1088, %v1084
    %v1137 = vpack.c.b16 %v1089, %v1085
    %v1138 = vpack.c.b16 %v1090, %v1086
    %v1139 = vpack.c.b16 %v1095, %v1091
    %v1140 = vpack.c.b16 %v1096, %v1092
    %v1141 = vpack.c.b16 %v1097, %v1093
    %v1142 = vpack.c.b16 %v1098, %v1094
    %v1143 = vpack.c.b16 %v1103, %v1099
    %v1144 = vpack.c.b16 %v1104, %v1100
    %v1145 = vpack.c.b16 %v1105, %v1101
    %v1146 = vpack.c.b16 %v1106, %v1102
    %v1147 = vpack.c.b16 %v1111, %v1107
    %v1148 = vpack.c.b16 %v1112, %v1108
    %v1149 = vpack.c.b16 %v1113, %v1109
    %v1150 = vpack.c.b16 %v1114, %v1110
    %v1151 = vpack.c.b16 %v1119, %v1115
    %v1152 = vpack.c.b16 %v1120, %v1116
    %v1153 = vpack.c.b16 %v1121, %v1117
    %v1154 = vpack.c.b16 %v1122, %v1118
    %1187 = vmatprep.subr.bf16.mxu0 %v1124
    %1188 = vmatpush1.bf16.msra.mxu0 %v1123
    %1189 = vmatprep.subr.bf16.mxu0 %v1128
    %1190 = vmatpush1.bf16.msra.mxu0 %v1127
    %1191 = vmatprep.subr.bf16.mxu0 %v1132
    %1192 = vmatpush1.bf16.msra.mxu0 %v1131
    %1193 = vmatprep.subr.bf16.mxu0 %v1136
    %1194 = vmatpush1.bf16.msra.mxu0 %v1135
    %1195 = vmatprep.subr.bf16.mxu0 %v1140
    %1196 = vmatpush1.bf16.msra.mxu0 %v1139
    %1197 = vmatprep.subr.bf16.mxu0 %v1144
    %1198 = vmatpush1.bf16.msra.mxu0 %v1143
    %1199 = vmatprep.subr.bf16.mxu0 %v1148
    %1200 = vmatpush1.bf16.msra.mxu0 %v1147
    %1201 = vmatprep.subr.bf16.mxu0 %v1152
    %1202 = vmatpush1.bf16.msra.mxu0 %v1151
    %1203 = vmatprep.subr.bf16.mxu0 0
    %1204 = vmatpush1.bf16.msra.mxu0 0
    %1205 = vmatprep.subr.bf16.mxu0 0
    %1206 = vmatpush1.bf16.msra.mxu0 0
    %1207 = vmatprep.subr.bf16.mxu0 0
    %1208 = vmatpush1.bf16.msra.mxu0 0
    %1209 = vmatprep.subr.bf16.mxu0 0
    %1210 = vmatpush1.bf16.msra.mxu0 0
    %1211 = vmatprep.subr.bf16.mxu0 0
    %1212 = vmatpush1.bf16.msra.mxu0 0
    %1213 = vmatprep.subr.bf16.mxu0 0
    %1214 = vmatpush1.bf16.msra.mxu0 0
    %1215 = vmatprep.subr.bf16.mxu0 0
    %1216 = vmatpush1.bf16.msra.mxu0 0
    %1217 = vmatprep.subr.bf16.mxu0 0
    %1218 = vmatpush1.bf16.msra.mxu0 0
    %1219 = vmatprep.mubr.bf16.mxu0 0
    %1220 = vmatmul.mubr.bf16.gmra.mrb[0].mxu0 %v994
    %v1221 = vpop.f32.mrb[0].mxu0
    %v1222 = vadd.f32 0.0, %v1221
    %v1223 = vpop.f32.mrb[0].mxu0
    %v1224 = vadd.f32 0.0, %v1223
    %v1225 = vpop.f32.mrb[0].mxu0
    %v1226 = vpop.f32.mrb[0].mxu0
    %1227 = vdwg.mxu0
    %1228 = vmatprep.subr.bf16.mxu0 %v1126
    %1229 = vmatpush1.bf16.msra.mxu0 %v1125
    %1230 = vmatprep.subr.bf16.mxu0 %v1130
    %1231 = vmatpush1.bf16.msra.mxu0 %v1129
    %1232 = vmatprep.subr.bf16.mxu0 %v1134
    %1233 = vmatpush1.bf16.msra.mxu0 %v1133
    %1234 = vmatprep.subr.bf16.mxu0 %v1138
    %1235 = vmatpush1.bf16.msra.mxu0 %v1137
    %1236 = vmatprep.subr.bf16.mxu0 %v1142
    %1237 = vmatpush1.bf16.msra.mxu0 %v1141
    %1238 = vmatprep.subr.bf16.mxu0 %v1146
    %1239 = vmatpush1.bf16.msra.mxu0 %v1145
    %1240 = vmatprep.subr.bf16.mxu0 %v1150
    %1241 = vmatpush1.bf16.msra.mxu0 %v1149
    %1242 = vmatprep.subr.bf16.mxu0 %v1154
    %1243 = vmatpush1.bf16.msra.mxu0 %v1153
    %1244 = vmatprep.subr.bf16.mxu0 0
    %1245 = vmatpush1.bf16.msra.mxu0 0
    %1246 = vmatprep.subr.bf16.mxu0 0
    %1247 = vmatpush1.bf16.msra.mxu0 0
    %1248 = vmatprep.subr.bf16.mxu0 0
    %1249 = vmatpush1.bf16.msra.mxu0 0
    %1250 = vmatprep.subr.bf16.mxu0 0
    %1251 = vmatpush1.bf16.msra.mxu0 0
    %1252 = vmatprep.subr.bf16.mxu0 0
    %1253 = vmatpush1.bf16.msra.mxu0 0
    %1254 = vmatprep.subr.bf16.mxu0 0
    %1255 = vmatpush1.bf16.msra.mxu0 0
    %1256 = vmatprep.subr.bf16.mxu0 0
    %1257 = vmatpush1.bf16.msra.mxu0 0
    %1258 = vmatprep.subr.bf16.mxu0 0
    %1259 = vmatpush1.bf16.msra.mxu0 0
    %1260 = vmatprep.mubr.bf16.mxu0 0
    %1261 = vmatmul.mubr.bf16.gmra.mrb[0].mxu0 %v994
    %v1262 = vpop.f32.mrb[0].mxu0
    %v1263 = vadd.f32 0.0, %v1262
    %v1264 = vpop.f32.mrb[0].mxu0
    %v1265 = vadd.f32 0.0, %v1264
    %v1266 = vpop.f32.mrb[0].mxu0
    %v1267 = vpop.f32.mrb[0].mxu0
    %1268 = vdwg.mxu0
    %v1269 = vadd.f32 %v990, %v1222
    %v1270 = vadd.f32 %v991, %v1224
    %v1271 = vadd.f32 %v992, %v1263
    %v1272 = vadd.f32 %v993, %v1265
    %v1273 = vxor.u32 %v1269, 2147483648
    %v1274 = vmul.f32 %v1273, 1.442695
    %v1275 = vpow.pop %v1274
    %v1276 = vadd.f32 %v1275, 1.0
    %v1277 = vrcp.pop %v1276
    %v1278 = vmul.f32 1.0, %v1277
    %v1279 = vxor.u32 %v1270, 2147483648
    %v1280 = vmul.f32 %v1279, 1.442695
    %v1281 = vpow.pop %v1280
    %v1282 = vadd.f32 %v1281, 1.0
    %v1283 = vrcp.pop %v1282
    %v1284 = vmul.f32 1.0, %v1283
    %v1285 = vtanh.pop %v1271
    %v1286 = vxor.u32 %v1272, 2147483648
    %v1287 = vmul.f32 %v1286, 1.442695
    %v1288 = vpow.pop %v1287
    %v1289 = vadd.f32 %v1288, 1.0
    %v1290 = vrcp.pop %v1289
    %v1291 = vmul.f32 1.0, %v1290
    %v1292 = vmul.f32 %v1284, %v982
    %v1293 = vmul.f32 %v1278, %v1285
    %v1294 = vadd.f32 %v1292, %v1293
    %v1295 = vtanh.pop %v1294
    %v1296 = vmul.f32 %v1291, %v1295
    %s1297 = scalar_lea.vmem [#allocation9], 24
    %1298 = vst [vmem:[%s1297] sm:$0xff] %v1296
    %s1299 = scalar_lea.vmem [#allocation4], 64
    %v1300 = vld [vmem:[%s1299] sm:$0xff]
    %v1301 = vld [vmem:[%s1299 + $0x8] sm:$0xff]
    %v1302 = vunpack.c.l.bf16 %v1300
    %v1303 = vunpack.c.h.bf16 %v1300
    %v1304 = vunpack.c.l.bf16 %v1301
    %v1305 = vunpack.c.h.bf16 %v1301
    %v1306 = vpack.c.bf16 %v1296, %v1296
    %v1307 = vld [vmem:[#allocation7] sm:$0xff]
    %v1308 = vld [vmem:[#allocation7 + $0x8] sm:$0xff]
    %v1309 = vld [vmem:[#allocation7 + $0x10] sm:$0xff]
    %v1310 = vld [vmem:[#allocation7 + $0x18] sm:$0xff]
    %v1311 = vld [vmem:[#allocation7 + $0x20] sm:$0xff]
    %v1312 = vld [vmem:[#allocation7 + $0x28] sm:$0xff]
    %v1313 = vld [vmem:[#allocation7 + $0x30] sm:$0xff]
    %v1314 = vld [vmem:[#allocation7 + $0x38] sm:$0xff]
    %v1315 = vld [vmem:[#allocation7 + $0x40] sm:$0xff]
    %v1316 = vld [vmem:[#allocation7 + $0x48] sm:$0xff]
    %v1317 = vld [vmem:[#allocation7 + $0x50] sm:$0xff]
    %v1318 = vld [vmem:[#allocation7 + $0x58] sm:$0xff]
    %v1319 = vld [vmem:[#allocation7 + $0x60] sm:$0xff]
    %v1320 = vld [vmem:[#allocation7 + $0x68] sm:$0xff]
    %v1321 = vld [vmem:[#allocation7 + $0x70] sm:$0xff]
    %v1322 = vld [vmem:[#allocation7 + $0x78] sm:$0xff]
    %v1323 = vld [vmem:[#allocation7 + $0x80] sm:$0xff]
    %v1324 = vld [vmem:[#allocation7 + $0x88] sm:$0xff]
    %v1325 = vld [vmem:[#allocation7 + $0x90] sm:$0xff]
    %v1326 = vld [vmem:[#allocation7 + $0x98] sm:$0xff]
    %v1327 = vld [vmem:[#allocation7 + $0xa0] sm:$0xff]
    %v1328 = vld [vmem:[#allocation7 + $0xa8] sm:$0xff]
    %v1329 = vld [vmem:[#allocation7 + $0xb0] sm:$0xff]
    %v1330 = vld [vmem:[#allocation7 + $0xb8] sm:$0xff]
    %v1331 = vld [vmem:[#allocation7 + $0xc0] sm:$0xff]
    %v1332 = vld [vmem:[#allocation7 + $0xc8] sm:$0xff]
    %v1333 = vld [vmem:[#allocation7 + $0xd0] sm:$0xff]
    %v1334 = vld [vmem:[#allocation7 + $0xd8] sm:$0xff]
    %v1335 = vld [vmem:[#allocation7 + $0xe0] sm:$0xff]
    %v1336 = vld [vmem:[#allocation7 + $0xe8] sm:$0xff]
    %v1337 = vld [vmem:[#allocation7 + $0xf0] sm:$0xff]
    %v1338 = vld [vmem:[#allocation7 + $0xf8] sm:$0xff]
    %v1371 = vunpack.c.l.b16 %v1307
    %v1372 = vunpack.c.h.b16 %v1307
    %v1373 = vunpack.c.l.b16 %v1308
    %v1374 = vunpack.c.h.b16 %v1308
    %v1375 = vunpack.c.l.b16 %v1309
    %v1376 = vunpack.c.h.b16 %v1309
    %v1377 = vunpack.c.l.b16 %v1310
    %v1378 = vunpack.c.h.b16 %v1310
    %v1379 = vunpack.c.l.b16 %v1311
    %v1380 = vunpack.c.h.b16 %v1311
    %v1381 = vunpack.c.l.b16 %v1312
    %v1382 = vunpack.c.h.b16 %v1312
    %v1383 = vunpack.c.l.b16 %v1313
    %v1384 = vunpack.c.h.b16 %v1313
    %v1385 = vunpack.c.l.b16 %v1314
    %v1386 = vunpack.c.h.b16 %v1314
    %v1387 = vunpack.c.l.b16 %v1315
    %v1388 = vunpack.c.h.b16 %v1315
    %v1389 = vunpack.c.l.b16 %v1316
    %v1390 = vunpack.c.h.b16 %v1316
    %v1391 = vunpack.c.l.b16 %v1317
    %v1392 = vunpack.c.h.b16 %v1317
    %v1393 = vunpack.c.l.b16 %v1318
    %v1394 = vunpack.c.h.b16 %v1318
    %v1395 = vunpack.c.l.b16 %v1319
    %v1396 = vunpack.c.h.b16 %v1319
    %v1397 = vunpack.c.l.b16 %v1320
    %v1398 = vunpack.c.h.b16 %v1320
    %v1399 = vunpack.c.l.b16 %v1321
    %v1400 = vunpack.c.h.b16 %v1321
    %v1401 = vunpack.c.l.b16 %v1322
    %v1402 = vunpack.c.h.b16 %v1322
    %v1403 = vunpack.c.l.b16 %v1323
    %v1404 = vunpack.c.h.b16 %v1323
    %v1405 = vunpack.c.l.b16 %v1324
    %v1406 = vunpack.c.h.b16 %v1324
    %v1407 = vunpack.c.l.b16 %v1325
    %v1408 = vunpack.c.h.b16 %v1325
    %v1409 = vunpack.c.l.b16 %v1326
    %v1410 = vunpack.c.h.b16 %v1326
    %v1411 = vunpack.c.l.b16 %v1327
    %v1412 = vunpack.c.h.b16 %v1327
    %v1413 = vunpack.c.l.b16 %v1328
    %v1414 = vunpack.c.h.b16 %v1328
    %v1415 = vunpack.c.l.b16 %v1329
    %v1416 = vunpack.c.h.b16 %v1329
    %v1417 = vunpack.c.l.b16 %v1330
    %v1418 = vunpack.c.h.b16 %v1330
    %v1419 = vunpack.c.l.b16 %v1331
    %v1420 = vunpack.c.h.b16 %v1331
    %v1421 = vunpack.c.l.b16 %v1332
    %v1422 = vunpack.c.h.b16 %v1332
    %v1423 = vunpack.c.l.b16 %v1333
    %v1424 = vunpack.c.h.b16 %v1333
    %v1425 = vunpack.c.l.b16 %v1334
    %v1426 = vunpack.c.h.b16 %v1334
    %v1427 = vunpack.c.l.b16 %v1335
    %v1428 = vunpack.c.h.b16 %v1335
    %v1429 = vunpack.c.l.b16 %v1336
    %v1430 = vunpack.c.h.b16 %v1336
    %v1431 = vunpack.c.l.b16 %v1337
    %v1432 = vunpack.c.h.b16 %v1337
    %v1433 = vunpack.c.l.b16 %v1338
    %v1434 = vunpack.c.h.b16 %v1338
    %v1435 = vpack.c.b16 %v1375, %v1371
    %v1436 = vpack.c.b16 %v1376, %v1372
    %v1437 = vpack.c.b16 %v1377, %v1373
    %v1438 = vpack.c.b16 %v1378, %v1374
    %v1439 = vpack.c.b16 %v1383, %v1379
    %v1440 = vpack.c.b16 %v1384, %v1380
    %v1441 = vpack.c.b16 %v1385, %v1381
    %v1442 = vpack.c.b16 %v1386, %v1382
    %v1443 = vpack.c.b16 %v1391, %v1387
    %v1444 = vpack.c.b16 %v1392, %v1388
    %v1445 = vpack.c.b16 %v1393, %v1389
    %v1446 = vpack.c.b16 %v1394, %v1390
    %v1447 = vpack.c.b16 %v1399, %v1395
    %v1448 = vpack.c.b16 %v1400, %v1396
    %v1449 = vpack.c.b16 %v1401, %v1397
    %v1450 = vpack.c.b16 %v1402, %v1398
    %v1451 = vpack.c.b16 %v1407, %v1403
    %v1452 = vpack.c.b16 %v1408, %v1404
    %v1453 = vpack.c.b16 %v1409, %v1405
    %v1454 = vpack.c.b16 %v1410, %v1406
    %v1455 = vpack.c.b16 %v1415, %v1411
    %v1456 = vpack.c.b16 %v1416, %v1412
    %v1457 = vpack.c.b16 %v1417, %v1413
    %v1458 = vpack.c.b16 %v1418, %v1414
    %v1459 = vpack.c.b16 %v1423, %v1419
    %v1460 = vpack.c.b16 %v1424, %v1420
    %v1461 = vpack.c.b16 %v1425, %v1421
    %v1462 = vpack.c.b16 %v1426, %v1422
    %v1463 = vpack.c.b16 %v1431, %v1427
    %v1464 = vpack.c.b16 %v1432, %v1428
    %v1465 = vpack.c.b16 %v1433, %v1429
    %v1466 = vpack.c.b16 %v1434, %v1430
    %1499 = vmatprep.subr.bf16.mxu0 %v1436
    %1500 = vmatpush1.bf16.msra.mxu0 %v1435
    %1501 = vmatprep.subr.bf16.mxu0 %v1440
    %1502 = vmatpush1.bf16.msra.mxu0 %v1439
    %1503 = vmatprep.subr.bf16.mxu0 %v1444
    %1504 = vmatpush1.bf16.msra.mxu0 %v1443
    %1505 = vmatprep.subr.bf16.mxu0 %v1448
    %1506 = vmatpush1.bf16.msra.mxu0 %v1447
    %1507 = vmatprep.subr.bf16.mxu0 %v1452
    %1508 = vmatpush1.bf16.msra.mxu0 %v1451
    %1509 = vmatprep.subr.bf16.mxu0 %v1456
    %1510 = vmatpush1.bf16.msra.mxu0 %v1455
    %1511 = vmatprep.subr.bf16.mxu0 %v1460
    %1512 = vmatpush1.bf16.msra.mxu0 %v1459
    %1513 = vmatprep.subr.bf16.mxu0 %v1464
    %1514 = vmatpush1.bf16.msra.mxu0 %v1463
    %1515 = vmatprep.subr.bf16.mxu0 0
    %1516 = vmatpush1.bf16.msra.mxu0 0
    %1517 = vmatprep.subr.bf16.mxu0 0
    %1518 = vmatpush1.bf16.msra.mxu0 0
    %1519 = vmatprep.subr.bf16.mxu0 0
    %1520 = vmatpush1.bf16.msra.mxu0 0
    %1521 = vmatprep.subr.bf16.mxu0 0
    %1522 = vmatpush1.bf16.msra.mxu0 0
    %1523 = vmatprep.subr.bf16.mxu0 0
    %1524 = vmatpush1.bf16.msra.mxu0 0
    %1525 = vmatprep.subr.bf16.mxu0 0
    %1526 = vmatpush1.bf16.msra.mxu0 0
    %1527 = vmatprep.subr.bf16.mxu0 0
    %1528 = vmatpush1.bf16.msra.mxu0 0
    %1529 = vmatprep.subr.bf16.mxu0 0
    %1530 = vmatpush1.bf16.msra.mxu0 0
    %1531 = vmatprep.mubr.bf16.mxu0 0
    %1532 = vmatmul.mubr.bf16.gmra.mrb[0].mxu0 %v1306
    %v1533 = vpop.f32.mrb[0].mxu0
    %v1534 = vadd.f32 0.0, %v1533
    %v1535 = vpop.f32.mrb[0].mxu0
    %v1536 = vadd.f32 0.0, %v1535
    %v1537 = vpop.f32.mrb[0].mxu0
    %v1538 = vpop.f32.mrb[0].mxu0
    %1539 = vdwg.mxu0
    %1540 = vmatprep.subr.bf16.mxu0 %v1438
    %1541 = vmatpush1.bf16.msra.mxu0 %v1437
    %1542 = vmatprep.subr.bf16.mxu0 %v1442
    %1543 = vmatpush1.bf16.msra.mxu0 %v1441
    %1544 = vmatprep.subr.bf16.mxu0 %v1446
    %1545 = vmatpush1.bf16.msra.mxu0 %v1445
    %1546 = vmatprep.subr.bf16.mxu0 %v1450
    %1547 = vmatpush1.bf16.msra.mxu0 %v1449
    %1548 = vmatprep.subr.bf16.mxu0 %v1454
    %1549 = vmatpush1.bf16.msra.mxu0 %v1453
    %1550 = vmatprep.subr.bf16.mxu0 %v1458
    %1551 = vmatpush1.bf16.msra.mxu0 %v1457
    %1552 = vmatprep.subr.bf16.mxu0 %v1462
    %1553 = vmatpush1.bf16.msra.mxu0 %v1461
    %1554 = vmatprep.subr.bf16.mxu0 %v1466
    %1555 = vmatpush1.bf16.msra.mxu0 %v1465
    %1556 = vmatprep.subr.bf16.mxu0 0
    %1557 = vmatpush1.bf16.msra.mxu0 0
    %1558 = vmatprep.subr.bf16.mxu0 0
    %1559 = vmatpush1.bf16.msra.mxu0 0
    %1560 = vmatprep.subr.bf16.mxu0 0
    %1561 = vmatpush1.bf16.msra.mxu0 0
    %1562 = vmatprep.subr.bf16.mxu0 0
    %1563 = vmatpush1.bf16.msra.mxu0 0
    %1564 = vmatprep.subr.bf16.mxu0 0
    %1565 = vmatpush1.bf16.msra.mxu0 0
    %1566 = vmatprep.subr.bf16.mxu0 0
    %1567 = vmatpush1.bf16.msra.mxu0 0
    %1568 = vmatprep.subr.bf16.mxu0 0
    %1569 = vmatpush1.bf16.msra.mxu0 0
    %1570 = vmatprep.subr.bf16.mxu0 0
    %1571 = vmatpush1.bf16.msra.mxu0 0
    %1572 = vmatprep.mubr.bf16.mxu0 0
    %1573 = vmatmul.mubr.bf16.gmra.mrb[0].mxu0 %v1306
    %v1574 = vpop.f32.mrb[0].mxu0
    %v1575 = vadd.f32 0.0, %v1574
    %v1576 = vpop.f32.mrb[0].mxu0
    %v1577 = vadd.f32 0.0, %v1576
    %v1578 = vpop.f32.mrb[0].mxu0
    %v1579 = vpop.f32.mrb[0].mxu0
    %1580 = vdwg.mxu0
    %v1581 = vadd.f32 %v1302, %v1534
    %v1582 = vadd.f32 %v1303, %v1536
    %v1583 = vadd.f32 %v1304, %v1575
    %v1584 = vadd.f32 %v1305, %v1577
    %v1585 = vxor.u32 %v1581, 2147483648
    %v1586 = vmul.f32 %v1585, 1.442695
    %v1587 = vpow.pop %v1586
    %v1588 = vadd.f32 %v1587, 1.0
    %v1589 = vrcp.pop %v1588
    %v1590 = vmul.f32 1.0, %v1589
    %v1591 = vxor.u32 %v1582, 2147483648
    %v1592 = vmul.f32 %v1591, 1.442695
    %v1593 = vpow.pop %v1592
    %v1594 = vadd.f32 %v1593, 1.0
    %v1595 = vrcp.pop %v1594
    %v1596 = vmul.f32 1.0, %v1595
    %v1597 = vtanh.pop %v1583
    %v1598 = vxor.u32 %v1584, 2147483648
    %v1599 = vmul.f32 %v1598, 1.442695
    %v1600 = vpow.pop %v1599
    %v1601 = vadd.f32 %v1600, 1.0
    %v1602 = vrcp.pop %v1601
    %v1603 = vmul.f32 1.0, %v1602
    %v1604 = vmul.f32 %v1596, %v1294
    %v1605 = vmul.f32 %v1590, %v1597
    %v1606 = vadd.f32 %v1604, %v1605
    %v1607 = vtanh.pop %v1606
    %v1608 = vmul.f32 %v1603, %v1607
    %s1609 = scalar_lea.vmem [#allocation9], 32
    %1610 = vst [vmem:[%s1609] sm:$0xff] %v1608
    %s1611 = scalar_lea.vmem [#allocation4], 80
    %v1612 = vld [vmem:[%s1611] sm:$0xff]
    %v1613 = vld [vmem:[%s1611 + $0x8] sm:$0xff]
    %v1614 = vunpack.c.l.bf16 %v1612
    %v1615 = vunpack.c.h.bf16 %v1612
    %v1616 = vunpack.c.l.bf16 %v1613
    %v1617 = vunpack.c.h.bf16 %v1613
    %v1618 = vpack.c.bf16 %v1608, %v1608
    %v1619 = vld [vmem:[#allocation7] sm:$0xff]
    %v1620 = vld [vmem:[#allocation7 + $0x8] sm:$0xff]
    %v1621 = vld [vmem:[#allocation7 + $0x10] sm:$0xff]
    %v1622 = vld [vmem:[#allocation7 + $0x18] sm:$0xff]
    %v1623 = vld [vmem:[#allocation7 + $0x20] sm:$0xff]
    %v1624 = vld [vmem:[#allocation7 + $0x28] sm:$0xff]
    %v1625 = vld [vmem:[#allocation7 + $0x30] sm:$0xff]
    %v1626 = vld [vmem:[#allocation7 + $0x38] sm:$0xff]
    %v1627 = vld [vmem:[#allocation7 + $0x40] sm:$0xff]
    %v1628 = vld [vmem:[#allocation7 + $0x48] sm:$0xff]
    %v1629 = vld [vmem:[#allocation7 + $0x50] sm:$0xff]
    %v1630 = vld [vmem:[#allocation7 + $0x58] sm:$0xff]
    %v1631 = vld [vmem:[#allocation7 + $0x60] sm:$0xff]
    %v1632 = vld [vmem:[#allocation7 + $0x68] sm:$0xff]
    %v1633 = vld [vmem:[#allocation7 + $0x70] sm:$0xff]
    %v1634 = vld [vmem:[#allocation7 + $0x78] sm:$0xff]
    %v1635 = vld [vmem:[#allocation7 + $0x80] sm:$0xff]
    %v1636 = vld [vmem:[#allocation7 + $0x88] sm:$0xff]
    %v1637 = vld [vmem:[#allocation7 + $0x90] sm:$0xff]
    %v1638 = vld [vmem:[#allocation7 + $0x98] sm:$0xff]
    %v1639 = vld [vmem:[#allocation7 + $0xa0] sm:$0xff]
    %v1640 = vld [vmem:[#allocation7 + $0xa8] sm:$0xff]
    %v1641 = vld [vmem:[#allocation7 + $0xb0] sm:$0xff]
    %v1642 = vld [vmem:[#allocation7 + $0xb8] sm:$0xff]
    %v1643 = vld [vmem:[#allocation7 + $0xc0] sm:$0xff]
    %v1644 = vld [vmem:[#allocation7 + $0xc8] sm:$0xff]
    %v1645 = vld [vmem:[#allocation7 + $0xd0] sm:$0xff]
    %v1646 = vld [vmem:[#allocation7 + $0xd8] sm:$0xff]
    %v1647 = vld [vmem:[#allocation7 + $0xe0] sm:$0xff]
    %v1648 = vld [vmem:[#allocation7 + $0xe8] sm:$0xff]
    %v1649 = vld [vmem:[#allocation7 + $0xf0] sm:$0xff]
    %v1650 = vld [vmem:[#allocation7 + $0xf8] sm:$0xff]
    %v1683 = vunpack.c.l.b16 %v1619
    %v1684 = vunpack.c.h.b16 %v1619
    %v1685 = vunpack.c.l.b16 %v1620
    %v1686 = vunpack.c.h.b16 %v1620
    %v1687 = vunpack.c.l.b16 %v1621
    %v1688 = vunpack.c.h.b16 %v1621
    %v1689 = vunpack.c.l.b16 %v1622
    %v1690 = vunpack.c.h.b16 %v1622
    %v1691 = vunpack.c.l.b16 %v1623
    %v1692 = vunpack.c.h.b16 %v1623
    %v1693 = vunpack.c.l.b16 %v1624
    %v1694 = vunpack.c.h.b16 %v1624
    %v1695 = vunpack.c.l.b16 %v1625
    %v1696 = vunpack.c.h.b16 %v1625
    %v1697 = vunpack.c.l.b16 %v1626
    %v1698 = vunpack.c.h.b16 %v1626
    %v1699 = vunpack.c.l.b16 %v1627
    %v1700 = vunpack.c.h.b16 %v1627
    %v1701 = vunpack.c.l.b16 %v1628
    %v1702 = vunpack.c.h.b16 %v1628
    %v1703 = vunpack.c.l.b16 %v1629
    %v1704 = vunpack.c.h.b16 %v1629
    %v1705 = vunpack.c.l.b16 %v1630
    %v1706 = vunpack.c.h.b16 %v1630
    %v1707 = vunpack.c.l.b16 %v1631
    %v1708 = vunpack.c.h.b16 %v1631
    %v1709 = vunpack.c.l.b16 %v1632
    %v1710 = vunpack.c.h.b16 %v1632
    %v1711 = vunpack.c.l.b16 %v1633
    %v1712 = vunpack.c.h.b16 %v1633
    %v1713 = vunpack.c.l.b16 %v1634
    %v1714 = vunpack.c.h.b16 %v1634
    %v1715 = vunpack.c.l.b16 %v1635
    %v1716 = vunpack.c.h.b16 %v1635
    %v1717 = vunpack.c.l.b16 %v1636
    %v1718 = vunpack.c.h.b16 %v1636
    %v1719 = vunpack.c.l.b16 %v1637
    %v1720 = vunpack.c.h.b16 %v1637
    %v1721 = vunpack.c.l.b16 %v1638
    %v1722 = vunpack.c.h.b16 %v1638
    %v1723 = vunpack.c.l.b16 %v1639
    %v1724 = vunpack.c.h.b16 %v1639
    %v1725 = vunpack.c.l.b16 %v1640
    %v1726 = vunpack.c.h.b16 %v1640
    %v1727 = vunpack.c.l.b16 %v1641
    %v1728 = vunpack.c.h.b16 %v1641
    %v1729 = vunpack.c.l.b16 %v1642
    %v1730 = vunpack.c.h.b16 %v1642
    %v1731 = vunpack.c.l.b16 %v1643
    %v1732 = vunpack.c.h.b16 %v1643
    %v1733 = vunpack.c.l.b16 %v1644
    %v1734 = vunpack.c.h.b16 %v1644
    %v1735 = vunpack.c.l.b16 %v1645
    %v1736 = vunpack.c.h.b16 %v1645
    %v1737 = vunpack.c.l.b16 %v1646
    %v1738 = vunpack.c.h.b16 %v1646
    %v1739 = vunpack.c.l.b16 %v1647
    %v1740 = vunpack.c.h.b16 %v1647
    %v1741 = vunpack.c.l.b16 %v1648
    %v1742 = vunpack.c.h.b16 %v1648
    %v1743 = vunpack.c.l.b16 %v1649
    %v1744 = vunpack.c.h.b16 %v1649
    %v1745 = vunpack.c.l.b16 %v1650
    %v1746 = vunpack.c.h.b16 %v1650
    %v1747 = vpack.c.b16 %v1687, %v1683
    %v1748 = vpack.c.b16 %v1688, %v1684
    %v1749 = vpack.c.b16 %v1689, %v1685
    %v1750 = vpack.c.b16 %v1690, %v1686
    %v1751 = vpack.c.b16 %v1695, %v1691
    %v1752 = vpack.c.b16 %v1696, %v1692
    %v1753 = vpack.c.b16 %v1697, %v1693
    %v1754 = vpack.c.b16 %v1698, %v1694
    %v1755 = vpack.c.b16 %v1703, %v1699
    %v1756 = vpack.c.b16 %v1704, %v1700
    %v1757 = vpack.c.b16 %v1705, %v1701
    %v1758 = vpack.c.b16 %v1706, %v1702
    %v1759 = vpack.c.b16 %v1711, %v1707
    %v1760 = vpack.c.b16 %v1712, %v1708
    %v1761 = vpack.c.b16 %v1713, %v1709
    %v1762 = vpack.c.b16 %v1714, %v1710
    %v1763 = vpack.c.b16 %v1719, %v1715
    %v1764 = vpack.c.b16 %v1720, %v1716
    %v1765 = vpack.c.b16 %v1721, %v1717
    %v1766 = vpack.c.b16 %v1722, %v1718
    %v1767 = vpack.c.b16 %v1727, %v1723
    %v1768 = vpack.c.b16 %v1728, %v1724
    %v1769 = vpack.c.b16 %v1729, %v1725
    %v1770 = vpack.c.b16 %v1730, %v1726
    %v1771 = vpack.c.b16 %v1735, %v1731
    %v1772 = vpack.c.b16 %v1736, %v1732
    %v1773 = vpack.c.b16 %v1737, %v1733
    %v1774 = vpack.c.b16 %v1738, %v1734
    %v1775 = vpack.c.b16 %v1743, %v1739
    %v1776 = vpack.c.b16 %v1744, %v1740
    %v1777 = vpack.c.b16 %v1745, %v1741
    %v1778 = vpack.c.b16 %v1746, %v1742
    %1811 = vmatprep.subr.bf16.mxu0 %v1748
    %1812 = vmatpush1.bf16.msra.mxu0 %v1747
    %1813 = vmatprep.subr.bf16.mxu0 %v1752
    %1814 = vmatpush1.bf16.msra.mxu0 %v1751
    %1815 = vmatprep.subr.bf16.mxu0 %v1756
    %1816 = vmatpush1.bf16.msra.mxu0 %v1755
    %1817 = vmatprep.subr.bf16.mxu0 %v1760
    %1818 = vmatpush1.bf16.msra.mxu0 %v1759
    %1819 = vmatprep.subr.bf16.mxu0 %v1764
    %1820 = vmatpush1.bf16.msra.mxu0 %v1763
    %1821 = vmatprep.subr.bf16.mxu0 %v1768
    %1822 = vmatpush1.bf16.msra.mxu0 %v1767
    %1823 = vmatprep.subr.bf16.mxu0 %v1772
    %1824 = vmatpush1.bf16.msra.mxu0 %v1771
    %1825 = vmatprep.subr.bf16.mxu0 %v1776
    %1826 = vmatpush1.bf16.msra.mxu0 %v1775
    %1827 = vmatprep.subr.bf16.mxu0 0
    %1828 = vmatpush1.bf16.msra.mxu0 0
    %1829 = vmatprep.subr.bf16.mxu0 0
    %1830 = vmatpush1.bf16.msra.mxu0 0
    %1831 = vmatprep.subr.bf16.mxu0 0
    %1832 = vmatpush1.bf16.msra.mxu0 0
    %1833 = vmatprep.subr.bf16.mxu0 0
    %1834 = vmatpush1.bf16.msra.mxu0 0
    %1835 = vmatprep.subr.bf16.mxu0 0
    %1836 = vmatpush1.bf16.msra.mxu0 0
    %1837 = vmatprep.subr.bf16.mxu0 0
    %1838 = vmatpush1.bf16.msra.mxu0 0
    %1839 = vmatprep.subr.bf16.mxu0 0
    %1840 = vmatpush1.bf16.msra.mxu0 0
    %1841 = vmatprep.subr.bf16.mxu0 0
    %1842 = vmatpush1.bf16.msra.mxu0 0
    %1843 = vmatprep.mubr.bf16.mxu0 0
    %1844 = vmatmul.mubr.bf16.gmra.mrb[0].mxu0 %v1618
    %v1845 = vpop.f32.mrb[0].mxu0
    %v1846 = vadd.f32 0.0, %v1845
    %v1847 = vpop.f32.mrb[0].mxu0
    %v1848 = vadd.f32 0.0, %v1847
    %v1849 = vpop.f32.mrb[0].mxu0
    %v1850 = vpop.f32.mrb[0].mxu0
    %1851 = vdwg.mxu0
    %1852 = vmatprep.subr.bf16.mxu0 %v1750
    %1853 = vmatpush1.bf16.msra.mxu0 %v1749
    %1854 = vmatprep.subr.bf16.mxu0 %v1754
    %1855 = vmatpush1.bf16.msra.mxu0 %v1753
    %1856 = vmatprep.subr.bf16.mxu0 %v1758
    %1857 = vmatpush1.bf16.msra.mxu0 %v1757
    %1858 = vmatprep.subr.bf16.mxu0 %v1762
    %1859 = vmatpush1.bf16.msra.mxu0 %v1761
    %1860 = vmatprep.subr.bf16.mxu0 %v1766
    %1861 = vmatpush1.bf16.msra.mxu0 %v1765
    %1862 = vmatprep.subr.bf16.mxu0 %v1770
    %1863 = vmatpush1.bf16.msra.mxu0 %v1769
    %1864 = vmatprep.subr.bf16.mxu0 %v1774
    %1865 = vmatpush1.bf16.msra.mxu0 %v1773
    %1866 = vmatprep.subr.bf16.mxu0 %v1778
    %1867 = vmatpush1.bf16.msra.mxu0 %v1777
    %1868 = vmatprep.subr.bf16.mxu0 0
    %1869 = vmatpush1.bf16.msra.mxu0 0
    %1870 = vmatprep.subr.bf16.mxu0 0
    %1871 = vmatpush1.bf16.msra.mxu0 0
    %1872 = vmatprep.subr.bf16.mxu0 0
    %1873 = vmatpush1.bf16.msra.mxu0 0
    %1874 = vmatprep.subr.bf16.mxu0 0
    %1875 = vmatpush1.bf16.msra.mxu0 0
    %1876 = vmatprep.subr.bf16.mxu0 0
    %1877 = vmatpush1.bf16.msra.mxu0 0
    %1878 = vmatprep.subr.bf16.mxu0 0
    %1879 = vmatpush1.bf16.msra.mxu0 0
    %1880 = vmatprep.subr.bf16.mxu0 0
    %1881 = vmatpush1.bf16.msra.mxu0 0
    %1882 = vmatprep.subr.bf16.mxu0 0
    %1883 = vmatpush1.bf16.msra.mxu0 0
    %1884 = vmatprep.mubr.bf16.mxu0 0
    %1885 = vmatmul.mubr.bf16.gmra.mrb[0].mxu0 %v1618
    %v1886 = vpop.f32.mrb[0].mxu0
    %v1887 = vadd.f32 0.0, %v1886
    %v1888 = vpop.f32.mrb[0].mxu0
    %v1889 = vadd.f32 0.0, %v1888
    %v1890 = vpop.f32.mrb[0].mxu0
    %v1891 = vpop.f32.mrb[0].mxu0
    %1892 = vdwg.mxu0
    %v1893 = vadd.f32 %v1614, %v1846
    %v1894 = vadd.f32 %v1615, %v1848
    %v1895 = vadd.f32 %v1616, %v1887
    %v1896 = vadd.f32 %v1617, %v1889
    %v1897 = vxor.u32 %v1893, 2147483648
    %v1898 = vmul.f32 %v1897, 1.442695
    %v1899 = vpow.pop %v1898
    %v1900 = vadd.f32 %v1899, 1.0
    %v1901 = vrcp.pop %v1900
    %v1902 = vmul.f32 1.0, %v1901
    %v1903 = vxor.u32 %v1894, 2147483648
    %v1904 = vmul.f32 %v1903, 1.442695
    %v1905 = vpow.pop %v1904
    %v1906 = vadd.f32 %v1905, 1.0
    %v1907 = vrcp.pop %v1906
    %v1908 = vmul.f32 1.0, %v1907
    %v1909 = vtanh.pop %v1895
    %v1910 = vxor.u32 %v1896, 2147483648
    %v1911 = vmul.f32 %v1910, 1.442695
    %v1912 = vpow.pop %v1911
    %v1913 = vadd.f32 %v1912, 1.0
    %v1914 = vrcp.pop %v1913
    %v1915 = vmul.f32 1.0, %v1914
    %v1916 = vmul.f32 %v1908, %v1606
    %v1917 = vmul.f32 %v1902, %v1909
    %v1918 = vadd.f32 %v1916, %v1917
    %v1919 = vtanh.pop %v1918
    %v1920 = vmul.f32 %v1915, %v1919
    %s1921 = scalar_lea.vmem [#allocation9], 40
    %1922 = vst [vmem:[%s1921] sm:$0xff] %v1920
    %s1923 = scalar_lea.vmem [#allocation4], 96
    %v1924 = vld [vmem:[%s1923] sm:$0xff]
    %v1925 = vld [vmem:[%s1923 + $0x8] sm:$0xff]
    %v1926 = vunpack.c.l.bf16 %v1924
    %v1927 = vunpack.c.h.bf16 %v1924
    %v1928 = vunpack.c.l.bf16 %v1925
    %v1929 = vunpack.c.h.bf16 %v1925
    %v1930 = vpack.c.bf16 %v1920, %v1920
    %v1931 = vld [vmem:[#allocation7] sm:$0xff]
    %v1932 = vld [vmem:[#allocation7 + $0x8] sm:$0xff]
    %v1933 = vld [vmem:[#allocation7 + $0x10] sm:$0xff]
    %v1934 = vld [vmem:[#allocation7 + $0x18] sm:$0xff]
    %v1935 = vld [vmem:[#allocation7 + $0x20] sm:$0xff]
    %v1936 = vld [vmem:[#allocation7 + $0x28] sm:$0xff]
    %v1937 = vld [vmem:[#allocation7 + $0x30] sm:$0xff]
    %v1938 = vld [vmem:[#allocation7 + $0x38] sm:$0xff]
    %v1939 = vld [vmem:[#allocation7 + $0x40] sm:$0xff]
    %v1940 = vld [vmem:[#allocation7 + $0x48] sm:$0xff]
    %v1941 = vld [vmem:[#allocation7 + $0x50] sm:$0xff]
    %v1942 = vld [vmem:[#allocation7 + $0x58] sm:$0xff]
    %v1943 = vld [vmem:[#allocation7 + $0x60] sm:$0xff]
    %v1944 = vld [vmem:[#allocation7 + $0x68] sm:$0xff]
    %v1945 = vld [vmem:[#allocation7 + $0x70] sm:$0xff]
    %v1946 = vld [vmem:[#allocation7 + $0x78] sm:$0xff]
    %v1947 = vld [vmem:[#allocation7 + $0x80] sm:$0xff]
    %v1948 = vld [vmem:[#allocation7 + $0x88] sm:$0xff]
    %v1949 = vld [vmem:[#allocation7 + $0x90] sm:$0xff]
    %v1950 = vld [vmem:[#allocation7 + $0x98] sm:$0xff]
    %v1951 = vld [vmem:[#allocation7 + $0xa0] sm:$0xff]
    %v1952 = vld [vmem:[#allocation7 + $0xa8] sm:$0xff]
    %v1953 = vld [vmem:[#allocation7 + $0xb0] sm:$0xff]
    %v1954 = vld [vmem:[#allocation7 + $0xb8] sm:$0xff]
    %v1955 = vld [vmem:[#allocation7 + $0xc0] sm:$0xff]
    %v1956 = vld [vmem:[#allocation7 + $0xc8] sm:$0xff]
    %v1957 = vld [vmem:[#allocation7 + $0xd0] sm:$0xff]
    %v1958 = vld [vmem:[#allocation7 + $0xd8] sm:$0xff]
    %v1959 = vld [vmem:[#allocation7 + $0xe0] sm:$0xff]
    %v1960 = vld [vmem:[#allocation7 + $0xe8] sm:$0xff]
    %v1961 = vld [vmem:[#allocation7 + $0xf0] sm:$0xff]
    %v1962 = vld [vmem:[#allocation7 + $0xf8] sm:$0xff]
    %v1995 = vunpack.c.l.b16 %v1931
    %v1996 = vunpack.c.h.b16 %v1931
    %v1997 = vunpack.c.l.b16 %v1932
    %v1998 = vunpack.c.h.b16 %v1932
    %v1999 = vunpack.c.l.b16 %v1933
    %v2000 = vunpack.c.h.b16 %v1933
    %v2001 = vunpack.c.l.b16 %v1934
    %v2002 = vunpack.c.h.b16 %v1934
    %v2003 = vunpack.c.l.b16 %v1935
    %v2004 = vunpack.c.h.b16 %v1935
    %v2005 = vunpack.c.l.b16 %v1936
    %v2006 = vunpack.c.h.b16 %v1936
    %v2007 = vunpack.c.l.b16 %v1937
    %v2008 = vunpack.c.h.b16 %v1937
    %v2009 = vunpack.c.l.b16 %v1938
    %v2010 = vunpack.c.h.b16 %v1938
    %v2011 = vunpack.c.l.b16 %v1939
    %v2012 = vunpack.c.h.b16 %v1939
    %v2013 = vunpack.c.l.b16 %v1940
    %v2014 = vunpack.c.h.b16 %v1940
    %v2015 = vunpack.c.l.b16 %v1941
    %v2016 = vunpack.c.h.b16 %v1941
    %v2017 = vunpack.c.l.b16 %v1942
    %v2018 = vunpack.c.h.b16 %v1942
    %v2019 = vunpack.c.l.b16 %v1943
    %v2020 = vunpack.c.h.b16 %v1943
    %v2021 = vunpack.c.l.b16 %v1944
    %v2022 = vunpack.c.h.b16 %v1944
    %v2023 = vunpack.c.l.b16 %v1945
    %v2024 = vunpack.c.h.b16 %v1945
    %v2025 = vunpack.c.l.b16 %v1946
    %v2026 = vunpack.c.h.b16 %v1946
    %v2027 = vunpack.c.l.b16 %v1947
    %v2028 = vunpack.c.h.b16 %v1947
    %v2029 = vunpack.c.l.b16 %v1948
    %v2030 = vunpack.c.h.b16 %v1948
    %v2031 = vunpack.c.l.b16 %v1949
    %v2032 = vunpack.c.h.b16 %v1949
    %v2033 = vunpack.c.l.b16 %v1950
    %v2034 = vunpack.c.h.b16 %v1950
    %v2035 = vunpack.c.l.b16 %v1951
    %v2036 = vunpack.c.h.b16 %v1951
    %v2037 = vunpack.c.l.b16 %v1952
    %v2038 = vunpack.c.h.b16 %v1952
    %v2039 = vunpack.c.l.b16 %v1953
    %v2040 = vunpack.c.h.b16 %v1953
    %v2041 = vunpack.c.l.b16 %v1954
    %v2042 = vunpack.c.h.b16 %v1954
    %v2043 = vunpack.c.l.b16 %v1955
    %v2044 = vunpack.c.h.b16 %v1955
    %v2045 = vunpack.c.l.b16 %v1956
    %v2046 = vunpack.c.h.b16 %v1956
    %v2047 = vunpack.c.l.b16 %v1957
    %v2048 = vunpack.c.h.b16 %v1957
    %v2049 = vunpack.c.l.b16 %v1958
    %v2050 = vunpack.c.h.b16 %v1958
    %v2051 = vunpack.c.l.b16 %v1959
    %v2052 = vunpack.c.h.b16 %v1959
    %v2053 = vunpack.c.l.b16 %v1960
    %v2054 = vunpack.c.h.b16 %v1960
    %v2055 = vunpack.c.l.b16 %v1961
    %v2056 = vunpack.c.h.b16 %v1961
    %v2057 = vunpack.c.l.b16 %v1962
    %v2058 = vunpack.c.h.b16 %v1962
    %v2059 = vpack.c.b16 %v1999, %v1995
    %v2060 = vpack.c.b16 %v2000, %v1996
    %v2061 = vpack.c.b16 %v2001, %v1997
    %v2062 = vpack.c.b16 %v2002, %v1998
    %v2063 = vpack.c.b16 %v2007, %v2003
    %v2064 = vpack.c.b16 %v2008, %v2004
    %v2065 = vpack.c.b16 %v2009, %v2005
    %v2066 = vpack.c.b16 %v2010, %v2006
    %v2067 = vpack.c.b16 %v2015, %v2011
    %v2068 = vpack.c.b16 %v2016, %v2012
    %v2069 = vpack.c.b16 %v2017, %v2013
    %v2070 = vpack.c.b16 %v2018, %v2014
    %v2071 = vpack.c.b16 %v2023, %v2019
    %v2072 = vpack.c.b16 %v2024, %v2020
    %v2073 = vpack.c.b16 %v2025, %v2021
    %v2074 = vpack.c.b16 %v2026, %v2022
    %v2075 = vpack.c.b16 %v2031, %v2027
    %v2076 = vpack.c.b16 %v2032, %v2028
    %v2077 = vpack.c.b16 %v2033, %v2029
    %v2078 = vpack.c.b16 %v2034, %v2030
    %v2079 = vpack.c.b16 %v2039, %v2035
    %v2080 = vpack.c.b16 %v2040, %v2036
    %v2081 = vpack.c.b16 %v2041, %v2037
    %v2082 = vpack.c.b16 %v2042, %v2038
    %v2083 = vpack.c.b16 %v2047, %v2043
    %v2084 = vpack.c.b16 %v2048, %v2044
    %v2085 = vpack.c.b16 %v2049, %v2045
    %v2086 = vpack.c.b16 %v2050, %v2046
    %v2087 = vpack.c.b16 %v2055, %v2051
    %v2088 = vpack.c.b16 %v2056, %v2052
    %v2089 = vpack.c.b16 %v2057, %v2053
    %v2090 = vpack.c.b16 %v2058, %v2054
    %2123 = vmatprep.subr.bf16.mxu0 %v2060
    %2124 = vmatpush1.bf16.msra.mxu0 %v2059
    %2125 = vmatprep.subr.bf16.mxu0 %v2064
    %2126 = vmatpush1.bf16.msra.mxu0 %v2063
    %2127 = vmatprep.subr.bf16.mxu0 %v2068
    %2128 = vmatpush1.bf16.msra.mxu0 %v2067
    %2129 = vmatprep.subr.bf16.mxu0 %v2072
    %2130 = vmatpush1.bf16.msra.mxu0 %v2071
    %2131 = vmatprep.subr.bf16.mxu0 %v2076
    %2132 = vmatpush1.bf16.msra.mxu0 %v2075
    %2133 = vmatprep.subr.bf16.mxu0 %v2080
    %2134 = vmatpush1.bf16.msra.mxu0 %v2079
    %2135 = vmatprep.subr.bf16.mxu0 %v2084
    %2136 = vmatpush1.bf16.msra.mxu0 %v2083
    %2137 = vmatprep.subr.bf16.mxu0 %v2088
    %2138 = vmatpush1.bf16.msra.mxu0 %v2087
    %2139 = vmatprep.subr.bf16.mxu0 0
    %2140 = vmatpush1.bf16.msra.mxu0 0
    %2141 = vmatprep.subr.bf16.mxu0 0
    %2142 = vmatpush1.bf16.msra.mxu0 0
    %2143 = vmatprep.subr.bf16.mxu0 0
    %2144 = vmatpush1.bf16.msra.mxu0 0
    %2145 = vmatprep.subr.bf16.mxu0 0
    %2146 = vmatpush1.bf16.msra.mxu0 0
    %2147 = vmatprep.subr.bf16.mxu0 0
    %2148 = vmatpush1.bf16.msra.mxu0 0
    %2149 = vmatprep.subr.bf16.mxu0 0
    %2150 = vmatpush1.bf16.msra.mxu0 0
    %2151 = vmatprep.subr.bf16.mxu0 0
    %2152 = vmatpush1.bf16.msra.mxu0 0
    %2153 = vmatprep.subr.bf16.mxu0 0
    %2154 = vmatpush1.bf16.msra.mxu0 0
    %2155 = vmatprep.mubr.bf16.mxu0 0
    %2156 = vmatmul.mubr.bf16.gmra.mrb[0].mxu0 %v1930
    %v2157 = vpop.f32.mrb[0].mxu0
    %v2158 = vadd.f32 0.0, %v2157
    %v2159 = vpop.f32.mrb[0].mxu0
    %v2160 = vadd.f32 0.0, %v2159
    %v2161 = vpop.f32.mrb[0].mxu0
    %v2162 = vpop.f32.mrb[0].mxu0
    %2163 = vdwg.mxu0
    %2164 = vmatprep.subr.bf16.mxu0 %v2062
    %2165 = vmatpush1.bf16.msra.mxu0 %v2061
    %2166 = vmatprep.subr.bf16.mxu0 %v2066
    %2167 = vmatpush1.bf16.msra.mxu0 %v2065
    %2168 = vmatprep.subr.bf16.mxu0 %v2070
    %2169 = vmatpush1.bf16.msra.mxu0 %v2069
    %2170 = vmatprep.subr.bf16.mxu0 %v2074
    %2171 = vmatpush1.bf16.msra.mxu0 %v2073
    %2172 = vmatprep.subr.bf16.mxu0 %v2078
    %2173 = vmatpush1.bf16.msra.mxu0 %v2077
    %2174 = vmatprep.subr.bf16.mxu0 %v2082
    %2175 = vmatpush1.bf16.msra.mxu0 %v2081
    %2176 = vmatprep.subr.bf16.mxu0 %v2086
    %2177 = vmatpush1.bf16.msra.mxu0 %v2085
    %2178 = vmatprep.subr.bf16.mxu0 %v2090
    %2179 = vmatpush1.bf16.msra.mxu0 %v2089
    %2180 = vmatprep.subr.bf16.mxu0 0
    %2181 = vmatpush1.bf16.msra.mxu0 0
    %2182 = vmatprep.subr.bf16.mxu0 0
    %2183 = vmatpush1.bf16.msra.mxu0 0
    %2184 = vmatprep.subr.bf16.mxu0 0
    %2185 = vmatpush1.bf16.msra.mxu0 0
    %2186 = vmatprep.subr.bf16.mxu0 0
    %2187 = vmatpush1.bf16.msra.mxu0 0
    %2188 = vmatprep.subr.bf16.mxu0 0
    %2189 = vmatpush1.bf16.msra.mxu0 0
    %2190 = vmatprep.subr.bf16.mxu0 0
    %2191 = vmatpush1.bf16.msra.mxu0 0
    %2192 = vmatprep.subr.bf16.mxu0 0
    %2193 = vmatpush1.bf16.msra.mxu0 0
    %2194 = vmatprep.subr.bf16.mxu0 0
    %2195 = vmatpush1.bf16.msra.mxu0 0
    %2196 = vmatprep.mubr.bf16.mxu0 0
    %2197 = vmatmul.mubr.bf16.gmra.mrb[0].mxu0 %v1930
    %v2198 = vpop.f32.mrb[0].mxu0
    %v2199 = vadd.f32 0.0, %v2198
    %v2200 = vpop.f32.mrb[0].mxu0
    %v2201 = vadd.f32 0.0, %v2200
    %v2202 = vpop.f32.mrb[0].mxu0
    %v2203 = vpop.f32.mrb[0].mxu0
    %2204 = vdwg.mxu0
    %v2205 = vadd.f32 %v1926, %v2158
    %v2206 = vadd.f32 %v1927, %v2160
    %v2207 = vadd.f32 %v1928, %v2199
    %v2208 = vadd.f32 %v1929, %v2201
    %v2209 = vxor.u32 %v2205, 2147483648
    %v2210 = vmul.f32 %v2209, 1.442695
    %v2211 = vpow.pop %v2210
    %v2212 = vadd.f32 %v2211, 1.0
    %v2213 = vrcp.pop %v2212
    %v2214 = vmul.f32 1.0, %v2213
    %v2215 = vxor.u32 %v2206, 2147483648
    %v2216 = vmul.f32 %v2215, 1.442695
    %v2217 = vpow.pop %v2216
    %v2218 = vadd.f32 %v2217, 1.0
    %v2219 = vrcp.pop %v2218
    %v2220 = vmul.f32 1.0, %v2219
    %v2221 = vtanh.pop %v2207
    %v2222 = vxor.u32 %v2208, 2147483648
    %v2223 = vmul.f32 %v2222, 1.442695
    %v2224 = vpow.pop %v2223
    %v2225 = vadd.f32 %v2224, 1.0
    %v2226 = vrcp.pop %v2225
    %v2227 = vmul.f32 1.0, %v2226
    %v2228 = vmul.f32 %v2220, %v1918
    %v2229 = vmul.f32 %v2214, %v2221
    %v2230 = vadd.f32 %v2228, %v2229
    %v2231 = vtanh.pop %v2230
    %v2232 = vmul.f32 %v2227, %v2231
    %s2233 = scalar_lea.vmem [#allocation9], 48
    %2234 = vst [vmem:[%s2233] sm:$0xff] %v2232
    %s2235 = scalar_lea.vmem [#allocation4], 112
    %v2236 = vld [vmem:[%s2235] sm:$0xff]
    %v2237 = vld [vmem:[%s2235 + $0x8] sm:$0xff]
    %v2238 = vunpack.c.l.bf16 %v2236
    %v2239 = vunpack.c.h.bf16 %v2236
    %v2240 = vunpack.c.l.bf16 %v2237
    %v2241 = vunpack.c.h.bf16 %v2237
    %v2242 = vpack.c.bf16 %v2232, %v2232
    %v2243 = vld [vmem:[#allocation7] sm:$0xff]
    %v2244 = vld [vmem:[#allocation7 + $0x8] sm:$0xff]
    %v2245 = vld [vmem:[#allocation7 + $0x10] sm:$0xff]
    %v2246 = vld [vmem:[#allocation7 + $0x18] sm:$0xff]
    %v2247 = vld [vmem:[#allocation7 + $0x20] sm:$0xff]
    %v2248 = vld [vmem:[#allocation7 + $0x28] sm:$0xff]
    %v2249 = vld [vmem:[#allocation7 + $0x30] sm:$0xff]
    %v2250 = vld [vmem:[#allocation7 + $0x38] sm:$0xff]
    %v2251 = vld [vmem:[#allocation7 + $0x40] sm:$0xff]
    %v2252 = vld [vmem:[#allocation7 + $0x48] sm:$0xff]
    %v2253 = vld [vmem:[#allocation7 + $0x50] sm:$0xff]
    %v2254 = vld [vmem:[#allocation7 + $0x58] sm:$0xff]
    %v2255 = vld [vmem:[#allocation7 + $0x60] sm:$0xff]
    %v2256 = vld [vmem:[#allocation7 + $0x68] sm:$0xff]
    %v2257 = vld [vmem:[#allocation7 + $0x70] sm:$0xff]
    %v2258 = vld [vmem:[#allocation7 + $0x78] sm:$0xff]
    %v2259 = vld [vmem:[#allocation7 + $0x80] sm:$0xff]
    %v2260 = vld [vmem:[#allocation7 + $0x88] sm:$0xff]
    %v2261 = vld [vmem:[#allocation7 + $0x90] sm:$0xff]
    %v2262 = vld [vmem:[#allocation7 + $0x98] sm:$0xff]
    %v2263 = vld [vmem:[#allocation7 + $0xa0] sm:$0xff]
    %v2264 = vld [vmem:[#allocation7 + $0xa8] sm:$0xff]
    %v2265 = vld [vmem:[#allocation7 + $0xb0] sm:$0xff]
    %v2266 = vld [vmem:[#allocation7 + $0xb8] sm:$0xff]
    %v2267 = vld [vmem:[#allocation7 + $0xc0] sm:$0xff]
    %v2268 = vld [vmem:[#allocation7 + $0xc8] sm:$0xff]
    %v2269 = vld [vmem:[#allocation7 + $0xd0] sm:$0xff]
    %v2270 = vld [vmem:[#allocation7 + $0xd8] sm:$0xff]
    %v2271 = vld [vmem:[#allocation7 + $0xe0] sm:$0xff]
    %v2272 = vld [vmem:[#allocation7 + $0xe8] sm:$0xff]
    %v2273 = vld [vmem:[#allocation7 + $0xf0] sm:$0xff]
    %v2274 = vld [vmem:[#allocation7 + $0xf8] sm:$0xff]
    %v2307 = vunpack.c.l.b16 %v2243
    %v2308 = vunpack.c.h.b16 %v2243
    %v2309 = vunpack.c.l.b16 %v2244
    %v2310 = vunpack.c.h.b16 %v2244
    %v2311 = vunpack.c.l.b16 %v2245
    %v2312 = vunpack.c.h.b16 %v2245
    %v2313 = vunpack.c.l.b16 %v2246
    %v2314 = vunpack.c.h.b16 %v2246
    %v2315 = vunpack.c.l.b16 %v2247
    %v2316 = vunpack.c.h.b16 %v2247
    %v2317 = vunpack.c.l.b16 %v2248
    %v2318 = vunpack.c.h.b16 %v2248
    %v2319 = vunpack.c.l.b16 %v2249
    %v2320 = vunpack.c.h.b16 %v2249
    %v2321 = vunpack.c.l.b16 %v2250
    %v2322 = vunpack.c.h.b16 %v2250
    %v2323 = vunpack.c.l.b16 %v2251
    %v2324 = vunpack.c.h.b16 %v2251
    %v2325 = vunpack.c.l.b16 %v2252
    %v2326 = vunpack.c.h.b16 %v2252
    %v2327 = vunpack.c.l.b16 %v2253
    %v2328 = vunpack.c.h.b16 %v2253
    %v2329 = vunpack.c.l.b16 %v2254
    %v2330 = vunpack.c.h.b16 %v2254
    %v2331 = vunpack.c.l.b16 %v2255
    %v2332 = vunpack.c.h.b16 %v2255
    %v2333 = vunpack.c.l.b16 %v2256
    %v2334 = vunpack.c.h.b16 %v2256
    %v2335 = vunpack.c.l.b16 %v2257
    %v2336 = vunpack.c.h.b16 %v2257
    %v2337 = vunpack.c.l.b16 %v2258
    %v2338 = vunpack.c.h.b16 %v2258
    %v2339 = vunpack.c.l.b16 %v2259
    %v2340 = vunpack.c.h.b16 %v2259
    %v2341 = vunpack.c.l.b16 %v2260
    %v2342 = vunpack.c.h.b16 %v2260
    %v2343 = vunpack.c.l.b16 %v2261
    %v2344 = vunpack.c.h.b16 %v2261
    %v2345 = vunpack.c.l.b16 %v2262
    %v2346 = vunpack.c.h.b16 %v2262
    %v2347 = vunpack.c.l.b16 %v2263
    %v2348 = vunpack.c.h.b16 %v2263
    %v2349 = vunpack.c.l.b16 %v2264
    %v2350 = vunpack.c.h.b16 %v2264
    %v2351 = vunpack.c.l.b16 %v2265
    %v2352 = vunpack.c.h.b16 %v2265
    %v2353 = vunpack.c.l.b16 %v2266
    %v2354 = vunpack.c.h.b16 %v2266
    %v2355 = vunpack.c.l.b16 %v2267
    %v2356 = vunpack.c.h.b16 %v2267
    %v2357 = vunpack.c.l.b16 %v2268
    %v2358 = vunpack.c.h.b16 %v2268
    %v2359 = vunpack.c.l.b16 %v2269
    %v2360 = vunpack.c.h.b16 %v2269
    %v2361 = vunpack.c.l.b16 %v2270
    %v2362 = vunpack.c.h.b16 %v2270
    %v2363 = vunpack.c.l.b16 %v2271
    %v2364 = vunpack.c.h.b16 %v2271
    %v2365 = vunpack.c.l.b16 %v2272
    %v2366 = vunpack.c.h.b16 %v2272
    %v2367 = vunpack.c.l.b16 %v2273
    %v2368 = vunpack.c.h.b16 %v2273
    %v2369 = vunpack.c.l.b16 %v2274
    %v2370 = vunpack.c.h.b16 %v2274
    %v2371 = vpack.c.b16 %v2311, %v2307
    %v2372 = vpack.c.b16 %v2312, %v2308
    %v2373 = vpack.c.b16 %v2313, %v2309
    %v2374 = vpack.c.b16 %v2314, %v2310
    %v2375 = vpack.c.b16 %v2319, %v2315
    %v2376 = vpack.c.b16 %v2320, %v2316
    %v2377 = vpack.c.b16 %v2321, %v2317
    %v2378 = vpack.c.b16 %v2322, %v2318
    %v2379 = vpack.c.b16 %v2327, %v2323
    %v2380 = vpack.c.b16 %v2328, %v2324
    %v2381 = vpack.c.b16 %v2329, %v2325
    %v2382 = vpack.c.b16 %v2330, %v2326
    %v2383 = vpack.c.b16 %v2335, %v2331
    %v2384 = vpack.c.b16 %v2336, %v2332
    %v2385 = vpack.c.b16 %v2337, %v2333
    %v2386 = vpack.c.b16 %v2338, %v2334
    %v2387 = vpack.c.b16 %v2343, %v2339
    %v2388 = vpack.c.b16 %v2344, %v2340
    %v2389 = vpack.c.b16 %v2345, %v2341
    %v2390 = vpack.c.b16 %v2346, %v2342
    %v2391 = vpack.c.b16 %v2351, %v2347
    %v2392 = vpack.c.b16 %v2352, %v2348
    %v2393 = vpack.c.b16 %v2353, %v2349
    %v2394 = vpack.c.b16 %v2354, %v2350
    %v2395 = vpack.c.b16 %v2359, %v2355
    %v2396 = vpack.c.b16 %v2360, %v2356
    %v2397 = vpack.c.b16 %v2361, %v2357
    %v2398 = vpack.c.b16 %v2362, %v2358
    %v2399 = vpack.c.b16 %v2367, %v2363
    %v2400 = vpack.c.b16 %v2368, %v2364
    %v2401 = vpack.c.b16 %v2369, %v2365
    %v2402 = vpack.c.b16 %v2370, %v2366
    %2435 = vmatprep.subr.bf16.mxu0 %v2372
    %2436 = vmatpush1.bf16.msra.mxu0 %v2371
    %2437 = vmatprep.subr.bf16.mxu0 %v2376
    %2438 = vmatpush1.bf16.msra.mxu0 %v2375
    %2439 = vmatprep.subr.bf16.mxu0 %v2380
    %2440 = vmatpush1.bf16.msra.mxu0 %v2379
    %2441 = vmatprep.subr.bf16.mxu0 %v2384
    %2442 = vmatpush1.bf16.msra.mxu0 %v2383
    %2443 = vmatprep.subr.bf16.mxu0 %v2388
    %2444 = vmatpush1.bf16.msra.mxu0 %v2387
    %2445 = vmatprep.subr.bf16.mxu0 %v2392
    %2446 = vmatpush1.bf16.msra.mxu0 %v2391
    %2447 = vmatprep.subr.bf16.mxu0 %v2396
    %2448 = vmatpush1.bf16.msra.mxu0 %v2395
    %2449 = vmatprep.subr.bf16.mxu0 %v2400
    %2450 = vmatpush1.bf16.msra.mxu0 %v2399
    %2451 = vmatprep.subr.bf16.mxu0 0
    %2452 = vmatpush1.bf16.msra.mxu0 0
    %2453 = vmatprep.subr.bf16.mxu0 0
    %2454 = vmatpush1.bf16.msra.mxu0 0
    %2455 = vmatprep.subr.bf16.mxu0 0
    %2456 = vmatpush1.bf16.msra.mxu0 0
    %2457 = vmatprep.subr.bf16.mxu0 0
    %2458 = vmatpush1.bf16.msra.mxu0 0
    %2459 = vmatprep.subr.bf16.mxu0 0
    %2460 = vmatpush1.bf16.msra.mxu0 0
    %2461 = vmatprep.subr.bf16.mxu0 0
    %2462 = vmatpush1.bf16.msra.mxu0 0
    %2463 = vmatprep.subr.bf16.mxu0 0
    %2464 = vmatpush1.bf16.msra.mxu0 0
    %2465 = vmatprep.subr.bf16.mxu0 0
    %2466 = vmatpush1.bf16.msra.mxu0 0
    %2467 = vmatprep.mubr.bf16.mxu0 0
    %2468 = vmatmul.mubr.bf16.gmra.mrb[0].mxu0 %v2242
    %v2469 = vpop.f32.mrb[0].mxu0
    %v2470 = vadd.f32 0.0, %v2469
    %v2471 = vpop.f32.mrb[0].mxu0
    %v2472 = vadd.f32 0.0, %v2471
    %v2473 = vpop.f32.mrb[0].mxu0
    %v2474 = vpop.f32.mrb[0].mxu0
    %2475 = vdwg.mxu0
    %2476 = vmatprep.subr.bf16.mxu0 %v2374
    %2477 = vmatpush1.bf16.msra.mxu0 %v2373
    %2478 = vmatprep.subr.bf16.mxu0 %v2378
    %2479 = vmatpush1.bf16.msra.mxu0 %v2377
    %2480 = vmatprep.subr.bf16.mxu0 %v2382
    %2481 = vmatpush1.bf16.msra.mxu0 %v2381
    %2482 = vmatprep.subr.bf16.mxu0 %v2386
    %2483 = vmatpush1.bf16.msra.mxu0 %v2385
    %2484 = vmatprep.subr.bf16.mxu0 %v2390
    %2485 = vmatpush1.bf16.msra.mxu0 %v2389
    %2486 = vmatprep.subr.bf16.mxu0 %v2394
    %2487 = vmatpush1.bf16.msra.mxu0 %v2393
    %2488 = vmatprep.subr.bf16.mxu0 %v2398
    %2489 = vmatpush1.bf16.msra.mxu0 %v2397
    %2490 = vmatprep.subr.bf16.mxu0 %v2402
    %2491 = vmatpush1.bf16.msra.mxu0 %v2401
    %2492 = vmatprep.subr.bf16.mxu0 0
    %2493 = vmatpush1.bf16.msra.mxu0 0
    %2494 = vmatprep.subr.bf16.mxu0 0
    %2495 = vmatpush1.bf16.msra.mxu0 0
    %2496 = vmatprep.subr.bf16.mxu0 0
    %2497 = vmatpush1.bf16.msra.mxu0 0
    %2498 = vmatprep.subr.bf16.mxu0 0
    %2499 = vmatpush1.bf16.msra.mxu0 0
    %2500 = vmatprep.subr.bf16.mxu0 0
    %2501 = vmatpush1.bf16.msra.mxu0 0
    %2502 = vmatprep.subr.bf16.mxu0 0
    %2503 = vmatpush1.bf16.msra.mxu0 0
    %2504 = vmatprep.subr.bf16.mxu0 0
    %2505 = vmatpush1.bf16.msra.mxu0 0
    %2506 = vmatprep.subr.bf16.mxu0 0
    %2507 = vmatpush1.bf16.msra.mxu0 0
    %2508 = vmatprep.mubr.bf16.mxu0 0
    %2509 = vmatmul.mubr.bf16.gmra.mrb[0].mxu0 %v2242
    %v2510 = vpop.f32.mrb[0].mxu0
    %v2511 = vadd.f32 0.0, %v2510
    %v2512 = vpop.f32.mrb[0].mxu0
    %v2513 = vadd.f32 0.0, %v2512
    %v2514 = vpop.f32.mrb[0].mxu0
    %v2515 = vpop.f32.mrb[0].mxu0
    %2516 = vdwg.mxu0
    %v2517 = vadd.f32 %v2238, %v2470
    %v2518 = vadd.f32 %v2239, %v2472
    %v2519 = vadd.f32 %v2240, %v2511
    %v2520 = vadd.f32 %v2241, %v2513
    %v2521 = vxor.u32 %v2517, 2147483648
    %v2522 = vmul.f32 %v2521, 1.442695
    %v2523 = vpow.pop %v2522
    %v2524 = vadd.f32 %v2523, 1.0
    %v2525 = vrcp.pop %v2524
    %v2526 = vmul.f32 1.0, %v2525
    %v2527 = vxor.u32 %v2518, 2147483648
    %v2528 = vmul.f32 %v2527, 1.442695
    %v2529 = vpow.pop %v2528
    %v2530 = vadd.f32 %v2529, 1.0
    %v2531 = vrcp.pop %v2530
    %v2532 = vmul.f32 1.0, %v2531
    %v2533 = vtanh.pop %v2519
    %v2534 = vxor.u32 %v2520, 2147483648
    %v2535 = vmul.f32 %v2534, 1.442695
    %v2536 = vpow.pop %v2535
    %v2537 = vadd.f32 %v2536, 1.0
    %v2538 = vrcp.pop %v2537
    %v2539 = vmul.f32 1.0, %v2538
    %v2540 = vmul.f32 %v2532, %v2230
    %v2541 = vmul.f32 %v2526, %v2533
    %v2542 = vadd.f32 %v2540, %v2541
    %v2543 = vtanh.pop %v2542
    %v2544 = vmul.f32 %v2539, %v2543
    %s2545 = scalar_lea.vmem [#allocation9], 56
    %2546 = vst [vmem:[%s2545] sm:$0xff] %v2544
    %2547 = vst [vmem:[#allocation2] sm:$0xff] %v2544
    %2548 = vst [vmem:[#allocation3] sm:$0xff] %v2542
    // Predicated region
    $region22: #{encoder_forward.3} parent=1 // pred_check
      %p2549 = pneg %p45
    $region23: #{encoder_forward.3} parent=1 // pred_check_branch
      %2551 = sbr.rel (%p2549) target = $region25
    $region24: #{encoder_forward.3} parent=1 // pred_region
      %2552 = vst [vmem:[#allocation10] sm:$0xff] %v2544
      %2553 = vst [vmem:[#allocation12] sm:$0xff] %v2542
    $region25: #{encoder_forward.3} parent=1 // pred_fallthru
      _
    // Predicated region
    $region26: #{encoder_forward.3} parent=1 // pred_check
      _
    $region27: #{encoder_forward.3} parent=1 // pred_check_branch
      %2555 = sbr.rel (0) target = $region29
    $region28: #{encoder_forward.3} parent=1 // pred_region
      %s2557 = ssub.s32 1024, 1024
      %2558 = vsyncadd [#allocation6], %s2557
      %s2559 = sshll.u32 [#allocation9], 4
      %s2560 = int_to_ptr.vmem [resolvable:$true] %s2559
      %2565 = dma.vmem_to_hbm [thread:$0]  %s2560, 1024, %s2, [#allocation6], 128, 128, 8
    $region29: #{encoder_forward.3} parent=1 // pred_fallthru
      _
    // Predicated region
    $region30: #{encoder_forward.3} parent=1 // pred_check
      _
    $region31: #{encoder_forward.3} parent=1 // pred_check_branch
      %2567 = sbr.rel (0) target = $region33
    $region32: #{encoder_forward.3} parent=1 // pred_region
      %s2569 = ssub.s32 128, 128
      %2570 = vsyncadd [#allocation11], %s2569
      %s2572 = sshll.u32 [#allocation10], 4
      %s2573 = int_to_ptr.vmem [resolvable:$true] %s2572
      %2575 = dma.vmem_to_hbm [thread:$0]  %s2573, 128, %s3, [#allocation11]
    $region33: #{encoder_forward.3} parent=1 // pred_fallthru
      _
    // Predicated region
    $region34: #{encoder_forward.3} parent=1 // pred_check
      _
    $region35: #{encoder_forward.3} parent=1 // pred_check_branch
      %2577 = sbr.rel (0) target = $region37
    $region36: #{encoder_forward.3} parent=1 // pred_region
      %s2579 = ssub.s32 128, 128
      %2580 = vsyncadd [#allocation11], %s2579
      %s2582 = sshll.u32 [#allocation12], 4
      %s2583 = int_to_ptr.vmem [resolvable:$true] %s2582
      %2585 = dma.vmem_to_hbm [thread:$0]  %s2583, 128, %s4, [#allocation11]
    $region37: #{encoder_forward.3} parent=1 // pred_fallthru
      _
    // Predicated region
    $region38: #{encoder_forward.3} parent=1 // pred_check
      _
    $region39: #{encoder_forward.3} parent=1 // pred_check_branch
      %2587 = sbr.rel (0) target = $region41
    $region40: #{encoder_forward.3} parent=1 // pred_region
      %2588 = dma.done [#allocation6], 1024
    $region41: #{encoder_forward.3} parent=1 // pred_fallthru
      _
    // Predicated region
    $region42: #{encoder_forward.3} parent=1 // pred_check
      _
    $region43: #{encoder_forward.3} parent=1 // pred_check_branch
      %2590 = sbr.rel (0) target = $region45
    $region44: #{encoder_forward.3} parent=1 // pred_region
      %2591 = dma.done [#allocation11], 128
    $region45: #{encoder_forward.3} parent=1 // pred_fallthru
      _
    // Predicated region
    $region46: #{encoder_forward.3} parent=1 // pred_check
      _
    $region47: #{encoder_forward.3} parent=1 // pred_check_branch
      %2593 = sbr.rel (0) target = $region49
    $region48: #{encoder_forward.3} parent=1 // pred_region
      %2594 = dma.done [#allocation11], 128
    $region49: #{encoder_forward.3} parent=1 // pred_fallthru
      _
    %2595 = vsyncpa [#allocation5], 1
    %2596 = vsyncpa [#allocation8], 1
    %2597 = vsyncpa [#allocation6], 1
    %2598 = vsyncpa [#allocation11], 1

</llo_original>
